<compile_context>
chip_gen: v7x
topology: tpu7x:2x2x1
jax: 0.10.0
libtpu: 0.0.40
codegen_flags: <defaults>
</compile_context>

<pallas_src>
import functools
import math

import numpy as np
import jax
import jax.numpy as jnp
from jax import lax
from jax.experimental import pallas as pl
from jax.experimental.pallas import tpu as pltpu


# ---------------------------------------------------------------------------
# Per-chip VMEM limit (v5e/v6e: 128 MiB physical, v7x: 64 MiB per TensorCore)
# ---------------------------------------------------------------------------
def _vmem_limit_bytes():
    cap = 64 * 1024 * 1024
    try:
        info = pltpu.get_tpu_info()
        cap = int(getattr(info, "vmem_capacity_bytes", cap))
    except Exception:
        pass
    limit = int(cap * 0.8)                       # ~20% headroom for the compiler
    return max(32 * 1024 * 1024, min(limit, 100 * 1024 * 1024))


_VMEM_LIMIT = _vmem_limit_bytes()


def _round_up(v, m):
    return (v + m - 1) // m * m


# ---------------------------------------------------------------------------
# Tap-conv kernel: 27-tap accumulation GEMM over one (batch, d)-plane.
#   refs (in order):  x0, x1, x2 [, xres], w, bias [, wres], out
#   x0/x1/x2 : (1, 1, Hp*Wp, Cin)  bf16   d-planes d, d+1, d+2 of the padded x
#   xres     : (1, 1, Hp*Wp, Cr)   bf16   center plane of the residual source
#   w        : (27*Cin, tn)        bf16   tap-major stacked weights (N chunk)
#   bias     : (1, tn)             f32
#   wres     : (Cr, tn)            bf16   1x1 residual projection (optional)
#   out      : (1, 1, H*Wp, tn)    bf16 (f32 for the final conv)
# ---------------------------------------------------------------------------
def _tap_conv_kernel(*refs, wp, mp, cin, res_mode):
    if res_mode is None:
        x0, x1, x2, w_ref, b_ref, o_ref = refs
        xr_ref = wr_ref = None
    elif res_mode == "add":
        x0, x1, x2, xr_ref, w_ref, b_ref, o_ref = refs
        wr_ref = None
    else:  # "proj"
        x0, x1, x2, xr_ref, w_ref, b_ref, wr_ref, o_ref = refs

    planes = (x0, x1, x2)
    n_out = o_ref.shape[-1]
    acc = jnp.zeros((mp, n_out), jnp.float32)

    for t in range(27):                               # unrolled tap loop
        kd, rem = divmod(t, 9)
        kh, kw = divmod(rem, 3)
        d0 = kh * wp + kw                             # static, kh*wp is 8-aligned
        xs = planes[kd][0, 0, d0:d0 + mp, :]          # (mp, Cin) ref-window load
        wt = w_ref[t * cin:(t + 1) * cin, :]          # (Cin, tn)
        if cin == 1:                                  # outer product: VPU path
            acc = acc + xs.astype(jnp.float32) * wt.astype(jnp.float32)
        else:
            acc = acc + jnp.dot(xs, wt, preferred_element_type=jnp.float32)

    if res_mode is not None:
        rc = xr_ref[0, 0, wp + 1: wp + 1 + mp, :]     # center tap of residual
        if res_mode == "add":
            acc = acc + rc.astype(jnp.float32)
        else:
            acc = acc + jnp.dot(rc, wr_ref[...],
                                preferred_element_type=jnp.float32)

    o_ref[0, 0] = (acc + b_ref[...]).astype(o_ref.dtype)


def _pad_flat(x, wp):
    """Pad D:(1,1) H:(1,2) W:(1, wp-W-1), flatten planes, cast to bf16."""
    B, D, H, W, C = x.shape
    xb = x.astype(jnp.bfloat16)
    xp = jnp.pad(xb, ((0, 0), (1, 1), (1, 2), (1, wp - W - 1), (0, 0)))
    return xp.reshape(B, D + 2, (H + 3) * wp, C)


def tap_conv(x, w2, bias, n_out, *, res=None, wres=None,
             out_dtype=jnp.bfloat16):
    """27-tap conv.  x:(B,D,H,W,Cin)  w2:(27*Cin,N)  bias:(N,)
    res: optional residual source (B,D,H,W,Cr) added at the center tap
    (identity if wres is None, else 1x1 projection with wres:(Cr,N))."""
    B, D, H, W, cin = x.shape
    wp_ = _round_up(W + 2, 8)                # sublane-aligned plane width
    hpwp = (H + 3) * wp_
    mp = H * wp_

    xp = _pad_flat(x, wp_)
    in_specs = [
        pl.BlockSpec((1, 1, hpwp, cin),
                     lambda b, d, n, kd=kd: (b, d + kd, 0, 0))
        for kd in range(3)
    ]
    args = [xp, xp, xp]
    # TODO(synk): rolling 3-plane VMEM ring via memory_space=pl.ANY + manual
    #             make_async_copy to avoid reading each padded plane 3x.

    res_mode = None
    if res is not None:
        cres = res.shape[-1]
        rp = _pad_flat(res, wp_)
        in_specs.append(
            pl.BlockSpec((1, 1, hpwp, cres), lambda b, d, n: (b, d + 1, 0, 0)))
        args.append(rp)
        res_mode = "proj" if wres is not None else "add"

    # N tiling for wide fused outputs (keeps weight/output blocks small, v7x)
    tn = n_out
    if res is None and n_out > 512 and n_out % 256 == 0:
        tn = 256
    nN = n_out // tn

    in_specs.append(pl.BlockSpec((27 * cin, tn), lambda b, d, n: (0, n)))
    args.append(w2.astype(jnp.bfloat16))
    in_specs.append(pl.BlockSpec((1, tn), lambda b, d, n: (0, n)))
    args.append(bias.reshape(1, n_out).astype(jnp.float32))
    if res_mode == "proj":
        in_specs.append(pl.BlockSpec((res.shape[-1], tn),
                                     lambda b, d, n: (0, n)))
        args.append(wres.astype(jnp.bfloat16))

    kernel = functools.partial(_tap_conv_kernel, wp=wp_, mp=mp, cin=cin,
                               res_mode=res_mode)
    out = pl.pallas_call(
        kernel,
        out_shape=jax.ShapeDtypeStruct((B, D, mp, n_out), out_dtype),
        grid=(B, D, nN),
        in_specs=in_specs,
        out_specs=pl.BlockSpec((1, 1, mp, tn), lambda b, d, n: (b, d, 0, n)),
        compiler_params=pltpu.CompilerParams(
            dimension_semantics=("parallel", "parallel", "parallel"),
            vmem_limit_bytes=_VMEM_LIMIT),
    )(*args)
    # drop the W-pad garbage columns
    return out.reshape(B, D, H, wp_, n_out)[:, :, :, :W, :]


# ---------------------------------------------------------------------------
# GroupNorm(16) + Swish, spatially tiled (two passes), lane-folded for C<128
# ---------------------------------------------------------------------------
def _gn_stats_kernel(x_ref, g_ref, o_ref, *, ts, S):
    s = pl.program_id(1)

    @pl.when(s == 0)
    def _():
        o_ref[...] = jnp.zeros_like(o_ref)

    x = x_ref[0].astype(jnp.float32)                            # (ts, Cf)
    rows = lax.broadcasted_iota(jnp.int32, x.shape, 0) + s * ts
    x = jnp.where(rows < S, x, 0.0)                             # mask ragged edge
    s1 = jnp.sum(x, axis=0, keepdims=True)                      # (1, Cf)
    s2 = jnp.sum(x * x, axis=0, keepdims=True)
    gs1 = jnp.dot(s1, g_ref[...], preferred_element_type=jnp.float32)  # (1, G)
    gs2 = jnp.dot(s2, g_ref[...], preferred_element_type=jnp.float32)
    o_ref[0] += jnp.concatenate([gs1, gs2], axis=0)             # (2, G)


def _gn_apply_kernel(x_ref, sc_ref, sh_ref, o_ref):
    x = x_ref[0].astype(jnp.float32)                            # (ts, Cf)
    y = x * sc_ref[0] + sh_ref[0]
    o_ref[0] = (y * (1.0 / (1.0 + jnp.exp(-y)))).astype(o_ref.dtype)  # Swish


def _pick_tile(rows, lanes, budget_bytes=4 << 20):
    """Largest row tile fitting a ~4 MB f32 block budget."""
    if rows * lanes * 4 <= budget_bytes:
        return rows
    t = budget_bytes // (lanes * 4)
    return max(8, (t // 8) * 8)


def groupnorm_swish(x, gamma, beta, groups=16, eps=1e-5):
    B, D, H, W, C = x.shape
    S = D * H * W
    cg = C // groups

    # lane-fold k spatial rows into channels so loads/stores are 128-lane dense
    k = 1
    if C < 128 and 128 % C == 0 and S % (128 // C) == 0:
        k = 128 // C
    Sf, Cf = S // k, k * C

    x2 = x.reshape(B, Sf, Cf)
    ts = _pick_tile(Sf, Cf)
    nS = pl.cdiv(Sf, ts)

    gid = (jnp.arange(Cf) % C) // cg                             # group per lane
    gmat = (gid[:, None] == jnp.arange(groups)[None, :]).astype(jnp.float32)

    stats = pl.pallas_call(
        functools.partial(_gn_stats_kernel, ts=ts, S=Sf),
        out_shape=jax.ShapeDtypeStruct((B, 2, groups), jnp.float32),
        grid=(B, nS),
        in_specs=[pl.BlockSpec((1, ts, Cf), lambda b, s: (b, s, 0)),
                  pl.BlockSpec((Cf, groups), lambda b, s: (0, 0))],
        out_specs=pl.BlockSpec((1, 2, groups), lambda b, s: (b, 0, 0)),
        compiler_params=pltpu.CompilerParams(
            dimension_semantics=("parallel", "arbitrary"),
            vmem_limit_bytes=_VMEM_LIMIT),
    )(x2, gmat)

    inv_n = 1.0 / float(S * cg)
    mean_g = stats[:, 0, :] * inv_n                              # (B, G)
    var_g = stats[:, 1, :] * inv_n - mean_g * mean_g
    inv_g = lax.rsqrt(var_g + eps)
    mean_c = jnp.repeat(mean_g, cg, axis=1)                      # (B, C)
    inv_c = jnp.repeat(inv_g, cg, axis=1)
    scale_c = inv_c * gamma[None, :]
    shift_c = beta[None, :] - mean_c * scale_c
    scale = jnp.tile(scale_c, (1, k)).reshape(B, 1, Cf)
    shift = jnp.tile(shift_c, (1, k)).reshape(B, 1, Cf)

    out = pl.pallas_call(
        _gn_apply_kernel,
        out_shape=jax.ShapeDtypeStruct((B, Sf, Cf), jnp.bfloat16),
        grid=(B, nS),
        in_specs=[pl.BlockSpec((1, ts, Cf), lambda b, s: (b, s, 0)),
                  pl.BlockSpec((1, 1, Cf), lambda b, s: (b, 0, 0)),
                  pl.BlockSpec((1, 1, Cf), lambda b, s: (b, 0, 0))],
        out_specs=pl.BlockSpec((1, ts, Cf), lambda b, s: (b, s, 0)),
        compiler_params=pltpu.CompilerParams(
            dimension_semantics=("parallel", "parallel"),
            vmem_limit_bytes=_VMEM_LIMIT),
    )(x2, scale, shift)
    return out.reshape(B, D, H, W, C)


# ---------------------------------------------------------------------------
# Conv layers built on the tap-conv kernel
# ---------------------------------------------------------------------------
def conv3d(x, p, *, res=None, wres=None, extra_bias=None,
           out_dtype=jnp.bfloat16):
    """3x3x3 conv, padding 1.  p['w']:(Cout,Cin,3,3,3) (torch layout)."""
    w = p["w"]
    cout, cin = w.shape[0], w.shape[1]
    w2 = jnp.transpose(w, (2, 3, 4, 1, 0)).reshape(27 * cin, cout)
    bias = p["b"] if extra_bias is None else p["b"] + extra_bias
    return tap_conv(x, w2, bias, cout, res=res, wres=wres, out_dtype=out_dtype)


# ConvTranspose3d(4,2,1): output parity (a,b,c) is a 2x2x2 conv of the padded
# input with a sub-kernel of W.  All 8 parities are fused into one tap-conv
# with a combined (27*Cin, 8*Cout) weight carrying structured zeros.
_KIDX = ((3, 1), (2, 0))   # kernel-tap indices per parity (per offset i)


def _convT_fused_weight(w):
    """w: (Cin, Cout, 4,4,4) torch layout -> (27*Cin, 8*Cout) fused weight."""
    cin, cout = w.shape[0], w.shape[1]
    kidx = np.zeros((27, 8, 3), np.int32)
    mask = np.zeros((27, 8), np.float32)
    for a in (0, 1):
        for b in (0, 1):
            for c in (0, 1):
                par = (a * 2 + b) * 2 + c
                for i in (0, 1):
                    for j in (0, 1):
                        for k in (0, 1):
                            t = ((a + i) * 3 + (b + j)) * 3 + (c + k)
                            kidx[t, par] = (_KIDX[a][i], _KIDX[b][j], _KIDX[c][k])
                            mask[t, par] = 1.0
    wt = w[:, :, kidx[..., 0], kidx[..., 1], kidx[..., 2]]      # (Cin,Cout,27,8)
    wt = wt * jnp.asarray(mask)[None, None, :, :]
    wf = jnp.transpose(wt, (2, 0, 3, 1))                         # (27,Cin,8,Cout)
    return wf.reshape(27 * cin, 8 * cout)
    # TODO(synk): exploit the 8/27 structured sparsity instead of dense zeros.


def conv_transpose3d(x, p):
    w = p["w"]                                       # (Cin, Cout, 4, 4, 4)
    cin, cout = w.shape[0], w.shape[1]
    w2 = _convT_fused_weight(w)
    bias8 = jnp.tile(p["b"], 8)
    y = tap_conv(x, w2, bias8, 8 * cout)             # (B, D, H, W, 8*Cout) bf16
    B, D, H, W, _ = y.shape
    y = y.reshape(B, D, H, W, 2, 2, 2, cout)
    y = jnp.transpose(y, (0, 1, 4, 2, 5, 3, 6, 7))   # (B, D,2, H,2, W,2, Cout)
    return y.reshape(B, 2 * D, 2 * H, 2 * W, cout)


# ---------------------------------------------------------------------------
# Module composition (ResnetBlock / Upsample / shared / specific)
# ---------------------------------------------------------------------------
def resnet_block(x, p):
    h = groupnorm_swish(x, p["gn1"]["gamma"], p["gn1"]["beta"])
    h = conv3d(h, p["conv1"])
    h = groupnorm_swish(h, p["gn2"]["gamma"], p["gn2"]["beta"])
    # TODO(synk): fuse the following GN stats pass of the consumer into conv2.
    if "res" in p:   # 1x1 projection residual fused into conv2's kernel
        w1 = p["res"]["w"]
        wres = jnp.transpose(w1.reshape(w1.shape[0], w1.shape[1]))   # (Cin,Cout)
        return conv3d(h, p["conv2"], res=x, wres=wres, extra_bias=p["res"]["b"])
    return conv3d(h, p["conv2"], res=x)              # identity residual fused


def shared_forward(x, p):
    x = conv3d(x, p["conv0"])
    x = conv_transpose3d(x, p["up1"])
    x = resnet_block(x, p["res1"])        # ResnetBlocWithAttn: attn never used
    x = conv_transpose3d(x, p["up2"])
    x = resnet_block(x, p["res2"])
    return x


def specific_forward(x, p):
    x = conv_transpose3d(x, p["up1"])
    x = resnet_block(x, p["res1"])
    x = conv_transpose3d(x, p["up2"])
    x = resnet_block(x, p["res2"])
    # TODO(synk): lane-dense (transposed) accumulator/output for this Cout=1 conv.
    x = conv3d(x, p["final"], out_dtype=jnp.float32)
    return x


@jax.jit
def _shared_jit(p, x):
    return shared_forward(x, p)


@jax.jit
def _specific_jit(p, x):                 # compiled once, reused for 4 modalities
    return specific_forward(x, p)


def reconstruction_forward(params, x_flat, batch_size, spatial):
    x = x_flat.reshape(batch_size, 1, spatial, spatial, spatial)   # NCDHW
    x = jnp.transpose(x, (0, 2, 3, 4, 1))                          # -> NDHWC
    h = _shared_jit(params["shared"], x)
    outs = []
    for name in ("MRI", "FDG", "AV45", "Tau"):
        y = _specific_jit(params[name], h)
        outs.append(jnp.transpose(y, (0, 4, 1, 2, 3)))             # -> NCDHW f32
    return tuple(outs)


# ---------------------------------------------------------------------------
# Deterministic parameter initialization (shapes follow the PyTorch module)
# ---------------------------------------------------------------------------
def _conv3_params(key, cin, cout, k=3):
    wk, bk = jax.random.split(key)
    fan_in = cin * k ** 3
    return {"w": jax.random.normal(wk, (cout, cin, k, k, k), jnp.float32)
                 / math.sqrt(fan_in),
            "b": 0.01 * jax.random.normal(bk, (cout,), jnp.float32)}


def _convT_params(key, cin, cout):
    wk, bk = jax.random.split(key)
    fan_in = cin * 64
    return {"w": jax.random.normal(wk, (cin, cout, 4, 4, 4), jnp.float32)
                 / math.sqrt(fan_in),
            "b": 0.01 * jax.random.normal(bk, (cout,), jnp.float32)}


def _gn_params(c):
    return {"gamma": jnp.ones((c,), jnp.float32),
            "beta": jnp.zeros((c,), jnp.float32)}


def _resnet_params(key, cin, cout):
    k1, k2, k3 = jax.random.split(key, 3)
    p = {"gn1": _gn_params(cin), "conv1": _conv3_params(k1, cin, cout),
         "gn2": _gn_params(cout), "conv2": _conv3_params(k2, cout, cout)}
    if cin != cout:
        p["res"] = _conv3_params(k3, cin, cout, k=1)
    return p


def _shared_params(key, ic):
    k = jax.random.split(key, 5)
    return {"conv0": _conv3_params(k[0], 1, ic[0]),
            "up1": _convT_params(k[1], ic[0], ic[0]),
            "res1": _resnet_params(k[2], ic[0], ic[1]),
            "up2": _convT_params(k[3], ic[1], ic[1]),
            "res2": _resnet_params(k[4], ic[1], ic[2])}


def _specific_params(key, ic, out_channel=1):
    k = jax.random.split(key, 5)
    return {"up1": _convT_params(k[0], ic[2], ic[2]),
            "res1": _resnet_params(k[1], ic[2], ic[3]),
            "up2": _convT_params(k[2], ic[3], ic[3]),
            "res2": _resnet_params(k[3], ic[3], ic[3]),
            "final": _conv3_params(k[4], ic[3], out_channel)}


def init_params(key, inner_channel=(32, 64, 128, 32)):
    ks = jax.random.split(key, 5)
    return {"shared": _shared_params(ks[0], inner_channel),
            "MRI": _specific_params(ks[1], inner_channel),
            "FDG": _specific_params(ks[2], inner_channel),
            "AV45": _specific_params(ks[3], inner_channel),
            "Tau": _specific_params(ks[4], inner_channel)}


# ---------------------------------------------------------------------------
# Numerical self-checks against lax references (bf16 GEMMs -> loose tolerance)
# ---------------------------------------------------------------------------
def _conv3d_ref(x_ndhwc, w, b):
    x = jnp.transpose(x_ndhwc, (0, 4, 1, 2, 3))
    y = lax.conv_general_dilated(
        x, w, window_strides=(1, 1, 1), padding=[(1, 1)] * 3,
        dimension_numbers=("NCDHW", "OIDHW", "NCDHW"),
        precision=lax.Precision.HIGHEST)
    y = y + b[None, :, None, None, None]
    return jnp.transpose(y, (0, 2, 3, 4, 1))


def _convT_ref(x_ndhwc, w, b):
    # ConvTranspose3d(k=4, s=2, p=1) == lhs-dilated conv with flipped kernel.
    x = jnp.transpose(x_ndhwc, (0, 4, 1, 2, 3))
    wt = jnp.transpose(w, (1, 0, 2, 3, 4))[:, :, ::-1, ::-1, ::-1]
    y = lax.conv_general_dilated(
        x, wt, window_strides=(1, 1, 1), padding=[(2, 2)] * 3,
        lhs_dilation=(2, 2, 2),
        dimension_numbers=("NCDHW", "OIDHW", "NCDHW"),
        precision=lax.Precision.HIGHEST)
    y = y + b[None, :, None, None, None]
    return jnp.transpose(y, (0, 2, 3, 4, 1))


def _gn_swish_ref(x, gamma, beta, groups=16, eps=1e-5):
    B, D, H, W, C = x.shape
    xr = x.astype(jnp.float32).reshape(B, D * H * W, groups, C // groups)
    mean = xr.mean(axis=(1, 3), keepdims=True)
    var = xr.var(axis=(1, 3), keepdims=True)
    y = (xr - mean) * lax.rsqrt(var + eps)
    y = y.reshape(B, D, H, W, C) * gamma + beta
    return y * jax.nn.sigmoid(y)


def _self_check():
    key = jax.random.PRNGKey(0)
    k1, k2, k3, k4, k5, k6 = jax.random.split(key, 6)
    B, D, H, W = 1, 4, 4, 4
    cin, cout = 16, 32
    x = jax.random.normal(k1, (B, D, H, W, cin), jnp.float32)

    # Conv3d(3, pad=1) with fused 1x1-projection residual
    pc = {"w": jax.random.normal(k2, (cout, cin, 3, 3, 3), jnp.float32)
               / math.sqrt(cin * 27),
          "b": 0.1 * jax.random.normal(k3, (cout,), jnp.float32)}
    w1 = jax.random.normal(k4, (cout, cin, 1, 1, 1), jnp.float32) / math.sqrt(cin)
    bres = 0.1 * jax.random.normal(k5, (cout,), jnp.float32)
    got = conv3d(x, pc, res=x, wres=jnp.transpose(w1.reshape(cout, cin)),
                 extra_bias=bres).astype(jnp.float32)
    ref = (_conv3d_ref(x, pc["w"], pc["b"])
           + jnp.einsum("bdhwc,oc->bdhwo", x, w1.reshape(cout, cin))
           + bres)
    assert float(jnp.max(jnp.abs(got - ref))) < 0.1, "conv3d mismatch"

    # ConvTranspose3d(4, 2, 1)
    pt = {"w": jax.random.normal(k6, (cin, cout, 4, 4, 4), jnp.float32)
               / math.sqrt(cin * 64),
          "b": 0.01 * jnp.ones((cout,), jnp.float32)}
    got = conv_transpose3d(x, pt).astype(jnp.float32)
    ref = _convT_ref(x, pt["w"], pt["b"])
    assert float(jnp.max(jnp.abs(got - ref))) < 0.1, "conv_transpose3d mismatch"

    # GroupNorm(16) + Swish
    C = 32
    xg = jax.random.normal(k1, (B, D, H, W, C), jnp.float32)
    gamma = 1.0 + 0.1 * jax.random.normal(k2, (C,), jnp.float32)
    beta = 0.1 * jax.random.normal(k3, (C,), jnp.float32)
    got = groupnorm_swish(xg, gamma, beta).astype(jnp.float32)
    ref = _gn_swish_ref(xg, gamma, beta)
    assert float(jnp.max(jnp.abs(got - ref))) < 0.1, "groupnorm_swish mismatch"


# ---------------------------------------------------------------------------
if __name__ == "__main__":
    _self_check()

    BATCH = 2
    SPATIAL = 2   # reference hardcodes 12; small stand-in (output spatial = 16x)

    key = jax.random.PRNGKey(0)
    xkey, pkey = jax.random.split(key)
    x = jax.random.normal(xkey, (BATCH, SPATIAL ** 3), jnp.float32)
    params = init_params(pkey)

    outs = reconstruction_forward(params, x, BATCH, SPATIAL)
    outs = jax.block_until_ready(outs)

    out_sp = 16 * SPATIAL
    for r in outs:
        assert r.shape == (BATCH, 1, out_sp, out_sp, out_sp), r.shape
        assert bool(jnp.all(jnp.isfinite(r)))
    print("KERNEL_OK")
</pallas_src>

<mosaic_0001>
module attributes {stable_mosaic.version = 11 : i64} {
  func.func @_tap_conv_kernel(%arg0: i32, %arg1: i32, %arg2: i32, %arg3: memref<1x1x56x16xbf16, #tpu.memory_space<vmem>>, %arg4: memref<1x1x56x16xbf16, #tpu.memory_space<vmem>>, %arg5: memref<1x1x56x16xbf16, #tpu.memory_space<vmem>>, %arg6: memref<1x1x56x16xbf16, #tpu.memory_space<vmem>>, %arg7: memref<432x32xbf16, #tpu.memory_space<vmem>>, %arg8: memref<1x32xf32, #tpu.memory_space<vmem>>, %arg9: memref<16x32xbf16, #tpu.memory_space<vmem>>, %arg10: memref<1x1x32x32xbf16, #tpu.memory_space<vmem>>) attributes {dimension_semantics = [#tpu.dimension_semantics<parallel>, #tpu.dimension_semantics<parallel>, #tpu.dimension_semantics<parallel>], iteration_bounds = array<i64: 1, 4, 1>, scalar_prefetch = 0 : i64, scratch_operands = 0 : i64, tpu.core_type = #tpu.core_type<tc>, window_params = [{transform_indices = @transform_0, window_bounds = array<i64: 1, 1, 56, 16>}, {transform_indices = @transform_1, window_bounds = array<i64: 1, 1, 56, 16>}, {transform_indices = @transform_2, window_bounds = array<i64: 1, 1, 56, 16>}, {transform_indices = @transform_3, window_bounds = array<i64: 1, 1, 56, 16>}, {transform_indices = @transform_4, window_bounds = array<i64: 432, 32>}, {transform_indices = @transform_5, window_bounds = array<i64: 1, 32>}, {transform_indices = @transform_6, window_bounds = array<i64: 16, 32>}, {transform_indices = @transform_7, window_bounds = array<i64: 1, 1, 32, 32>}]} {
    %cst = arith.constant 0.000000e+00 : f32
    %0 = vector.broadcast %cst : f32 to vector<32x32xf32>
    %c0 = arith.constant 0 : index
    %c0_0 = arith.constant 0 : index
    %c0_1 = arith.constant 0 : index
    %c0_2 = arith.constant 0 : index
    %1 = vector.load %arg3[%c0, %c0_0, %c0_1, %c0_2] : memref<1x1x56x16xbf16, #tpu.memory_space<vmem>>, vector<1x1x32x16xbf16>
    %2 = vector.shape_cast %1 : vector<1x1x32x16xbf16> to vector<32x16xbf16>
    %c0_3 = arith.constant 0 : index
    %c0_4 = arith.constant 0 : index
    %3 = vector.load %arg7[%c0_3, %c0_4] : memref<432x32xbf16, #tpu.memory_space<vmem>>, vector<16x32xbf16>
    %cst_5 = arith.constant dense<0.000000e+00> : vector<32x32xf32>
    %4 = tpu.matmul %2, %3, %cst_5 {dimension_numbers = #tpu.dot_dimension_numbers<[1], [0], [0], [1], [0, 0, 1, 1], [], []>} : vector<32x16xbf16>, vector<16x32xbf16>, vector<32x32xf32> -> vector<32x32xf32>
    %5 = arith.addf %0, %4 : vector<32x32xf32>
    %c0_6 = arith.constant 0 : index
    %c0_7 = arith.constant 0 : index
    %c1 = arith.constant 1 : index
    %c0_8 = arith.constant 0 : index
    %6 = vector.load %arg3[%c0_6, %c0_7, %c1, %c0_8] : memref<1x1x56x16xbf16, #tpu.memory_space<vmem>>, vector<1x1x32x16xbf16>
    %7 = vector.shape_cast %6 : vector<1x1x32x16xbf16> to vector<32x16xbf16>
    %c16 = arith.constant 16 : index
    %c0_9 = arith.constant 0 : index
    %8 = vector.load %arg7[%c16, %c0_9] : memref<432x32xbf16, #tpu.memory_space<vmem>>, vector<16x32xbf16>
    %cst_10 = arith.constant dense<0.000000e+00> : vector<32x32xf32>
    %9 = tpu.matmul %7, %8, %cst_10 {dimension_numbers = #tpu.dot_dimension_numbers<[1], [0], [0], [1], [0, 0, 1, 1], [], []>} : vector<32x16xbf16>, vector<16x32xbf16>, vector<32x32xf32> -> vector<32x32xf32>
    %10 = arith.addf %5, %9 : vector<32x32xf32>
    %c0_11 = arith.constant 0 : index
    %c0_12 = arith.constant 0 : index
    %c2 = arith.constant 2 : index
    %c0_13 = arith.constant 0 : index
    %11 = vector.load %arg3[%c0_11, %c0_12, %c2, %c0_13] : memref<1x1x56x16xbf16, #tpu.memory_space<vmem>>, vector<1x1x32x16xbf16>
    %12 = vector.shape_cast %11 : vector<1x1x32x16xbf16> to vector<32x16xbf16>
    %c32 = arith.constant 32 : index
    %c0_14 = arith.constant 0 : index
    %13 = vector.load %arg7[%c32, %c0_14] : memref<432x32xbf16, #tpu.memory_space<vmem>>, vector<16x32xbf16>
    %cst_15 = arith.constant dense<0.000000e+00> : vector<32x32xf32>
    %14 = tpu.matmul %12, %13, %cst_15 {dimension_numbers = #tpu.dot_dimension_numbers<[1], [0], [0], [1], [0, 0, 1, 1], [], []>} : vector<32x16xbf16>, vector<16x32xbf16>, vector<32x32xf32> -> vector<32x32xf32>
    %15 = arith.addf %10, %14 : vector<32x32xf32>
    %c0_16 = arith.constant 0 : index
    %c0_17 = arith.constant 0 : index
    %c8 = arith.constant 8 : index
    %c0_18 = arith.constant 0 : index
    %16 = vector.load %arg3[%c0_16, %c0_17, %c8, %c0_18] : memref<1x1x56x16xbf16, #tpu.memory_space<vmem>>, vector<1x1x32x16xbf16>
    %17 = vector.shape_cast %16 : vector<1x1x32x16xbf16> to vector<32x16xbf16>
    %c48 = arith.constant 48 : index
    %c0_19 = arith.constant 0 : index
    %18 = vector.load %arg7[%c48, %c0_19] : memref<432x32xbf16, #tpu.memory_space<vmem>>, vector<16x32xbf16>
    %cst_20 = arith.constant dense<0.000000e+00> : vector<32x32xf32>
    %19 = tpu.matmul %17, %18, %cst_20 {dimension_numbers = #tpu.dot_dimension_numbers<[1], [0], [0], [1], [0, 0, 1, 1], [], []>} : vector<32x16xbf16>, vector<16x32xbf16>, vector<32x32xf32> -> vector<32x32xf32>
    %20 = arith.addf %15, %19 : vector<32x32xf32>
    %c0_21 = arith.constant 0 : index
    %c0_22 = arith.constant 0 : index
    %c9 = arith.constant 9 : index
    %c0_23 = arith.constant 0 : index
    %21 = vector.load %arg3[%c0_21, %c0_22, %c9, %c0_23] : memref<1x1x56x16xbf16, #tpu.memory_space<vmem>>, vector<1x1x32x16xbf16>
    %22 = vector.shape_cast %21 : vector<1x1x32x16xbf16> to vector<32x16xbf16>
    %c64 = arith.constant 64 : index
    %c0_24 = arith.constant 0 : index
    %23 = vector.load %arg7[%c64, %c0_24] : memref<432x32xbf16, #tpu.memory_space<vmem>>, vector<16x32xbf16>
    %cst_25 = arith.constant dense<0.000000e+00> : vector<32x32xf32>
    %24 = tpu.matmul %22, %23, %cst_25 {dimension_numbers = #tpu.dot_dimension_numbers<[1], [0], [0], [1], [0, 0, 1, 1], [], []>} : vector<32x16xbf16>, vector<16x32xbf16>, vector<32x32xf32> -> vector<32x32xf32>
    %25 = arith.addf %20, %24 : vector<32x32xf32>
    %c0_26 = arith.constant 0 : index
    %c0_27 = arith.constant 0 : index
    %c10 = arith.constant 10 : index
    %c0_28 = arith.constant 0 : index
    %26 = vector.load %arg3[%c0_26, %c0_27, %c10, %c0_28] : memref<1x1x56x16xbf16, #tpu.memory_space<vmem>>, vector<1x1x32x16xbf16>
    %27 = vector.shape_cast %26 : vector<1x1x32x16xbf16> to vector<32x16xbf16>
    %c80 = arith.constant 80 : index
    %c0_29 = arith.constant 0 : index
    %28 = vector.load %arg7[%c80, %c0_29] : memref<432x32xbf16, #tpu.memory_space<vmem>>, vector<16x32xbf16>
    %cst_30 = arith.constant dense<0.000000e+00> : vector<32x32xf32>
    %29 = tpu.matmul %27, %28, %cst_30 {dimension_numbers = #tpu.dot_dimension_numbers<[1], [0], [0], [1], [0, 0, 1, 1], [], []>} : vector<32x16xbf16>, vector<16x32xbf16>, vector<32x32xf32> -> vector<32x32xf32>
    %30 = arith.addf %25, %29 : vector<32x32xf32>
    %c0_31 = arith.constant 0 : index
    %c0_32 = arith.constant 0 : index
    %c16_33 = arith.constant 16 : index
    %c0_34 = arith.constant 0 : index
    %31 = vector.load %arg3[%c0_31, %c0_32, %c16_33, %c0_34] : memref<1x1x56x16xbf16, #tpu.memory_space<vmem>>, vector<1x1x32x16xbf16>
    %32 = vector.shape_cast %31 : vector<1x1x32x16xbf16> to vector<32x16xbf16>
    %c96 = arith.constant 96 : index
    %c0_35 = arith.constant 0 : index
    %33 = vector.load %arg7[%c96, %c0_35] : memref<432x32xbf16, #tpu.memory_space<vmem>>, vector<16x32xbf16>
    %cst_36 = arith.constant dense<0.000000e+00> : vector<32x32xf32>
    %34 = tpu.matmul %32, %33, %cst_36 {dimension_numbers = #tpu.dot_dimension_numbers<[1], [0], [0], [1], [0, 0, 1, 1], [], []>} : vector<32x16xbf16>, vector<16x32xbf16>, vector<32x32xf32> -> vector<32x32xf32>
    %35 = arith.addf %30, %34 : vector<32x32xf32>
    %c0_37 = arith.constant 0 : index
    %c0_38 = arith.constant 0 : index
    %c17 = arith.constant 17 : index
    %c0_39 = arith.constant 0 : index
    %36 = vector.load %arg3[%c0_37, %c0_38, %c17, %c0_39] : memref<1x1x56x16xbf16, #tpu.memory_space<vmem>>, vector<1x1x32x16xbf16>
    %37 = vector.shape_cast %36 : vector<1x1x32x16xbf16> to vector<32x16xbf16>
    %c112 = arith.constant 112 : index
    %c0_40 = arith.constant 0 : index
    %38 = vector.load %arg7[%c112, %c0_40] : memref<432x32xbf16, #tpu.memory_space<vmem>>, vector<16x32xbf16>
    %cst_41 = arith.constant dense<0.000000e+00> : vector<32x32xf32>
    %39 = tpu.matmul %37, %38, %cst_41 {dimension_numbers = #tpu.dot_dimension_numbers<[1], [0], [0], [1], [0, 0, 1, 1], [], []>} : vector<32x16xbf16>, vector<16x32xbf16>, vector<32x32xf32> -> vector<32x32xf32>
    %40 = arith.addf %35, %39 : vector<32x32xf32>
    %c0_42 = arith.constant 0 : index
    %c0_43 = arith.constant 0 : index
    %c18 = arith.constant 18 : index
    %c0_44 = arith.constant 0 : index
    %41 = vector.load %arg3[%c0_42, %c0_43, %c18, %c0_44] : memref<1x1x56x16xbf16, #tpu.memory_space<vmem>>, vector<1x1x32x16xbf16>
    %42 = vector.shape_cast %41 : vector<1x1x32x16xbf16> to vector<32x16xbf16>
    %c128 = arith.constant 128 : index
    %c0_45 = arith.constant 0 : index
    %43 = vector.load %arg7[%c128, %c0_45] : memref<432x32xbf16, #tpu.memory_space<vmem>>, vector<16x32xbf16>
    %cst_46 = arith.constant dense<0.000000e+00> : vector<32x32xf32>
    %44 = tpu.matmul %42, %43, %cst_46 {dimension_numbers = #tpu.dot_dimension_numbers<[1], [0], [0], [1], [0, 0, 1, 1], [], []>} : vector<32x16xbf16>, vector<16x32xbf16>, vector<32x32xf32> -> vector<32x32xf32>
    %45 = arith.addf %40, %44 : vector<32x32xf32>
    %c0_47 = arith.constant 0 : index
    %c0_48 = arith.constant 0 : index
    %c0_49 = arith.constant 0 : index
    %c0_50 = arith.constant 0 : index
    %46 = vector.load %arg4[%c0_47, %c0_48, %c0_49, %c0_50] : memref<1x1x56x16xbf16, #tpu.memory_space<vmem>>, vector<1x1x32x16xbf16>
    %47 = vector.shape_cast %46 : vector<1x1x32x16xbf16> to vector<32x16xbf16>
    %c144 = arith.constant 144 : index
    %c0_51 = arith.constant 0 : index
    %48 = vector.load %arg7[%c144, %c0_51] : memref<432x32xbf16, #tpu.memory_space<vmem>>, vector<16x32xbf16>
    %cst_52 = arith.constant dense<0.000000e+00> : vector<32x32xf32>
    %49 = tpu.matmul %47, %48, %cst_52 {dimension_numbers = #tpu.dot_dimension_numbers<[1], [0], [0], [1], [0, 0, 1, 1], [], []>} : vector<32x16xbf16>, vector<16x32xbf16>, vector<32x32xf32> -> vector<32x32xf32>
    %50 = arith.addf %45, %49 : vector<32x32xf32>
    %c0_53 = arith.constant 0 : index
    %c0_54 = arith.constant 0 : index
    %c1_55 = arith.constant 1 : index
    %c0_56 = arith.constant 0 : index
    %51 = vector.load %arg4[%c0_53, %c0_54, %c1_55, %c0_56] : memref<1x1x56x16xbf16, #tpu.memory_space<vmem>>, vector<1x1x32x16xbf16>
    %52 = vector.shape_cast %51 : vector<1x1x32x16xbf16> to vector<32x16xbf16>
    %c160 = arith.constant 160 : index
    %c0_57 = arith.constant 0 : index
    %53 = vector.load %arg7[%c160, %c0_57] : memref<432x32xbf16, #tpu.memory_space<vmem>>, vector<16x32xbf16>
    %cst_58 = arith.constant dense<0.000000e+00> : vector<32x32xf32>
    %54 = tpu.matmul %52, %53, %cst_58 {dimension_numbers = #tpu.dot_dimension_numbers<[1], [0], [0], [1], [0, 0, 1, 1], [], []>} : vector<32x16xbf16>, vector<16x32xbf16>, vector<32x32xf32> -> vector<32x32xf32>
    %55 = arith.addf %50, %54 : vector<32x32xf32>
    %c0_59 = arith.constant 0 : index
    %c0_60 = arith.constant 0 : index
    %c2_61 = arith.constant 2 : index
    %c0_62 = arith.constant 0 : index
    %56 = vector.load %arg4[%c0_59, %c0_60, %c2_61, %c0_62] : memref<1x1x56x16xbf16, #tpu.memory_space<vmem>>, vector<1x1x32x16xbf16>
    %57 = vector.shape_cast %56 : vector<1x1x32x16xbf16> to vector<32x16xbf16>
    %c176 = arith.constant 176 : index
    %c0_63 = arith.constant 0 : index
    %58 = vector.load %arg7[%c176, %c0_63] : memref<432x32xbf16, #tpu.memory_space<vmem>>, vector<16x32xbf16>
    %cst_64 = arith.constant dense<0.000000e+00> : vector<32x32xf32>
    %59 = tpu.matmul %57, %58, %cst_64 {dimension_numbers = #tpu.dot_dimension_numbers<[1], [0], [0], [1], [0, 0, 1, 1], [], []>} : vector<32x16xbf16>, vector<16x32xbf16>, vector<32x32xf32> -> vector<32x32xf32>
    %60 = arith.addf %55, %59 : vector<32x32xf32>
    %c0_65 = arith.constant 0 : index
    %c0_66 = arith.constant 0 : index
    %c8_67 = arith.constant 8 : index
    %c0_68 = arith.constant 0 : index
    %61 = vector.load %arg4[%c0_65, %c0_66, %c8_67, %c0_68] : memref<1x1x56x16xbf16, #tpu.memory_space<vmem>>, vector<1x1x32x16xbf16>
    %62 = vector.shape_cast %61 : vector<1x1x32x16xbf16> to vector<32x16xbf16>
    %c192 = arith.constant 192 : index
    %c0_69 = arith.constant 0 : index
    %63 = vector.load %arg7[%c192, %c0_69] : memref<432x32xbf16, #tpu.memory_space<vmem>>, vector<16x32xbf16>
    %cst_70 = arith.constant dense<0.000000e+00> : vector<32x32xf32>
    %64 = tpu.matmul %62, %63, %cst_70 {dimension_numbers = #tpu.dot_dimension_numbers<[1], [0], [0], [1], [0, 0, 1, 1], [], []>} : vector<32x16xbf16>, vector<16x32xbf16>, vector<32x32xf32> -> vector<32x32xf32>
    %65 = arith.addf %60, %64 : vector<32x32xf32>
    %c0_71 = arith.constant 0 : index
    %c0_72 = arith.constant 0 : index
    %c9_73 = arith.constant 9 : index
    %c0_74 = arith.constant 0 : index
    %66 = vector.load %arg4[%c0_71, %c0_72, %c9_73, %c0_74] : memref<1x1x56x16xbf16, #tpu.memory_space<vmem>>, vector<1x1x32x16xbf16>
    %67 = vector.shape_cast %66 : vector<1x1x32x16xbf16> to vector<32x16xbf16>
    %c208 = arith.constant 208 : index
    %c0_75 = arith.constant 0 : index
    %68 = vector.load %arg7[%c208, %c0_75] : memref<432x32xbf16, #tpu.memory_space<vmem>>, vector<16x32xbf16>
    %cst_76 = arith.constant dense<0.000000e+00> : vector<32x32xf32>
    %69 = tpu.matmul %67, %68, %cst_76 {dimension_numbers = #tpu.dot_dimension_numbers<[1], [0], [0], [1], [0, 0, 1, 1], [], []>} : vector<32x16xbf16>, vector<16x32xbf16>, vector<32x32xf32> -> vector<32x32xf32>
    %70 = arith.addf %65, %69 : vector<32x32xf32>
    %c0_77 = arith.constant 0 : index
    %c0_78 = arith.constant 0 : index
    %c10_79 = arith.constant 10 : index
    %c0_80 = arith.constant 0 : index
    %71 = vector.load %arg4[%c0_77, %c0_78, %c10_79, %c0_80] : memref<1x1x56x16xbf16, #tpu.memory_space<vmem>>, vector<1x1x32x16xbf16>
    %72 = vector.shape_cast %71 : vector<1x1x32x16xbf16> to vector<32x16xbf16>
    %c224 = arith.constant 224 : index
    %c0_81 = arith.constant 0 : index
    %73 = vector.load %arg7[%c224, %c0_81] : memref<432x32xbf16, #tpu.memory_space<vmem>>, vector<16x32xbf16>
    %cst_82 = arith.constant dense<0.000000e+00> : vector<32x32xf32>
    %74 = tpu.matmul %72, %73, %cst_82 {dimension_numbers = #tpu.dot_dimension_numbers<[1], [0], [0], [1], [0, 0, 1, 1], [], []>} : vector<32x16xbf16>, vector<16x32xbf16>, vector<32x32xf32> -> vector<32x32xf32>
    %75 = arith.addf %70, %74 : vector<32x32xf32>
    %c0_83 = arith.constant 0 : index
    %c0_84 = arith.constant 0 : index
    %c16_85 = arith.constant 16 : index
    %c0_86 = arith.constant 0 : index
    %76 = vector.load %arg4[%c0_83, %c0_84, %c16_85, %c0_86] : memref<1x1x56x16xbf16, #tpu.memory_space<vmem>>, vector<1x1x32x16xbf16>
    %77 = vector.shape_cast %76 : vector<1x1x32x16xbf16> to vector<32x16xbf16>
    %c240 = arith.constant 240 : index
    %c0_87 = arith.constant 0 : index
    %78 = vector.load %arg7[%c240, %c0_87] : memref<432x32xbf16, #tpu.memory_space<vmem>>, vector<16x32xbf16>
    %cst_88 = arith.constant dense<0.000000e+00> : vector<32x32xf32>
    %79 = tpu.matmul %77, %78, %cst_88 {dimension_numbers = #tpu.dot_dimension_numbers<[1], [0], [0], [1], [0, 0, 1, 1], [], []>} : vector<32x16xbf16>, vector<16x32xbf16>, vector<32x32xf32> -> vector<32x32xf32>
    %80 = arith.addf %75, %79 : vector<32x32xf32>
    %c0_89 = arith.constant 0 : index
    %c0_90 = arith.constant 0 : index
    %c17_91 = arith.constant 17 : index
    %c0_92 = arith.constant 0 : index
    %81 = vector.load %arg4[%c0_89, %c0_90, %c17_91, %c0_92] : memref<1x1x56x16xbf16, #tpu.memory_space<vmem>>, vector<1x1x32x16xbf16>
    %82 = vector.shape_cast %81 : vector<1x1x32x16xbf16> to vector<32x16xbf16>
    %c256 = arith.constant 256 : index
    %c0_93 = arith.constant 0 : index
    %83 = vector.load %arg7[%c256, %c0_93] : memref<432x32xbf16, #tpu.memory_space<vmem>>, vector<16x32xbf16>
    %cst_94 = arith.constant dense<0.000000e+00> : vector<32x32xf32>
    %84 = tpu.matmul %82, %83, %cst_94 {dimension_numbers = #tpu.dot_dimension_numbers<[1], [0], [0], [1], [0, 0, 1, 1], [], []>} : vector<32x16xbf16>, vector<16x32xbf16>, vector<32x32xf32> -> vector<32x32xf32>
    %85 = arith.addf %80, %84 : vector<32x32xf32>
    %c0_95 = arith.constant 0 : index
    %c0_96 = arith.constant 0 : index
    %c18_97 = arith.constant 18 : index
    %c0_98 = arith.constant 0 : index
    %86 = vector.load %arg4[%c0_95, %c0_96, %c18_97, %c0_98] : memref<1x1x56x16xbf16, #tpu.memory_space<vmem>>, vector<1x1x32x16xbf16>
    %87 = vector.shape_cast %86 : vector<1x1x32x16xbf16> to vector<32x16xbf16>
    %c272 = arith.constant 272 : index
    %c0_99 = arith.constant 0 : index
    %88 = vector.load %arg7[%c272, %c0_99] : memref<432x32xbf16, #tpu.memory_space<vmem>>, vector<16x32xbf16>
    %cst_100 = arith.constant dense<0.000000e+00> : vector<32x32xf32>
    %89 = tpu.matmul %87, %88, %cst_100 {dimension_numbers = #tpu.dot_dimension_numbers<[1], [0], [0], [1], [0, 0, 1, 1], [], []>} : vector<32x16xbf16>, vector<16x32xbf16>, vector<32x32xf32> -> vector<32x32xf32>
    %90 = arith.addf %85, %89 : vector<32x32xf32>
    %c0_101 = arith.constant 0 : index
    %c0_102 = arith.constant 0 : index
    %c0_103 = arith.constant 0 : index
    %c0_104 = arith.constant 0 : index
    %91 = vector.load %arg5[%c0_101, %c0_102, %c0_103, %c0_104] : memref<1x1x56x16xbf16, #tpu.memory_space<vmem>>, vector<1x1x32x16xbf16>
    %92 = vector.shape_cast %91 : vector<1x1x32x16xbf16> to vector<32x16xbf16>
    %c288 = arith.constant 288 : index
    %c0_105 = arith.constant 0 : index
    %93 = vector.load %arg7[%c288, %c0_105] : memref<432x32xbf16, #tpu.memory_space<vmem>>, vector<16x32xbf16>
    %cst_106 = arith.constant dense<0.000000e+00> : vector<32x32xf32>
    %94 = tpu.matmul %92, %93, %cst_106 {dimension_numbers = #tpu.dot_dimension_numbers<[1], [0], [0], [1], [0, 0, 1, 1], [], []>} : vector<32x16xbf16>, vector<16x32xbf16>, vector<32x32xf32> -> vector<32x32xf32>
    %95 = arith.addf %90, %94 : vector<32x32xf32>
    %c0_107 = arith.constant 0 : index
    %c0_108 = arith.constant 0 : index
    %c1_109 = arith.constant 1 : index
    %c0_110 = arith.constant 0 : index
    %96 = vector.load %arg5[%c0_107, %c0_108, %c1_109, %c0_110] : memref<1x1x56x16xbf16, #tpu.memory_space<vmem>>, vector<1x1x32x16xbf16>
    %97 = vector.shape_cast %96 : vector<1x1x32x16xbf16> to vector<32x16xbf16>
    %c304 = arith.constant 304 : index
    %c0_111 = arith.constant 0 : index
    %98 = vector.load %arg7[%c304, %c0_111] : memref<432x32xbf16, #tpu.memory_space<vmem>>, vector<16x32xbf16>
    %cst_112 = arith.constant dense<0.000000e+00> : vector<32x32xf32>
    %99 = tpu.matmul %97, %98, %cst_112 {dimension_numbers = #tpu.dot_dimension_numbers<[1], [0], [0], [1], [0, 0, 1, 1], [], []>} : vector<32x16xbf16>, vector<16x32xbf16>, vector<32x32xf32> -> vector<32x32xf32>
    %100 = arith.addf %95, %99 : vector<32x32xf32>
    %c0_113 = arith.constant 0 : index
    %c0_114 = arith.constant 0 : index
    %c2_115 = arith.constant 2 : index
    %c0_116 = arith.constant 0 : index
    %101 = vector.load %arg5[%c0_113, %c0_114, %c2_115, %c0_116] : memref<1x1x56x16xbf16, #tpu.memory_space<vmem>>, vector<1x1x32x16xbf16>
    %102 = vector.shape_cast %101 : vector<1x1x32x16xbf16> to vector<32x16xbf16>
    %c320 = arith.constant 320 : index
    %c0_117 = arith.constant 0 : index
    %103 = vector.load %arg7[%c320, %c0_117] : memref<432x32xbf16, #tpu.memory_space<vmem>>, vector<16x32xbf16>
    %cst_118 = arith.constant dense<0.000000e+00> : vector<32x32xf32>
    %104 = tpu.matmul %102, %103, %cst_118 {dimension_numbers = #tpu.dot_dimension_numbers<[1], [0], [0], [1], [0, 0, 1, 1], [], []>} : vector<32x16xbf16>, vector<16x32xbf16>, vector<32x32xf32> -> vector<32x32xf32>
    %105 = arith.addf %100, %104 : vector<32x32xf32>
    %c0_119 = arith.constant 0 : index
    %c0_120 = arith.constant 0 : index
    %c8_121 = arith.constant 8 : index
    %c0_122 = arith.constant 0 : index
    %106 = vector.load %arg5[%c0_119, %c0_120, %c8_121, %c0_122] : memref<1x1x56x16xbf16, #tpu.memory_space<vmem>>, vector<1x1x32x16xbf16>
    %107 = vector.shape_cast %106 : vector<1x1x32x16xbf16> to vector<32x16xbf16>
    %c336 = arith.constant 336 : index
    %c0_123 = arith.constant 0 : index
    %108 = vector.load %arg7[%c336, %c0_123] : memref<432x32xbf16, #tpu.memory_space<vmem>>, vector<16x32xbf16>
    %cst_124 = arith.constant dense<0.000000e+00> : vector<32x32xf32>
    %109 = tpu.matmul %107, %108, %cst_124 {dimension_numbers = #tpu.dot_dimension_numbers<[1], [0], [0], [1], [0, 0, 1, 1], [], []>} : vector<32x16xbf16>, vector<16x32xbf16>, vector<32x32xf32> -> vector<32x32xf32>
    %110 = arith.addf %105, %109 : vector<32x32xf32>
    %c0_125 = arith.constant 0 : index
    %c0_126 = arith.constant 0 : index
    %c9_127 = arith.constant 9 : index
    %c0_128 = arith.constant 0 : index
    %111 = vector.load %arg5[%c0_125, %c0_126, %c9_127, %c0_128] : memref<1x1x56x16xbf16, #tpu.memory_space<vmem>>, vector<1x1x32x16xbf16>
    %112 = vector.shape_cast %111 : vector<1x1x32x16xbf16> to vector<32x16xbf16>
    %c352 = arith.constant 352 : index
    %c0_129 = arith.constant 0 : index
    %113 = vector.load %arg7[%c352, %c0_129] : memref<432x32xbf16, #tpu.memory_space<vmem>>, vector<16x32xbf16>
    %cst_130 = arith.constant dense<0.000000e+00> : vector<32x32xf32>
    %114 = tpu.matmul %112, %113, %cst_130 {dimension_numbers = #tpu.dot_dimension_numbers<[1], [0], [0], [1], [0, 0, 1, 1], [], []>} : vector<32x16xbf16>, vector<16x32xbf16>, vector<32x32xf32> -> vector<32x32xf32>
    %115 = arith.addf %110, %114 : vector<32x32xf32>
    %c0_131 = arith.constant 0 : index
    %c0_132 = arith.constant 0 : index
    %c10_133 = arith.constant 10 : index
    %c0_134 = arith.constant 0 : index
    %116 = vector.load %arg5[%c0_131, %c0_132, %c10_133, %c0_134] : memref<1x1x56x16xbf16, #tpu.memory_space<vmem>>, vector<1x1x32x16xbf16>
    %117 = vector.shape_cast %116 : vector<1x1x32x16xbf16> to vector<32x16xbf16>
    %c368 = arith.constant 368 : index
    %c0_135 = arith.constant 0 : index
    %118 = vector.load %arg7[%c368, %c0_135] : memref<432x32xbf16, #tpu.memory_space<vmem>>, vector<16x32xbf16>
    %cst_136 = arith.constant dense<0.000000e+00> : vector<32x32xf32>
    %119 = tpu.matmul %117, %118, %cst_136 {dimension_numbers = #tpu.dot_dimension_numbers<[1], [0], [0], [1], [0, 0, 1, 1], [], []>} : vector<32x16xbf16>, vector<16x32xbf16>, vector<32x32xf32> -> vector<32x32xf32>
    %120 = arith.addf %115, %119 : vector<32x32xf32>
    %c0_137 = arith.constant 0 : index
    %c0_138 = arith.constant 0 : index
    %c16_139 = arith.constant 16 : index
    %c0_140 = arith.constant 0 : index
    %121 = vector.load %arg5[%c0_137, %c0_138, %c16_139, %c0_140] : memref<1x1x56x16xbf16, #tpu.memory_space<vmem>>, vector<1x1x32x16xbf16>
    %122 = vector.shape_cast %121 : vector<1x1x32x16xbf16> to vector<32x16xbf16>
    %c384 = arith.constant 384 : index
    %c0_141 = arith.constant 0 : index
    %123 = vector.load %arg7[%c384, %c0_141] : memref<432x32xbf16, #tpu.memory_space<vmem>>, vector<16x32xbf16>
    %cst_142 = arith.constant dense<0.000000e+00> : vector<32x32xf32>
    %124 = tpu.matmul %122, %123, %cst_142 {dimension_numbers = #tpu.dot_dimension_numbers<[1], [0], [0], [1], [0, 0, 1, 1], [], []>} : vector<32x16xbf16>, vector<16x32xbf16>, vector<32x32xf32> -> vector<32x32xf32>
    %125 = arith.addf %120, %124 : vector<32x32xf32>
    %c0_143 = arith.constant 0 : index
    %c0_144 = arith.constant 0 : index
    %c17_145 = arith.constant 17 : index
    %c0_146 = arith.constant 0 : index
    %126 = vector.load %arg5[%c0_143, %c0_144, %c17_145, %c0_146] : memref<1x1x56x16xbf16, #tpu.memory_space<vmem>>, vector<1x1x32x16xbf16>
    %127 = vector.shape_cast %126 : vector<1x1x32x16xbf16> to vector<32x16xbf16>
    %c400 = arith.constant 400 : index
    %c0_147 = arith.constant 0 : index
    %128 = vector.load %arg7[%c400, %c0_147] : memref<432x32xbf16, #tpu.memory_space<vmem>>, vector<16x32xbf16>
    %cst_148 = arith.constant dense<0.000000e+00> : vector<32x32xf32>
    %129 = tpu.matmul %127, %128, %cst_148 {dimension_numbers = #tpu.dot_dimension_numbers<[1], [0], [0], [1], [0, 0, 1, 1], [], []>} : vector<32x16xbf16>, vector<16x32xbf16>, vector<32x32xf32> -> vector<32x32xf32>
    %130 = arith.addf %125, %129 : vector<32x32xf32>
    %c0_149 = arith.constant 0 : index
    %c0_150 = arith.constant 0 : index
    %c18_151 = arith.constant 18 : index
    %c0_152 = arith.constant 0 : index
    %131 = vector.load %arg5[%c0_149, %c0_150, %c18_151, %c0_152] : memref<1x1x56x16xbf16, #tpu.memory_space<vmem>>, vector<1x1x32x16xbf16>
    %132 = vector.shape_cast %131 : vector<1x1x32x16xbf16> to vector<32x16xbf16>
    %c416 = arith.constant 416 : index
    %c0_153 = arith.constant 0 : index
    %133 = vector.load %arg7[%c416, %c0_153] : memref<432x32xbf16, #tpu.memory_space<vmem>>, vector<16x32xbf16>
    %cst_154 = arith.constant dense<0.000000e+00> : vector<32x32xf32>
    %134 = tpu.matmul %132, %133, %cst_154 {dimension_numbers = #tpu.dot_dimension_numbers<[1], [0], [0], [1], [0, 0, 1, 1], [], []>} : vector<32x16xbf16>, vector<16x32xbf16>, vector<32x32xf32> -> vector<32x32xf32>
    %135 = arith.addf %130, %134 : vector<32x32xf32>
    %c0_155 = arith.constant 0 : index
    %c0_156 = arith.constant 0 : index
    %c9_157 = arith.constant 9 : index
    %c0_158 = arith.constant 0 : index
    %136 = vector.load %arg6[%c0_155, %c0_156, %c9_157, %c0_158] : memref<1x1x56x16xbf16, #tpu.memory_space<vmem>>, vector<1x1x32x16xbf16>
    %137 = vector.shape_cast %136 : vector<1x1x32x16xbf16> to vector<32x16xbf16>
    %c0_159 = arith.constant 0 : index
    %c0_160 = arith.constant 0 : index
    %138 = vector.load %arg9[%c0_159, %c0_160] : memref<16x32xbf16, #tpu.memory_space<vmem>>, vector<16x32xbf16>
    %cst_161 = arith.constant dense<0.000000e+00> : vector<32x32xf32>
    %139 = tpu.matmul %137, %138, %cst_161 {dimension_numbers = #tpu.dot_dimension_numbers<[1], [0], [0], [1], [0, 0, 1, 1], [], []>} : vector<32x16xbf16>, vector<16x32xbf16>, vector<32x32xf32> -> vector<32x32xf32>
    %140 = arith.addf %135, %139 : vector<32x32xf32>
    %c0_162 = arith.constant 0 : index
    %c0_163 = arith.constant 0 : index
    %141 = vector.load %arg8[%c0_162, %c0_163] : memref<1x32xf32, #tpu.memory_space<vmem>>, vector<1x32xf32>
    %142 = vector.broadcast %141 : vector<1x32xf32> to vector<32x32xf32>
    %143 = arith.addf %140, %142 : vector<32x32xf32>
    %144 = arith.truncf %143 : vector<32x32xf32> to vector<32x32xbf16>
    %c0_164 = arith.constant 0 : index
    %c0_165 = arith.constant 0 : index
    %c0_166 = arith.constant 0 : index
    %c0_167 = arith.constant 0 : index
    %145 = vector.load %arg10[%c0_164, %c0_165, %c0_166, %c0_167] : memref<1x1x32x32xbf16, #tpu.memory_space<vmem>>, vector<1x1x32x32xbf16>
    %146 = vector.shape_cast %145 : vector<1x1x32x32xbf16> to vector<32x32xbf16>
    %147 = vector.shape_cast %144 : vector<32x32xbf16> to vector<1x1x32x32xbf16>
    tpu.vector_store %arg10[%c0_164, %c0_165, %c0_166, %c0_167], %147 {strides = array<i32>} : memref<1x1x32x32xbf16, #tpu.memory_space<vmem>>, vector<1x1x32x32xbf16>,
    return
  }
  func.func @transform_0(%arg0: i32, %arg1: i32, %arg2: i32) -> (i32, i32, i32, i32) {
    %c0_i32 = arith.constant 0 : i32
    %0 = arith.addi %arg1, %c0_i32 : i32
    %c0_i32_0 = arith.constant 0 : i32
    %c0_i32_1 = arith.constant 0 : i32
    %c0_i32_2 = arith.constant 0 : i32
    return %arg0, %0, %c0_i32_0, %c0_i32_1 : i32, i32, i32, i32
  }
  func.func @transform_1(%arg0: i32, %arg1: i32, %arg2: i32) -> (i32, i32, i32, i32) {
    %c1_i32 = arith.constant 1 : i32
    %0 = arith.addi %arg1, %c1_i32 : i32
    %c0_i32 = arith.constant 0 : i32
    %c0_i32_0 = arith.constant 0 : i32
    %c0_i32_1 = arith.constant 0 : i32
    return %arg0, %0, %c0_i32, %c0_i32_0 : i32, i32, i32, i32
  }
  func.func @transform_2(%arg0: i32, %arg1: i32, %arg2: i32) -> (i32, i32, i32, i32) {
    %c2_i32 = arith.constant 2 : i32
    %0 = arith.addi %arg1, %c2_i32 : i32
    %c0_i32 = arith.constant 0 : i32
    %c0_i32_0 = arith.constant 0 : i32
    %c0_i32_1 = arith.constant 0 : i32
    return %arg0, %0, %c0_i32, %c0_i32_0 : i32, i32, i32, i32
  }
  func.func @transform_3(%arg0: i32, %arg1: i32, %arg2: i32) -> (i32, i32, i32, i32) {
    %c1_i32 = arith.constant 1 : i32
    %0 = arith.addi %arg1, %c1_i32 : i32
    %c0_i32 = arith.constant 0 : i32
    %c0_i32_0 = arith.constant 0 : i32
    %c0_i32_1 = arith.constant 0 : i32
    return %arg0, %0, %c0_i32, %c0_i32_0 : i32, i32, i32, i32
  }
  func.func @transform_4(%arg0: i32, %arg1: i32, %arg2: i32) -> (i32, i32) {
    %c0_i32 = arith.constant 0 : i32
    %c0_i32_0 = arith.constant 0 : i32
    return %c0_i32, %arg2 : i32, i32
  }
  func.func @transform_5(%arg0: i32, %arg1: i32, %arg2: i32) -> (i32, i32) {
    %c0_i32 = arith.constant 0 : i32
    %c0_i32_0 = arith.constant 0 : i32
    return %c0_i32, %arg2 : i32, i32
  }
  func.func @transform_6(%arg0: i32, %arg1: i32, %arg2: i32) -> (i32, i32) {
    %c0_i32 = arith.constant 0 : i32
    %c0_i32_0 = arith.constant 0 : i32
    return %c0_i32, %arg2 : i32, i32
  }
  func.func @transform_7(%arg0: i32, %arg1: i32, %arg2: i32) -> (i32, i32, i32, i32) {
    %c0_i32 = arith.constant 0 : i32
    %c0_i32_0 = arith.constant 0 : i32
    return %arg0, %arg1, %c0_i32, %arg2 : i32, i32, i32, i32
  }
}

</mosaic_0001>

<llo_original>
// kernel: tpu_custom_call.1
$region0: #{tpu_custom_call.1}
  #allocation0 [shape = 'u32[]', space=smem, size = 0x4, offset = 0x4, fixed_abs, tag = 'smem constant byte address 0x4 - core index']
  #allocation1 [shape = 'u32[144,128]{1,0:T(1,128)}', space=vmem, size = 0x12000, scoped, tag = 'internal scratch']
  %s0 = inlined_call_operand.vmem [shape: bf16[1,6,56,16], index: 0, kind: input, shape index: {}]
  %s1 = inlined_call_operand.vmem [shape: bf16[1,6,56,16], index: 1, kind: input, shape index: {}]
  %s2 = inlined_call_operand.vmem [shape: bf16[1,6,56,16], index: 2, kind: input, shape index: {}]
  %s3 = inlined_call_operand.vmem [shape: bf16[1,6,56,16], index: 3, kind: input, shape index: {}]
  %s4 = inlined_call_operand.vmem [shape: bf16[432,32], index: 4, kind: input, shape index: {}]
  %s5 = inlined_call_operand.vmem [shape: f32[1,32], index: 5, kind: input, shape index: {}]
  %s6 = inlined_call_operand.vmem [shape: bf16[16,32], index: 6, kind: input, shape index: {}]
  %s7 = inlined_call_operand.hbm [shape: bf16[1,4,32,32], index: 7, kind: output, shape index: {}]
  %s8 = sld [smem:[#allocation0]]
  $region61: #{tpu_custom_call.1} parent=0
    _
  %s10 = ssub.s32 1, %s8
  %s11 = scalar_select 0, %s10, %s8
  $region1: #{tpu_custom_call.1} parent=0
    #allocation2 [shape = 'u8[16384]{0}', space=vmem, size = 0x4000, scoped, tag = 'output window, operand 0']
    #allocation3 [shape = 's32[2]{0}', space=sflag, size = 0x8, scoped, tag = 'scoped memory for tpu_custom_call.1']
    %12 = vsyncpa [#allocation3], 0
    %s13 = scalar_lea.sflag [#allocation3], 1
    %14 = vsyncpa %s13, 0
    loop: start=0, step=1, limit=6
    $region2: #{tpu_custom_call.1} parent=1 // loop_pre_header
      _
    $region3: #{tpu_custom_call.1} parent=1 // loop_header
      %s16 = sphi 0, %s20
      %p17 = scmp.ge.s32.totalorder %s16, 6
      %s23 = sphi 0, %s42
      %s24 = sphi 0, %s38
      %s25 = sphi 0, %s34
      %s26 = sphi 0, %s23
      %s27 = sphi 0, %s24
      %s28 = sphi 0, %s25
      %s29 = sphi 0, %s26
      %s30 = sphi 0, %s27
      %s31 = sphi 0, %s28
      %s47 = sphi 0, %s49
      %s50 = sphi 0, %s47
      %s51 = sphi 0, %s50
      %s67 = sphi 0, %s51
      %s77 = sphi 0, %s79
      %s80 = sphi 0, %s77
      %s81 = sphi 0, %s80
      %s97 = sphi 0, %s81
      %s107 = sphi 0, %s109
      %s110 = sphi 0, %s107
      %s111 = sphi 0, %s110
      %s127 = sphi 0, %s111
      %s137 = sphi 0, %s139
      %s140 = sphi 0, %s137
      %s141 = sphi 0, %s140
      %s157 = sphi 0, %s141
      %s163 = sphi 0, %s165
      %s166 = sphi 0, %s163
      %s167 = sphi 0, %s166
      %s183 = sphi 0, %s167
      %s189 = sphi 0, %s191
      %s192 = sphi 0, %s189
      %s193 = sphi 0, %s192
      %s209 = sphi 0, %s193
      %s215 = sphi 0, %s217
      %s218 = sphi 0, %s215
      %s219 = sphi 0, %s218
      %s235 = sphi 0, %s219
      %s245 = sphi 0, %s247
      %s248 = sphi 0, %s245
      %s249 = sphi 0, %s248
      %s265 = sphi 0, %s249
    $region4: #{tpu_custom_call.1} parent=1 // loop_header_branch
      %19 = sbr.rel (%p17) target = $region8
    $region5: #{tpu_custom_call.1} parent=1 // loop_body
      %s21 = ssub.s32 %s16, 1
      %s22 = ssub.s32 %s16, 2
      %s32 = sadd.s32 1, %s25
      %p33 = scmp.ge.s32.totalorder %s32, 1
      %s34 = scalar_select %p33, 0, %s32
      %s35 = sadd.s32 1, %s24
      %s36 = scalar_select %p33, %s35, %s24
      %p37 = scmp.ge.s32.totalorder %s36, 4
      %s38 = scalar_select %p37, 0, %s36
      %s39 = sadd.s32 1, %s23
      %s40 = scalar_select %p37, %s39, %s23
      %p41 = scmp.ge.s32.totalorder %s40, 1
      %s42 = scalar_select %p41, 0, %s40
      %s43 = ssub.s32 %s23, %s42
      %s44 = ssub.s32 %s24, %s38
      %s45 = sor.u32 %s43, %s44
      %p46 = scmp.eq.s32.totalorder %s45, 0
      %s48 = sadd.s32 %s47, 1
      %s49 = scalar_select %p46, %s47, %s48
      %p52 = pneg %p46
      %p53 = scmp.eq.s32.totalorder %s16, 3
      %p54 = por %p52, %p53
      %p55 = scmp.ne.s32.totalorder %s47, %s50
      %p56 = scmp.eq.s32.totalorder %s16, 0
      %p57 = por %p55, %p56
      %p58 = scmp.ne.s32.totalorder %s47, %s50
      %p59 = scmp.eq.s32.totalorder %s21, 3
      %p60 = por %p58, %p59
      %p61 = scmp.ne.s32.totalorder %s50, %s51
      %p62 = scmp.eq.s32.totalorder %s21, 0
      %p63 = por %p61, %p62
      %p64 = scmp.ne.s32.totalorder %s50, %s51
      %p65 = scmp.eq.s32.totalorder %s22, 3
      %p66 = por %p64, %p65
      %p68 = scmp.ne.s32.totalorder %s51, %s67
      %p69 = scmp.eq.s32.totalorder %s22, 0
      %p70 = por %p68, %p69
      %s71 = sadd.s32 %s24, 1
      %s72 = sadd.s32 %s38, 1
      %s73 = ssub.s32 %s23, %s42
      %s74 = ssub.s32 %s71, %s72
      %s75 = sor.u32 %s73, %s74
      %p76 = scmp.eq.s32.totalorder %s75, 0
      %s78 = sadd.s32 %s77, 1
      %s79 = scalar_select %p76, %s77, %s78
      %p82 = pneg %p76
      %p83 = scmp.eq.s32.totalorder %s16, 3
      %p84 = por %p82, %p83
      %p85 = scmp.ne.s32.totalorder %s77, %s80
      %p86 = scmp.eq.s32.totalorder %s16, 0
      %p87 = por %p85, %p86
      %p88 = scmp.ne.s32.totalorder %s77, %s80
      %p89 = scmp.eq.s32.totalorder %s21, 3
      %p90 = por %p88, %p89
      %p91 = scmp.ne.s32.totalorder %s80, %s81
      %p92 = scmp.eq.s32.totalorder %s21, 0
      %p93 = por %p91, %p92
      %p94 = scmp.ne.s32.totalorder %s80, %s81
      %p95 = scmp.eq.s32.totalorder %s22, 3
      %p96 = por %p94, %p95
      %p98 = scmp.ne.s32.totalorder %s81, %s97
      %p99 = scmp.eq.s32.totalorder %s22, 0
      %p100 = por %p98, %p99
      %s101 = sadd.s32 %s24, 2
      %s102 = sadd.s32 %s38, 2
      %s103 = ssub.s32 %s23, %s42
      %s104 = ssub.s32 %s101, %s102
      %s105 = sor.u32 %s103, %s104
      %p106 = scmp.eq.s32.totalorder %s105, 0
      %s108 = sadd.s32 %s107, 1
      %s109 = scalar_select %p106, %s107, %s108
      %p112 = pneg %p106
      %p113 = scmp.eq.s32.totalorder %s16, 3
      %p114 = por %p112, %p113
      %p115 = scmp.ne.s32.totalorder %s107, %s110
      %p116 = scmp.eq.s32.totalorder %s16, 0
      %p117 = por %p115, %p116
      %p118 = scmp.ne.s32.totalorder %s107, %s110
      %p119 = scmp.eq.s32.totalorder %s21, 3
      %p120 = por %p118, %p119
      %p121 = scmp.ne.s32.totalorder %s110, %s111
      %p122 = scmp.eq.s32.totalorder %s21, 0
      %p123 = por %p121, %p122
      %p124 = scmp.ne.s32.totalorder %s110, %s111
      %p125 = scmp.eq.s32.totalorder %s22, 3
      %p126 = por %p124, %p125
      %p128 = scmp.ne.s32.totalorder %s111, %s127
      %p129 = scmp.eq.s32.totalorder %s22, 0
      %p130 = por %p128, %p129
      %s131 = sadd.s32 %s24, 1
      %s132 = sadd.s32 %s38, 1
      %s133 = ssub.s32 %s23, %s42
      %s134 = ssub.s32 %s131, %s132
      %s135 = sor.u32 %s133, %s134
      %p136 = scmp.eq.s32.totalorder %s135, 0
      %s138 = sadd.s32 %s137, 1
      %s139 = scalar_select %p136, %s137, %s138
      %p142 = pneg %p136
      %p143 = scmp.eq.s32.totalorder %s16, 3
      %p144 = por %p142, %p143
      %p145 = scmp.ne.s32.totalorder %s137, %s140
      %p146 = scmp.eq.s32.totalorder %s16, 0
      %p147 = por %p145, %p146
      %p148 = scmp.ne.s32.totalorder %s137, %s140
      %p149 = scmp.eq.s32.totalorder %s21, 3
      %p150 = por %p148, %p149
      %p151 = scmp.ne.s32.totalorder %s140, %s141
      %p152 = scmp.eq.s32.totalorder %s21, 0
      %p153 = por %p151, %p152
      %p154 = scmp.ne.s32.totalorder %s140, %s141
      %p155 = scmp.eq.s32.totalorder %s22, 3
      %p156 = por %p154, %p155
      %p158 = scmp.ne.s32.totalorder %s141, %s157
      %p159 = scmp.eq.s32.totalorder %s22, 0
      %p160 = por %p158, %p159
      %s161 = ssub.s32 %s25, %s34
      %p162 = scmp.eq.s32.totalorder %s161, 0
      %s164 = sadd.s32 %s163, 1
      %s165 = scalar_select %p162, %s163, %s164
      %p168 = pneg %p162
      %p169 = scmp.eq.s32.totalorder %s16, 3
      %p170 = por %p168, %p169
      %p171 = scmp.ne.s32.totalorder %s163, %s166
      %p172 = scmp.eq.s32.totalorder %s16, 0
      %p173 = por %p171, %p172
      %p174 = scmp.ne.s32.totalorder %s163, %s166
      %p175 = scmp.eq.s32.totalorder %s21, 3
      %p176 = por %p174, %p175
      %p177 = scmp.ne.s32.totalorder %s166, %s167
      %p178 = scmp.eq.s32.totalorder %s21, 0
      %p179 = por %p177, %p178
      %p180 = scmp.ne.s32.totalorder %s166, %s167
      %p181 = scmp.eq.s32.totalorder %s22, 3
      %p182 = por %p180, %p181
      %p184 = scmp.ne.s32.totalorder %s167, %s183
      %p185 = scmp.eq.s32.totalorder %s22, 0
      %p186 = por %p184, %p185
      %s187 = ssub.s32 %s25, %s34
      %p188 = scmp.eq.s32.totalorder %s187, 0
      %s190 = sadd.s32 %s189, 1
      %s191 = scalar_select %p188, %s189, %s190
      %p194 = pneg %p188
      %p195 = scmp.eq.s32.totalorder %s16, 3
      %p196 = por %p194, %p195
      %p197 = scmp.ne.s32.totalorder %s189, %s192
      %p198 = scmp.eq.s32.totalorder %s16, 0
      %p199 = por %p197, %p198
      %p200 = scmp.ne.s32.totalorder %s189, %s192
      %p201 = scmp.eq.s32.totalorder %s21, 3
      %p202 = por %p200, %p201
      %p203 = scmp.ne.s32.totalorder %s192, %s193
      %p204 = scmp.eq.s32.totalorder %s21, 0
      %p205 = por %p203, %p204
      %p206 = scmp.ne.s32.totalorder %s192, %s193
      %p207 = scmp.eq.s32.totalorder %s22, 3
      %p208 = por %p206, %p207
      %p210 = scmp.ne.s32.totalorder %s193, %s209
      %p211 = scmp.eq.s32.totalorder %s22, 0
      %p212 = por %p210, %p211
      %s213 = ssub.s32 %s25, %s34
      %p214 = scmp.eq.s32.totalorder %s213, 0
      %s216 = sadd.s32 %s215, 1
      %s217 = scalar_select %p214, %s215, %s216
      %p220 = pneg %p214
      %p221 = scmp.eq.s32.totalorder %s16, 3
      %p222 = por %p220, %p221
      %p223 = scmp.ne.s32.totalorder %s215, %s218
      %p224 = scmp.eq.s32.totalorder %s16, 0
      %p225 = por %p223, %p224
      %p226 = scmp.ne.s32.totalorder %s215, %s218
      %p227 = scmp.eq.s32.totalorder %s21, 3
      %p228 = por %p226, %p227
      %p229 = scmp.ne.s32.totalorder %s218, %s219
      %p230 = scmp.eq.s32.totalorder %s21, 0
      %p231 = por %p229, %p230
      %p232 = scmp.ne.s32.totalorder %s218, %s219
      %p233 = scmp.eq.s32.totalorder %s22, 3
      %p234 = por %p232, %p233
      %p236 = scmp.ne.s32.totalorder %s219, %s235
      %p237 = scmp.eq.s32.totalorder %s22, 0
      %p238 = por %p236, %p237
      %s239 = ssub.s32 %s23, %s42
      %s240 = ssub.s32 %s24, %s38
      %s241 = sor.u32 %s239, %s240
      %s242 = ssub.s32 %s25, %s34
      %s243 = sor.u32 %s241, %s242
      %p244 = scmp.eq.s32.totalorder %s243, 0
      %s246 = sadd.s32 %s245, 1
      %s247 = scalar_select %p244, %s245, %s246
      %p250 = pneg %p244
      %p251 = scmp.eq.s32.totalorder %s16, 3
      %p252 = por %p250, %p251
      %p253 = scmp.ne.s32.totalorder %s245, %s248
      %p254 = scmp.eq.s32.totalorder %s16, 0
      %p255 = por %p253, %p254
      %p256 = scmp.ne.s32.totalorder %s245, %s248
      %p257 = scmp.eq.s32.totalorder %s21, 3
      %p258 = por %p256, %p257
      %p259 = scmp.ne.s32.totalorder %s248, %s249
      %p260 = scmp.eq.s32.totalorder %s21, 0
      %p261 = por %p259, %p260
      %p262 = scmp.ne.s32.totalorder %s248, %s249
      %p263 = scmp.eq.s32.totalorder %s22, 3
      %p264 = por %p262, %p263
      %p266 = scmp.ne.s32.totalorder %s249, %s265
      %p267 = scmp.eq.s32.totalorder %s22, 0
      %p268 = por %p266, %p267
      %p269 = scmp.le.s32.totalorder 1, %s16
      %p270 = scmp.lt.s32.totalorder %s16, 5
      %p271 = pnand %p269, %p270
      %p272 = pneg %p271
      // Predicated region
      $region9: #{tpu_custom_call.1} parent=5 // pred_check
        _
      $region10: #{tpu_custom_call.1} parent=5 // pred_check_branch
        %274 = sbr.rel (%p271) target = $region12
      $region11: #{tpu_custom_call.1} parent=5 // pred_region
        %s275 = ssub.s32 %s16, 1
        // Predicated region
        $region13: #{tpu_custom_call.1} parent=11 // pred_check
          %p276 = pneg %p179
        $region14: #{tpu_custom_call.1} parent=11 // pred_check_branch
          %278 = sbr.rel (%p276) target = $region16
        $region15: #{tpu_custom_call.1} parent=11 // pred_region
          %p279 = scmp.lt.s32.totalorder %s28, 0
          %s280 = scalar_select %p279, %s28, 0
          %s281 = smul.addr %s280, 4
          %s282 = scalar_lea.vmem %s4, %s281
        $region16: #{tpu_custom_call.1} parent=11 // pred_fallthru
          _
        // Predicated region
        $region17: #{tpu_custom_call.1} parent=11 // pred_check
          %p283 = pneg %p205
        $region18: #{tpu_custom_call.1} parent=11 // pred_check_branch
          %285 = sbr.rel (%p283) target = $region20
        $region19: #{tpu_custom_call.1} parent=11 // pred_region
          %p286 = scmp.lt.s32.totalorder %s28, 0
          %s287 = scalar_select %p286, %s28, 0
          %s288 = scalar_lea.vmem %s5, %s287
        $region20: #{tpu_custom_call.1} parent=11 // pred_fallthru
          _
        // Predicated region
        $region21: #{tpu_custom_call.1} parent=11 // pred_check
          %p289 = pneg %p231
        $region22: #{tpu_custom_call.1} parent=11 // pred_check_branch
          %291 = sbr.rel (%p289) target = $region24
        $region23: #{tpu_custom_call.1} parent=11 // pred_region
          %p292 = scmp.lt.s32.totalorder %s28, 0
          %s293 = scalar_select %p292, %s28, 0
          %s294 = smul.addr %s293, 4
          %s295 = scalar_lea.vmem %s6, %s294
        $region24: #{tpu_custom_call.1} parent=11 // pred_fallthru
          _
      $region12: #{tpu_custom_call.1} parent=5 // pred_fallthru
        _
      %p296 = scmp.lt.s32.totalorder %s16, 4
      // Predicated region
      $region25: #{tpu_custom_call.1} parent=5 // pred_check
        %p297 = pneg %p296
      $region26: #{tpu_custom_call.1} parent=5 // pred_check_branch
        %299 = sbr.rel (%p297) target = $region28
      $region27: #{tpu_custom_call.1} parent=5 // pred_region
        // Predicated region
        $region29: #{tpu_custom_call.1} parent=27 // pred_check
          %p300 = pneg %p57
        $region30: #{tpu_custom_call.1} parent=27 // pred_check_branch
          %302 = sbr.rel (%p300) target = $region32
        $region31: #{tpu_custom_call.1} parent=27 // pred_region
          %p303 = scmp.lt.s32.totalorder %s23, 0
          %s304 = scalar_select %p303, %s23, 0
          %p305 = scmp.lt.s32.totalorder %s24, 5
          %s306 = scalar_select %p305, %s24, 5
          %s307 = smul.addr %s306, 7
          %s308 = smul.addr %s304, 42
          %s309 = sadd.s32 %s307, %s308
          %s310 = smul.addr %s309, 4
          %s311 = scalar_lea.vmem %s0, %s310
        $region32: #{tpu_custom_call.1} parent=27 // pred_fallthru
          _
        // Predicated region
        $region33: #{tpu_custom_call.1} parent=27 // pred_check
          %p312 = pneg %p87
        $region34: #{tpu_custom_call.1} parent=27 // pred_check_branch
          %314 = sbr.rel (%p312) target = $region36
        $region35: #{tpu_custom_call.1} parent=27 // pred_region
          %s315 = sadd.s32 %s24, 1
          %p316 = scmp.lt.s32.totalorder %s23, 0
          %s317 = scalar_select %p316, %s23, 0
          %p318 = scmp.lt.s32.totalorder %s315, 5
          %s319 = scalar_select %p318, %s315, 5
          %s320 = smul.addr %s319, 7
          %s321 = smul.addr %s317, 42
          %s322 = sadd.s32 %s320, %s321
          %s323 = smul.addr %s322, 4
          %s324 = scalar_lea.vmem %s1, %s323
          %s325 = sadd.s32 %s24, 1
        $region36: #{tpu_custom_call.1} parent=27 // pred_fallthru
          _
        // Predicated region
        $region37: #{tpu_custom_call.1} parent=27 // pred_check
          %p326 = pneg %p117
        $region38: #{tpu_custom_call.1} parent=27 // pred_check_branch
          %328 = sbr.rel (%p326) target = $region40
        $region39: #{tpu_custom_call.1} parent=27 // pred_region
          %s329 = sadd.s32 %s24, 2
          %p330 = scmp.lt.s32.totalorder %s23, 0
          %s331 = scalar_select %p330, %s23, 0
          %p332 = scmp.lt.s32.totalorder %s329, 5
          %s333 = scalar_select %p332, %s329, 5
          %s334 = smul.addr %s333, 7
          %s335 = smul.addr %s331, 42
          %s336 = sadd.s32 %s334, %s335
          %s337 = smul.addr %s336, 4
          %s338 = scalar_lea.vmem %s2, %s337
          %s339 = sadd.s32 %s24, 2
        $region40: #{tpu_custom_call.1} parent=27 // pred_fallthru
          _
        // Predicated region
        $region41: #{tpu_custom_call.1} parent=27 // pred_check
          %p340 = pneg %p147
        $region42: #{tpu_custom_call.1} parent=27 // pred_check_branch
          %342 = sbr.rel (%p340) target = $region44
        $region43: #{tpu_custom_call.1} parent=27 // pred_region
          %s343 = sadd.s32 %s24, 1
          %p344 = scmp.lt.s32.totalorder %s23, 0
          %s345 = scalar_select %p344, %s23, 0
          %p346 = scmp.lt.s32.totalorder %s343, 5
          %s347 = scalar_select %p346, %s343, 5
          %s348 = smul.addr %s347, 7
          %s349 = smul.addr %s345, 42
          %s350 = sadd.s32 %s348, %s349
          %s351 = smul.addr %s350, 4
          %s352 = scalar_lea.vmem %s3, %s351
          %s353 = sadd.s32 %s24, 1
        $region44: #{tpu_custom_call.1} parent=27 // pred_fallthru
          _
      $region28: #{tpu_custom_call.1} parent=5 // pred_fallthru
        _
      %p354 = scmp.le.s32.totalorder 1, %s16
      %p355 = scmp.lt.s32.totalorder %s16, 5
      %p356 = pnand %p354, %p355
      %p357 = pneg %p356
      // Predicated region
      $region45: #{tpu_custom_call.1} parent=5 // pred_check
        _
      $region46: #{tpu_custom_call.1} parent=5 // pred_check_branch
        %359 = sbr.rel (%p356) target = $region48
      $region47: #{tpu_custom_call.1} parent=5 // pred_region
        %s360 = ssub.s32 %s16, 1
        %p361 = scmp.lt.s32.totalorder %s26, 0
        %s362 = scalar_select %p361, %s26, 0
        %p363 = scmp.lt.s32.totalorder %s27, 5
        %s364 = scalar_select %p363, %s27, 5
        %s365 = smul.addr %s364, 7
        %s366 = smul.addr %s362, 42
        %s367 = sadd.s32 %s365, %s366
        %s368 = smul.addr %s367, 4
        %s369 = scalar_lea.vmem %s0, %s368
        %p370 = pneg %p63
        %p371 = pneg %p60
        %s372 = sadd.s32 %s27, 1
        %p373 = scmp.lt.s32.totalorder %s26, 0
        %s374 = scalar_select %p373, %s26, 0
        %p375 = scmp.lt.s32.totalorder %s372, 5
        %s376 = scalar_select %p375, %s372, 5
        %s377 = smul.addr %s376, 7
        %s378 = smul.addr %s374, 42
        %s379 = sadd.s32 %s377, %s378
        %s380 = smul.addr %s379, 4
        %s381 = scalar_lea.vmem %s1, %s380
        %p382 = pneg %p93
        %p383 = pneg %p90
        %s384 = sadd.s32 %s27, 2
        %p385 = scmp.lt.s32.totalorder %s26, 0
        %s386 = scalar_select %p385, %s26, 0
        %p387 = scmp.lt.s32.totalorder %s384, 5
        %s388 = scalar_select %p387, %s384, 5
        %s389 = smul.addr %s388, 7
        %s390 = smul.addr %s386, 42
        %s391 = sadd.s32 %s389, %s390
        %s392 = smul.addr %s391, 4
        %s393 = scalar_lea.vmem %s2, %s392
        %p394 = pneg %p123
        %p395 = pneg %p120
        %s396 = sadd.s32 %s27, 1
        %p397 = scmp.lt.s32.totalorder %s26, 0
        %s398 = scalar_select %p397, %s26, 0
        %p399 = scmp.lt.s32.totalorder %s396, 5
        %s400 = scalar_select %p399, %s396, 5
        %s401 = smul.addr %s400, 7
        %s402 = smul.addr %s398, 42
        %s403 = sadd.s32 %s401, %s402
        %s404 = smul.addr %s403, 4
        %s405 = scalar_lea.vmem %s3, %s404
        %p406 = pneg %p153
        %p407 = pneg %p150
        %p408 = scmp.lt.s32.totalorder %s28, 0
        %s409 = scalar_select %p408, %s28, 0
        %s410 = smul.addr %s409, 4
        %s411 = scalar_lea.vmem %s4, %s410
        %p412 = pneg %p179
        %p413 = pneg %p176
        %p414 = scmp.lt.s32.totalorder %s28, 0
        %s415 = scalar_select %p414, %s28, 0
        %s416 = scalar_lea.vmem %s5, %s415
        %p417 = pneg %p205
        %p418 = pneg %p202
        %p419 = scmp.lt.s32.totalorder %s28, 0
        %s420 = scalar_select %p419, %s28, 0
        %s421 = smul.addr %s420, 4
        %s422 = scalar_lea.vmem %s6, %s421
        %p423 = pneg %p231
        %p424 = pneg %p228
        %p425 = pneg %p261
        %p426 = pneg %p258
        %s427 = sand.u32 %s248, 1
        %s428 = scalar_lea.sflag [#allocation3], %s427
        %s429 = sand.u32 %s248, 1
        %s430 = smul.addr %s429, 16
        %s431 = scalar_lea.vmem [#allocation2], %s430
        %p432 = scmp.lt.s32.totalorder %s26, 0
        %s433 = scalar_select %p432, %s26, 0
        %p434 = scmp.lt.s32.totalorder %s27, 5
        %s435 = scalar_select %p434, %s27, 5
        %s436 = smul.addr %s435, 7
        %s437 = smul.addr %s433, 42
        %s438 = sadd.s32 %s436, %s437
        %s439 = smul.addr %s438, 4
        %s440 = scalar_lea.vmem %s0, %s439
        %s441 = sadd.s32 %s27, 1
        %p442 = scmp.lt.s32.totalorder %s26, 0
        %s443 = scalar_select %p442, %s26, 0
        %p444 = scmp.lt.s32.totalorder %s441, 5
        %s445 = scalar_select %p444, %s441, 5
        %s446 = smul.addr %s445, 7
        %s447 = smul.addr %s443, 42
        %s448 = sadd.s32 %s446, %s447
        %s449 = smul.addr %s448, 4
        %s450 = scalar_lea.vmem %s1, %s449
        %s451 = sadd.s32 %s27, 1
        %s452 = sadd.s32 %s27, 2
        %p453 = scmp.lt.s32.totalorder %s26, 0
        %s454 = scalar_select %p453, %s26, 0
        %p455 = scmp.lt.s32.totalorder %s452, 5
        %s456 = scalar_select %p455, %s452, 5
        %s457 = smul.addr %s456, 7
        %s458 = smul.addr %s454, 42
        %s459 = sadd.s32 %s457, %s458
        %s460 = smul.addr %s459, 4
        %s461 = scalar_lea.vmem %s2, %s460
        %s462 = sadd.s32 %s27, 2
        %s463 = sadd.s32 %s27, 1
        %p464 = scmp.lt.s32.totalorder %s26, 0
        %s465 = scalar_select %p464, %s26, 0
        %p466 = scmp.lt.s32.totalorder %s463, 5
        %s467 = scalar_select %p466, %s463, 5
        %s468 = smul.addr %s467, 7
        %s469 = smul.addr %s465, 42
        %s470 = sadd.s32 %s468, %s469
        %s471 = smul.addr %s470, 4
        %s472 = scalar_lea.vmem %s3, %s471
        %s473 = sadd.s32 %s27, 1
        %p474 = scmp.lt.s32.totalorder %s28, 0
        %s475 = scalar_select %p474, %s28, 0
        %s476 = smul.addr %s475, 4
        %s477 = scalar_lea.vmem %s4, %s476
        %p478 = scmp.lt.s32.totalorder %s28, 0
        %s479 = scalar_select %p478, %s28, 0
        %s480 = scalar_lea.vmem %s5, %s479
        %p481 = scmp.lt.s32.totalorder %s28, 0
        %s482 = scalar_select %p481, %s28, 0
        %s483 = smul.addr %s482, 4
        %s484 = scalar_lea.vmem %s6, %s483
        %v486 = vld [vmem:[%s440] sm:$0xf]
        %v487 = vld [vmem:[%s440 + $0x4] sm:$0xf]
        %v488 = vld [vmem:[%s440 + $0x8] sm:$0xf]
        %v489 = vld [vmem:[%s440 + $0xc] sm:$0xf]
        %v490 = vld [vmem:[%s477] sm:$0xf]
        %v491 = vld [vmem:[%s477 + $0x4] sm:$0xf]
        %v492 = vld [vmem:[%s440 + $0x10] sm:$0x1]
        %v493 = vld [vmem:[%s477 + $0x8] sm:$0xf]
        %v494 = vld [vmem:[%s477 + $0xc] sm:$0xf]
        %v500 = vunpack.c.l.b16 %v486
        %v501 = vunpack.c.l.b16 %v487
        %v502 = vunpack.c.l.b16 %v488
        %v503 = vunpack.c.l.b16 %v489
        %v504 = vunpack.c.l.b16 %v492
        %v505 = vpack.c.b16 %v501, %v500
        %v506 = vpack.c.b16 %v503, %v502
        %v507 = vpack.c.b16 %v504, %v504
        %vm508 = vsmask.f32 7424
        %v510 = vshrl.u32 %v505, 16
        %v512 = vshll.u32 %v505, 16
        %v514 = vrot.slane %v512, 1
        %v515 = vor.u32 %v510, %v514
        %v517 = vshll.u32 %v506, 16
        %v519 = vrot.slane %v517, 1
        %v520 = vsel %vm508, %v515, %v519
        %v521 = vshrl.u32 %v506, 16
        %v523 = vor.u32 %v521, %v519
        %v525 = vshll.u32 %v507, 16
        %v527 = vrot.slane %v525, 1
        %v528 = vsel %vm508, %v523, %v527
        %v531 = vunpack.c.l.b16 %v493
        %v532 = vunpack.c.l.b16 %v494
        %v533 = vpack.c.b16 %v532, %v531
        %vm535 = vcmask 130048
        %v537 = vsel %vm535, %v520, 0
        %v540 = vsel %vm535, %v528, 0
        %542 = vmatprep.subr.bf16.mxu0 0
        %543 = vmatpush1.bf16.msra.mxu0 %v533
        %544 = vmatprep.subr.bf16.mxu0 0
        %545 = vmatpush1.bf16.msra.mxu0 0
        %546 = vmatprep.subr.bf16.mxu0 0
        %547 = vmatpush1.bf16.msra.mxu0 0
        %548 = vmatprep.subr.bf16.mxu0 0
        %549 = vmatpush1.bf16.msra.mxu0 0
        %550 = vmatprep.subr.bf16.mxu0 0
        %551 = vmatpush1.bf16.msra.mxu0 0
        %552 = vmatprep.subr.bf16.mxu0 0
        %553 = vmatpush1.bf16.msra.mxu0 0
        %554 = vmatprep.subr.bf16.mxu0 0
        %555 = vmatpush1.bf16.msra.mxu0 0
        %556 = vmatprep.subr.bf16.mxu0 0
        %557 = vmatpush1.bf16.msra.mxu0 0
        %558 = vmatprep.subr.bf16.mxu0 0
        %559 = vmatpush1.bf16.msra.mxu0 0
        %560 = vmatprep.subr.bf16.mxu0 0
        %561 = vmatpush1.bf16.msra.mxu0 0
        %562 = vmatprep.subr.bf16.mxu0 0
        %563 = vmatpush1.bf16.msra.mxu0 0
        %564 = vmatprep.subr.bf16.mxu0 0
        %565 = vmatpush1.bf16.msra.mxu0 0
        %566 = vmatprep.subr.bf16.mxu0 0
        %567 = vmatpush1.bf16.msra.mxu0 0
        %568 = vmatprep.subr.bf16.mxu0 0
        %569 = vmatpush1.bf16.msra.mxu0 0
        %570 = vmatprep.subr.bf16.mxu0 0
        %571 = vmatpush1.bf16.msra.mxu0 0
        %572 = vmatprep.subr.bf16.mxu0 0
        %573 = vmatpush1.bf16.msra.mxu0 0
        %574 = vmatprep.mubr.bf16.mxu0 0
        %575 = vmatmul.mubr.bf16.gmra.mrb[0].mxu0 %v537
        %v576 = vpop.f32.mrb[0].mxu0
        %v577 = vadd.f32 0.0, %v576
        %v578 = vpop.f32.mrb[0].mxu0
        %v579 = vpop.f32.mrb[0].mxu0
        %v580 = vadd.f32 0.0, %v579
        %v581 = vpop.f32.mrb[0].mxu0
        %582 = vmatprep.mubr.bf16.mxu0 0
        %583 = vmatmul.mubr.bf16.gmra.mrb[0].mxu0 %v540
        %v584 = vpop.f32.mrb[0].mxu0
        %v585 = vadd.f32 0.0, %v584
        %v586 = vpop.f32.mrb[0].mxu0
        %v587 = vpop.f32.mrb[0].mxu0
        %v588 = vadd.f32 0.0, %v587
        %v589 = vpop.f32.mrb[0].mxu0
        %590 = vdwg.mxu0
        %v593 = vunpack.c.l.b16 %v490
        %v594 = vunpack.c.l.b16 %v491
        %v595 = vpack.c.b16 %v594, %v593
        %v597 = vsel %vm535, %v505, 0
        %v599 = vsel %vm535, %v506, 0
        %601 = vmatprep.subr.bf16.mxu0 0
        %602 = vmatpush1.bf16.msra.mxu0 %v595
        %603 = vmatprep.subr.bf16.mxu0 0
        %604 = vmatpush1.bf16.msra.mxu0 0
        %605 = vmatprep.subr.bf16.mxu0 0
        %606 = vmatpush1.bf16.msra.mxu0 0
        %607 = vmatprep.subr.bf16.mxu0 0
        %608 = vmatpush1.bf16.msra.mxu0 0
        %609 = vmatprep.subr.bf16.mxu0 0
        %610 = vmatpush1.bf16.msra.mxu0 0
        %611 = vmatprep.subr.bf16.mxu0 0
        %612 = vmatpush1.bf16.msra.mxu0 0
        %613 = vmatprep.subr.bf16.mxu0 0
        %614 = vmatpush1.bf16.msra.mxu0 0
        %615 = vmatprep.subr.bf16.mxu0 0
        %616 = vmatpush1.bf16.msra.mxu0 0
        %617 = vmatprep.subr.bf16.mxu0 0
        %618 = vmatpush1.bf16.msra.mxu0 0
        %619 = vmatprep.subr.bf16.mxu0 0
        %620 = vmatpush1.bf16.msra.mxu0 0
        %621 = vmatprep.subr.bf16.mxu0 0
        %622 = vmatpush1.bf16.msra.mxu0 0
        %623 = vmatprep.subr.bf16.mxu0 0
        %624 = vmatpush1.bf16.msra.mxu0 0
        %625 = vmatprep.subr.bf16.mxu0 0
        %626 = vmatpush1.bf16.msra.mxu0 0
        %627 = vmatprep.subr.bf16.mxu0 0
        %628 = vmatpush1.bf16.msra.mxu0 0
        %629 = vmatprep.subr.bf16.mxu0 0
        %630 = vmatpush1.bf16.msra.mxu0 0
        %631 = vmatprep.subr.bf16.mxu0 0
        %632 = vmatpush1.bf16.msra.mxu0 0
        %633 = vmatprep.mubr.bf16.mxu0 0
        %634 = vmatmul.mubr.bf16.gmra.mrb[0].mxu0 %v597
        %v635 = vpop.f32.mrb[0].mxu0
        %v636 = vadd.f32 %v577, %v635
        %v637 = vpop.f32.mrb[0].mxu0
        %v638 = vpop.f32.mrb[0].mxu0
        %v639 = vadd.f32 %v580, %v638
        %v640 = vpop.f32.mrb[0].mxu0
        %641 = vmatprep.mubr.bf16.mxu0 0
        %642 = vmatmul.mubr.bf16.gmra.mrb[0].mxu0 %v599
        %v643 = vpop.f32.mrb[0].mxu0
        %v644 = vadd.f32 %v585, %v643
        %v645 = vpop.f32.mrb[0].mxu0
        %v646 = vpop.f32.mrb[0].mxu0
        %v647 = vadd.f32 %v588, %v646
        %v648 = vpop.f32.mrb[0].mxu0
        %649 = vdwg.mxu0
        %v650 = vld [vmem:[%s440] sm:$0xe]
        %v651 = vld [vmem:[%s477 + $0x10] sm:$0xf]
        %v652 = vld [vmem:[%s477 + $0x14] sm:$0xf]
        %v654 = vunpack.c.l.b16 %v650
        %v655 = vpack.c.b16 %v501, %v654
        %vm656 = vcmask 1046528
        %v657 = vrot.slane %v655, 1
        %v658 = vrot.slane %v506, 1
        %v659 = vsel %vm656, %v657, %v658
        %v660 = vrot.slane %v507, 1
        %v661 = vsel %vm656, %v658, %v660
        %v664 = vunpack.c.l.b16 %v651
        %v665 = vunpack.c.l.b16 %v652
        %v666 = vpack.c.b16 %v665, %v664
        %v669 = vsel %vm535, %v659, 0
        %v672 = vsel %vm535, %v661, 0
        %674 = vmatprep.subr.bf16.mxu0 0
        %675 = vmatpush1.bf16.msra.mxu0 %v666
        %676 = vmatprep.subr.bf16.mxu0 0
        %677 = vmatpush1.bf16.msra.mxu0 0
        %678 = vmatprep.subr.bf16.mxu0 0
        %679 = vmatpush1.bf16.msra.mxu0 0
        %680 = vmatprep.subr.bf16.mxu0 0
        %681 = vmatpush1.bf16.msra.mxu0 0
        %682 = vmatprep.subr.bf16.mxu0 0
        %683 = vmatpush1.bf16.msra.mxu0 0
        %684 = vmatprep.subr.bf16.mxu0 0
        %685 = vmatpush1.bf16.msra.mxu0 0
        %686 = vmatprep.subr.bf16.mxu0 0
        %687 = vmatpush1.bf16.msra.mxu0 0
        %688 = vmatprep.subr.bf16.mxu0 0
        %689 = vmatpush1.bf16.msra.mxu0 0
        %690 = vmatprep.subr.bf16.mxu0 0
        %691 = vmatpush1.bf16.msra.mxu0 0
        %692 = vmatprep.subr.bf16.mxu0 0
        %693 = vmatpush1.bf16.msra.mxu0 0
        %694 = vmatprep.subr.bf16.mxu0 0
        %695 = vmatpush1.bf16.msra.mxu0 0
        %696 = vmatprep.subr.bf16.mxu0 0
        %697 = vmatpush1.bf16.msra.mxu0 0
        %698 = vmatprep.subr.bf16.mxu0 0
        %699 = vmatpush1.bf16.msra.mxu0 0
        %700 = vmatprep.subr.bf16.mxu0 0
        %701 = vmatpush1.bf16.msra.mxu0 0
        %702 = vmatprep.subr.bf16.mxu0 0
        %703 = vmatpush1.bf16.msra.mxu0 0
        %704 = vmatprep.subr.bf16.mxu0 0
        %705 = vmatpush1.bf16.msra.mxu0 0
        %706 = vmatprep.mubr.bf16.mxu0 0
        %707 = vmatmul.mubr.bf16.gmra.mrb[0].mxu0 %v669
        %v708 = vpop.f32.mrb[0].mxu0
        %v709 = vadd.f32 0.0, %v708
        %v710 = vpop.f32.mrb[0].mxu0
        %v711 = vpop.f32.mrb[0].mxu0
        %v712 = vadd.f32 0.0, %v711
        %v713 = vpop.f32.mrb[0].mxu0
        %714 = vmatprep.mubr.bf16.mxu0 0
        %715 = vmatmul.mubr.bf16.gmra.mrb[0].mxu0 %v672
        %v716 = vpop.f32.mrb[0].mxu0
        %v717 = vadd.f32 0.0, %v716
        %v718 = vpop.f32.mrb[0].mxu0
        %v719 = vpop.f32.mrb[0].mxu0
        %v720 = vadd.f32 0.0, %v719
        %v721 = vpop.f32.mrb[0].mxu0
        %722 = vdwg.mxu0
        %v723 = vadd.f32 %v636, %v709
        %v724 = vadd.f32 %v639, %v712
        %v725 = vadd.f32 %v644, %v717
        %v726 = vadd.f32 %v647, %v720
        %v727 = vld [vmem:[%s440 + $0x10] sm:$0xf]
        %v728 = vld [vmem:[%s477 + $0x18] sm:$0xf]
        %v729 = vld [vmem:[%s477 + $0x1c] sm:$0xf]
        %v731 = vunpack.c.l.b16 %v727
        %v732 = vpack.c.b16 %v502, %v501
        %v733 = vpack.c.b16 %v731, %v503
        %v736 = vunpack.c.l.b16 %v728
        %v737 = vunpack.c.l.b16 %v729
        %v738 = vpack.c.b16 %v737, %v736
        %v741 = vsel %vm535, %v732, 0
        %v744 = vsel %vm535, %v733, 0
        %746 = vmatprep.subr.bf16.mxu0 0
        %747 = vmatpush1.bf16.msra.mxu0 %v738
        %748 = vmatprep.subr.bf16.mxu0 0
        %749 = vmatpush1.bf16.msra.mxu0 0
        %750 = vmatprep.subr.bf16.mxu0 0
        %751 = vmatpush1.bf16.msra.mxu0 0
        %752 = vmatprep.subr.bf16.mxu0 0
        %753 = vmatpush1.bf16.msra.mxu0 0
        %754 = vmatprep.subr.bf16.mxu0 0
        %755 = vmatpush1.bf16.msra.mxu0 0
        %756 = vmatprep.subr.bf16.mxu0 0
        %757 = vmatpush1.bf16.msra.mxu0 0
        %758 = vmatprep.subr.bf16.mxu0 0
        %759 = vmatpush1.bf16.msra.mxu0 0
        %760 = vmatprep.subr.bf16.mxu0 0
        %761 = vmatpush1.bf16.msra.mxu0 0
        %762 = vmatprep.subr.bf16.mxu0 0
        %763 = vmatpush1.bf16.msra.mxu0 0
        %764 = vmatprep.subr.bf16.mxu0 0
        %765 = vmatpush1.bf16.msra.mxu0 0
        %766 = vmatprep.subr.bf16.mxu0 0
        %767 = vmatpush1.bf16.msra.mxu0 0
        %768 = vmatprep.subr.bf16.mxu0 0
        %769 = vmatpush1.bf16.msra.mxu0 0
        %770 = vmatprep.subr.bf16.mxu0 0
        %771 = vmatpush1.bf16.msra.mxu0 0
        %772 = vmatprep.subr.bf16.mxu0 0
        %773 = vmatpush1.bf16.msra.mxu0 0
        %774 = vmatprep.subr.bf16.mxu0 0
        %775 = vmatpush1.bf16.msra.mxu0 0
        %776 = vmatprep.subr.bf16.mxu0 0
        %777 = vmatpush1.bf16.msra.mxu0 0
        %778 = vmatprep.mubr.bf16.mxu0 0
        %779 = vmatmul.mubr.bf16.gmra.mrb[0].mxu0 %v741
        %v780 = vpop.f32.mrb[0].mxu0
        %v781 = vadd.f32 0.0, %v780
        %v782 = vpop.f32.mrb[0].mxu0
        %v783 = vpop.f32.mrb[0].mxu0
        %v784 = vadd.f32 0.0, %v783
        %v785 = vpop.f32.mrb[0].mxu0
        %786 = vmatprep.mubr.bf16.mxu0 0
        %787 = vmatmul.mubr.bf16.gmra.mrb[0].mxu0 %v744
        %v788 = vpop.f32.mrb[0].mxu0
        %v789 = vadd.f32 0.0, %v788
        %v790 = vpop.f32.mrb[0].mxu0
        %v791 = vpop.f32.mrb[0].mxu0
        %v792 = vadd.f32 0.0, %v791
        %v793 = vpop.f32.mrb[0].mxu0
        %794 = vdwg.mxu0
        %v795 = vadd.f32 %v723, %v781
        %v796 = vadd.f32 %v724, %v784
        %v797 = vadd.f32 %v725, %v789
        %v798 = vadd.f32 %v726, %v792
        %v799 = vld [vmem:[%s440 + $0x4] sm:$0xf]
        %v800 = vld [vmem:[%s440 + $0x8] sm:$0xf]
        %v801 = vld [vmem:[%s440 + $0xc] sm:$0xf]
        %v802 = vld [vmem:[%s440 + $0x10] sm:$0xf]
        %v803 = vld [vmem:[%s440 + $0x14] sm:$0x1]
        %v804 = vld [vmem:[%s477 + $0x20] sm:$0xf]
        %v805 = vld [vmem:[%s477 + $0x24] sm:$0xf]
        %v811 = vunpack.c.l.b16 %v799
        %v812 = vunpack.c.l.b16 %v800
        %v813 = vunpack.c.l.b16 %v801
        %v814 = vunpack.c.l.b16 %v802
        %v815 = vunpack.c.l.b16 %v803
        %v816 = vpack.c.b16 %v812, %v811
        %v817 = vpack.c.b16 %v814, %v813
        %v818 = vpack.c.b16 %v815, %v815
        %v820 = vshrl.u32 %v816, 16
        %v822 = vshll.u32 %v816, 16
        %v824 = vrot.slane %v822, 1
        %v825 = vor.u32 %v820, %v824
        %v827 = vshll.u32 %v817, 16
        %v829 = vrot.slane %v827, 1
        %v830 = vsel %vm508, %v825, %v829
        %v831 = vshrl.u32 %v817, 16
        %v833 = vor.u32 %v831, %v829
        %v835 = vshll.u32 %v818, 16
        %v837 = vrot.slane %v835, 1
        %v838 = vsel %vm508, %v833, %v837
        %v841 = vunpack.c.l.b16 %v804
        %v842 = vunpack.c.l.b16 %v805
        %v843 = vpack.c.b16 %v842, %v841
        %v846 = vsel %vm535, %v830, 0
        %v849 = vsel %vm535, %v838, 0
        %851 = vmatprep.subr.bf16.mxu0 0
        %852 = vmatpush1.bf16.msra.mxu0 %v843
        %853 = vmatprep.subr.bf16.mxu0 0
        %854 = vmatpush1.bf16.msra.mxu0 0
        %855 = vmatprep.subr.bf16.mxu0 0
        %856 = vmatpush1.bf16.msra.mxu0 0
        %857 = vmatprep.subr.bf16.mxu0 0
        %858 = vmatpush1.bf16.msra.mxu0 0
        %859 = vmatprep.subr.bf16.mxu0 0
        %860 = vmatpush1.bf16.msra.mxu0 0
        %861 = vmatprep.subr.bf16.mxu0 0
        %862 = vmatpush1.bf16.msra.mxu0 0
        %863 = vmatprep.subr.bf16.mxu0 0
        %864 = vmatpush1.bf16.msra.mxu0 0
        %865 = vmatprep.subr.bf16.mxu0 0
        %866 = vmatpush1.bf16.msra.mxu0 0
        %867 = vmatprep.subr.bf16.mxu0 0
        %868 = vmatpush1.bf16.msra.mxu0 0
        %869 = vmatprep.subr.bf16.mxu0 0
        %870 = vmatpush1.bf16.msra.mxu0 0
        %871 = vmatprep.subr.bf16.mxu0 0
        %872 = vmatpush1.bf16.msra.mxu0 0
        %873 = vmatprep.subr.bf16.mxu0 0
        %874 = vmatpush1.bf16.msra.mxu0 0
        %875 = vmatprep.subr.bf16.mxu0 0
        %876 = vmatpush1.bf16.msra.mxu0 0
        %877 = vmatprep.subr.bf16.mxu0 0
        %878 = vmatpush1.bf16.msra.mxu0 0
        %879 = vmatprep.subr.bf16.mxu0 0
        %880 = vmatpush1.bf16.msra.mxu0 0
        %881 = vmatprep.subr.bf16.mxu0 0
        %882 = vmatpush1.bf16.msra.mxu0 0
        %883 = vmatprep.mubr.bf16.mxu0 0
        %884 = vmatmul.mubr.bf16.gmra.mrb[0].mxu0 %v846
        %v885 = vpop.f32.mrb[0].mxu0
        %v886 = vadd.f32 0.0, %v885
        %v887 = vpop.f32.mrb[0].mxu0
        %v888 = vpop.f32.mrb[0].mxu0
        %v889 = vadd.f32 0.0, %v888
        %v890 = vpop.f32.mrb[0].mxu0
        %891 = vmatprep.mubr.bf16.mxu0 0
        %892 = vmatmul.mubr.bf16.gmra.mrb[0].mxu0 %v849
        %v893 = vpop.f32.mrb[0].mxu0
        %v894 = vadd.f32 0.0, %v893
        %v895 = vpop.f32.mrb[0].mxu0
        %v896 = vpop.f32.mrb[0].mxu0
        %v897 = vadd.f32 0.0, %v896
        %v898 = vpop.f32.mrb[0].mxu0
        %899 = vdwg.mxu0
        %v900 = vadd.f32 %v795, %v886
        %v901 = vadd.f32 %v796, %v889
        %v902 = vadd.f32 %v797, %v894
        %v903 = vadd.f32 %v798, %v897
        %v904 = vld [vmem:[%s440 + $0x4] sm:$0xe]
        %v905 = vld [vmem:[%s477 + $0x28] sm:$0xf]
        %v906 = vld [vmem:[%s477 + $0x2c] sm:$0xf]
        %v908 = vunpack.c.l.b16 %v904
        %v909 = vpack.c.b16 %v812, %v908
        %v910 = vrot.slane %v909, 1
        %v911 = vrot.slane %v817, 1
        %v912 = vsel %vm656, %v910, %v911
        %v913 = vrot.slane %v818, 1
        %v914 = vsel %vm656, %v911, %v913
        %v917 = vunpack.c.l.b16 %v905
        %v918 = vunpack.c.l.b16 %v906
        %v919 = vpack.c.b16 %v918, %v917
        %v922 = vsel %vm535, %v912, 0
        %v925 = vsel %vm535, %v914, 0
        %927 = vmatprep.subr.bf16.mxu0 0
        %928 = vmatpush1.bf16.msra.mxu0 %v919
        %929 = vmatprep.subr.bf16.mxu0 0
        %930 = vmatpush1.bf16.msra.mxu0 0
        %931 = vmatprep.subr.bf16.mxu0 0
        %932 = vmatpush1.bf16.msra.mxu0 0
        %933 = vmatprep.subr.bf16.mxu0 0
        %934 = vmatpush1.bf16.msra.mxu0 0
        %935 = vmatprep.subr.bf16.mxu0 0
        %936 = vmatpush1.bf16.msra.mxu0 0
        %937 = vmatprep.subr.bf16.mxu0 0
        %938 = vmatpush1.bf16.msra.mxu0 0
        %939 = vmatprep.subr.bf16.mxu0 0
        %940 = vmatpush1.bf16.msra.mxu0 0
        %941 = vmatprep.subr.bf16.mxu0 0
        %942 = vmatpush1.bf16.msra.mxu0 0
        %943 = vmatprep.subr.bf16.mxu0 0
        %944 = vmatpush1.bf16.msra.mxu0 0
        %945 = vmatprep.subr.bf16.mxu0 0
        %946 = vmatpush1.bf16.msra.mxu0 0
        %947 = vmatprep.subr.bf16.mxu0 0
        %948 = vmatpush1.bf16.msra.mxu0 0
        %949 = vmatprep.subr.bf16.mxu0 0
        %950 = vmatpush1.bf16.msra.mxu0 0
        %951 = vmatprep.subr.bf16.mxu0 0
        %952 = vmatpush1.bf16.msra.mxu0 0
        %953 = vmatprep.subr.bf16.mxu0 0
        %954 = vmatpush1.bf16.msra.mxu0 0
        %955 = vmatprep.subr.bf16.mxu0 0
        %956 = vmatpush1.bf16.msra.mxu0 0
        %957 = vmatprep.subr.bf16.mxu0 0
        %958 = vmatpush1.bf16.msra.mxu0 0
        %959 = vmatprep.mubr.bf16.mxu0 0
        %960 = vmatmul.mubr.bf16.gmra.mrb[0].mxu0 %v922
        %v961 = vpop.f32.mrb[0].mxu0
        %v962 = vadd.f32 0.0, %v961
        %v963 = vpop.f32.mrb[0].mxu0
        %v964 = vpop.f32.mrb[0].mxu0
        %v965 = vadd.f32 0.0, %v964
        %v966 = vpop.f32.mrb[0].mxu0
        %967 = vmatprep.mubr.bf16.mxu0 0
        %968 = vmatmul.mubr.bf16.gmra.mrb[0].mxu0 %v925
        %v969 = vpop.f32.mrb[0].mxu0
        %v970 = vadd.f32 0.0, %v969
        %v971 = vpop.f32.mrb[0].mxu0
        %v972 = vpop.f32.mrb[0].mxu0
        %v973 = vadd.f32 0.0, %v972
        %v974 = vpop.f32.mrb[0].mxu0
        %975 = vdwg.mxu0
        %v976 = vadd.f32 %v900, %v962
        %v977 = vadd.f32 %v901, %v965
        %v978 = vadd.f32 %v902, %v970
        %v979 = vadd.f32 %v903, %v973
        %v980 = vld [vmem:[%s440 + $0x14] sm:$0xf]
        %v981 = vld [vmem:[%s477 + $0x30] sm:$0xf]
        %v982 = vld [vmem:[%s477 + $0x34] sm:$0xf]
        %v984 = vunpack.c.l.b16 %v980
        %v985 = vpack.c.b16 %v813, %v812
        %v986 = vpack.c.b16 %v984, %v814
        %v989 = vunpack.c.l.b16 %v981
        %v990 = vunpack.c.l.b16 %v982
        %v991 = vpack.c.b16 %v990, %v989
        %v994 = vsel %vm535, %v985, 0
        %v997 = vsel %vm535, %v986, 0
        %999 = vmatprep.subr.bf16.mxu0 0
        %1000 = vmatpush1.bf16.msra.mxu0 %v991
        %1001 = vmatprep.subr.bf16.mxu0 0
        %1002 = vmatpush1.bf16.msra.mxu0 0
        %1003 = vmatprep.subr.bf16.mxu0 0
        %1004 = vmatpush1.bf16.msra.mxu0 0
        %1005 = vmatprep.subr.bf16.mxu0 0
        %1006 = vmatpush1.bf16.msra.mxu0 0
        %1007 = vmatprep.subr.bf16.mxu0 0
        %1008 = vmatpush1.bf16.msra.mxu0 0
        %1009 = vmatprep.subr.bf16.mxu0 0
        %1010 = vmatpush1.bf16.msra.mxu0 0
        %1011 = vmatprep.subr.bf16.mxu0 0
        %1012 = vmatpush1.bf16.msra.mxu0 0
        %1013 = vmatprep.subr.bf16.mxu0 0
        %1014 = vmatpush1.bf16.msra.mxu0 0
        %1015 = vmatprep.subr.bf16.mxu0 0
        %1016 = vmatpush1.bf16.msra.mxu0 0
        %1017 = vmatprep.subr.bf16.mxu0 0
        %1018 = vmatpush1.bf16.msra.mxu0 0
        %1019 = vmatprep.subr.bf16.mxu0 0
        %1020 = vmatpush1.bf16.msra.mxu0 0
        %1021 = vmatprep.subr.bf16.mxu0 0
        %1022 = vmatpush1.bf16.msra.mxu0 0
        %1023 = vmatprep.subr.bf16.mxu0 0
        %1024 = vmatpush1.bf16.msra.mxu0 0
        %1025 = vmatprep.subr.bf16.mxu0 0
        %1026 = vmatpush1.bf16.msra.mxu0 0
        %1027 = vmatprep.subr.bf16.mxu0 0
        %1028 = vmatpush1.bf16.msra.mxu0 0
        %1029 = vmatprep.subr.bf16.mxu0 0
        %1030 = vmatpush1.bf16.msra.mxu0 0
        %1031 = vmatprep.mubr.bf16.mxu0 0
        %1032 = vmatmul.mubr.bf16.gmra.mrb[0].mxu0 %v994
        %v1033 = vpop.f32.mrb[0].mxu0
        %v1034 = vadd.f32 0.0, %v1033
        %v1035 = vpop.f32.mrb[0].mxu0
        %v1036 = vpop.f32.mrb[0].mxu0
        %v1037 = vadd.f32 0.0, %v1036
        %v1038 = vpop.f32.mrb[0].mxu0
        %1039 = vmatprep.mubr.bf16.mxu0 0
        %1040 = vmatmul.mubr.bf16.gmra.mrb[0].mxu0 %v997
        %v1041 = vpop.f32.mrb[0].mxu0
        %v1042 = vadd.f32 0.0, %v1041
        %v1043 = vpop.f32.mrb[0].mxu0
        %v1044 = vpop.f32.mrb[0].mxu0
        %v1045 = vadd.f32 0.0, %v1044
        %v1046 = vpop.f32.mrb[0].mxu0
        %1047 = vdwg.mxu0
        %v1048 = vadd.f32 %v976, %v1034
        %v1049 = vadd.f32 %v977, %v1037
        %v1050 = vadd.f32 %v978, %v1042
        %v1051 = vadd.f32 %v979, %v1045
        %v1052 = vld [vmem:[%s440 + $0x8] sm:$0xf]
        %v1053 = vld [vmem:[%s440 + $0xc] sm:$0xf]
        %v1054 = vld [vmem:[%s440 + $0x10] sm:$0xf]
        %v1055 = vld [vmem:[%s440 + $0x14] sm:$0xf]
        %v1056 = vld [vmem:[%s440 + $0x18] sm:$0x1]
        %v1057 = vld [vmem:[%s477 + $0x38] sm:$0xf]
        %v1058 = vld [vmem:[%s477 + $0x3c] sm:$0xf]
        %v1064 = vunpack.c.l.b16 %v1052
        %v1065 = vunpack.c.l.b16 %v1053
        %v1066 = vunpack.c.l.b16 %v1054
        %v1067 = vunpack.c.l.b16 %v1055
        %v1068 = vunpack.c.l.b16 %v1056
        %v1069 = vpack.c.b16 %v1065, %v1064
        %v1070 = vpack.c.b16 %v1067, %v1066
        %v1071 = vpack.c.b16 %v1068, %v1068
        %v1073 = vshrl.u32 %v1069, 16
        %v1075 = vshll.u32 %v1069, 16
        %v1077 = vrot.slane %v1075, 1
        %v1078 = vor.u32 %v1073, %v1077
        %v1080 = vshll.u32 %v1070, 16
        %v1082 = vrot.slane %v1080, 1
        %v1083 = vsel %vm508, %v1078, %v1082
        %v1084 = vshrl.u32 %v1070, 16
        %v1086 = vor.u32 %v1084, %v1082
        %v1088 = vshll.u32 %v1071, 16
        %v1090 = vrot.slane %v1088, 1
        %v1091 = vsel %vm508, %v1086, %v1090
        %v1094 = vunpack.c.l.b16 %v1057
        %v1095 = vunpack.c.l.b16 %v1058
        %v1096 = vpack.c.b16 %v1095, %v1094
        %v1099 = vsel %vm535, %v1083, 0
        %v1102 = vsel %vm535, %v1091, 0
        %1104 = vmatprep.subr.bf16.mxu0 0
        %1105 = vmatpush1.bf16.msra.mxu0 %v1096
        %1106 = vmatprep.subr.bf16.mxu0 0
        %1107 = vmatpush1.bf16.msra.mxu0 0
        %1108 = vmatprep.subr.bf16.mxu0 0
        %1109 = vmatpush1.bf16.msra.mxu0 0
        %1110 = vmatprep.subr.bf16.mxu0 0
        %1111 = vmatpush1.bf16.msra.mxu0 0
        %1112 = vmatprep.subr.bf16.mxu0 0
        %1113 = vmatpush1.bf16.msra.mxu0 0
        %1114 = vmatprep.subr.bf16.mxu0 0
        %1115 = vmatpush1.bf16.msra.mxu0 0
        %1116 = vmatprep.subr.bf16.mxu0 0
        %1117 = vmatpush1.bf16.msra.mxu0 0
        %1118 = vmatprep.subr.bf16.mxu0 0
        %1119 = vmatpush1.bf16.msra.mxu0 0
        %1120 = vmatprep.subr.bf16.mxu0 0
        %1121 = vmatpush1.bf16.msra.mxu0 0
        %1122 = vmatprep.subr.bf16.mxu0 0
        %1123 = vmatpush1.bf16.msra.mxu0 0
        %1124 = vmatprep.subr.bf16.mxu0 0
        %1125 = vmatpush1.bf16.msra.mxu0 0
        %1126 = vmatprep.subr.bf16.mxu0 0
        %1127 = vmatpush1.bf16.msra.mxu0 0
        %1128 = vmatprep.subr.bf16.mxu0 0
        %1129 = vmatpush1.bf16.msra.mxu0 0
        %1130 = vmatprep.subr.bf16.mxu0 0
        %1131 = vmatpush1.bf16.msra.mxu0 0
        %1132 = vmatprep.subr.bf16.mxu0 0
        %1133 = vmatpush1.bf16.msra.mxu0 0
        %1134 = vmatprep.subr.bf16.mxu0 0
        %1135 = vmatpush1.bf16.msra.mxu0 0
        %1136 = vmatprep.mubr.bf16.mxu0 0
        %1137 = vmatmul.mubr.bf16.gmra.mrb[0].mxu0 %v1099
        %v1138 = vpop.f32.mrb[0].mxu0
        %v1139 = vadd.f32 0.0, %v1138
        %v1140 = vpop.f32.mrb[0].mxu0
        %v1141 = vpop.f32.mrb[0].mxu0
        %v1142 = vadd.f32 0.0, %v1141
        %v1143 = vpop.f32.mrb[0].mxu0
        %1144 = vmatprep.mubr.bf16.mxu0 0
        %1145 = vmatmul.mubr.bf16.gmra.mrb[0].mxu0 %v1102
        %v1146 = vpop.f32.mrb[0].mxu0
        %v1147 = vadd.f32 0.0, %v1146
        %v1148 = vpop.f32.mrb[0].mxu0
        %v1149 = vpop.f32.mrb[0].mxu0
        %v1150 = vadd.f32 0.0, %v1149
        %v1151 = vpop.f32.mrb[0].mxu0
        %1152 = vdwg.mxu0
        %v1153 = vadd.f32 %v1048, %v1139
        %v1154 = vadd.f32 %v1049, %v1142
        %v1155 = vadd.f32 %v1050, %v1147
        %v1156 = vadd.f32 %v1051, %v1150
        %v1157 = vld [vmem:[%s440 + $0x8] sm:$0xe]
        %v1158 = vld [vmem:[%s477 + $0x40] sm:$0xf]
        %v1159 = vld [vmem:[%s477 + $0x44] sm:$0xf]
        %v1161 = vunpack.c.l.b16 %v1157
        %v1162 = vpack.c.b16 %v1065, %v1161
        %v1163 = vrot.slane %v1162, 1
        %v1164 = vrot.slane %v1070, 1
        %v1165 = vsel %vm656, %v1163, %v1164
        %v1166 = vrot.slane %v1071, 1
        %v1167 = vsel %vm656, %v1164, %v1166
        %v1170 = vunpack.c.l.b16 %v1158
        %v1171 = vunpack.c.l.b16 %v1159
        %v1172 = vpack.c.b16 %v1171, %v1170
        %v1175 = vsel %vm535, %v1165, 0
        %v1178 = vsel %vm535, %v1167, 0
        %1180 = vmatprep.subr.bf16.mxu0 0
        %1181 = vmatpush1.bf16.msra.mxu0 %v1172
        %1182 = vmatprep.subr.bf16.mxu0 0
        %1183 = vmatpush1.bf16.msra.mxu0 0
        %1184 = vmatprep.subr.bf16.mxu0 0
        %1185 = vmatpush1.bf16.msra.mxu0 0
        %1186 = vmatprep.subr.bf16.mxu0 0
        %1187 = vmatpush1.bf16.msra.mxu0 0
        %1188 = vmatprep.subr.bf16.mxu0 0
        %1189 = vmatpush1.bf16.msra.mxu0 0
        %1190 = vmatprep.subr.bf16.mxu0 0
        %1191 = vmatpush1.bf16.msra.mxu0 0
        %1192 = vmatprep.subr.bf16.mxu0 0
        %1193 = vmatpush1.bf16.msra.mxu0 0
        %1194 = vmatprep.subr.bf16.mxu0 0
        %1195 = vmatpush1.bf16.msra.mxu0 0
        %1196 = vmatprep.subr.bf16.mxu0 0
        %1197 = vmatpush1.bf16.msra.mxu0 0
        %1198 = vmatprep.subr.bf16.mxu0 0
        %1199 = vmatpush1.bf16.msra.mxu0 0
        %1200 = vmatprep.subr.bf16.mxu0 0
        %1201 = vmatpush1.bf16.msra.mxu0 0
        %1202 = vmatprep.subr.bf16.mxu0 0
        %1203 = vmatpush1.bf16.msra.mxu0 0
        %1204 = vmatprep.subr.bf16.mxu0 0
        %1205 = vmatpush1.bf16.msra.mxu0 0
        %1206 = vmatprep.subr.bf16.mxu0 0
        %1207 = vmatpush1.bf16.msra.mxu0 0
        %1208 = vmatprep.subr.bf16.mxu0 0
        %1209 = vmatpush1.bf16.msra.mxu0 0
        %1210 = vmatprep.subr.bf16.mxu0 0
        %1211 = vmatpush1.bf16.msra.mxu0 0
        %1212 = vmatprep.mubr.bf16.mxu0 0
        %1213 = vmatmul.mubr.bf16.gmra.mrb[0].mxu0 %v1175
        %v1214 = vpop.f32.mrb[0].mxu0
        %v1215 = vadd.f32 0.0, %v1214
        %v1216 = vpop.f32.mrb[0].mxu0
        %v1217 = vpop.f32.mrb[0].mxu0
        %v1218 = vadd.f32 0.0, %v1217
        %v1219 = vpop.f32.mrb[0].mxu0
        %1220 = vmatprep.mubr.bf16.mxu0 0
        %1221 = vmatmul.mubr.bf16.gmra.mrb[0].mxu0 %v1178
        %v1222 = vpop.f32.mrb[0].mxu0
        %v1223 = vadd.f32 0.0, %v1222
        %v1224 = vpop.f32.mrb[0].mxu0
        %v1225 = vpop.f32.mrb[0].mxu0
        %v1226 = vadd.f32 0.0, %v1225
        %v1227 = vpop.f32.mrb[0].mxu0
        %1228 = vdwg.mxu0
        %v1229 = vadd.f32 %v1153, %v1215
        %v1230 = vadd.f32 %v1154, %v1218
        %v1231 = vadd.f32 %v1155, %v1223
        %v1232 = vadd.f32 %v1156, %v1226
        %v1233 = vld [vmem:[%s450] sm:$0xf]
        %v1234 = vld [vmem:[%s450 + $0x4] sm:$0xf]
        %v1235 = vld [vmem:[%s450 + $0x8] sm:$0xf]
        %v1236 = vld [vmem:[%s450 + $0xc] sm:$0xf]
        %v1237 = vld [vmem:[%s477 + $0x48] sm:$0xf]
        %v1238 = vld [vmem:[%s477 + $0x4c] sm:$0xf]
        %v1243 = vunpack.c.l.b16 %v1233
        %v1244 = vunpack.c.l.b16 %v1234
        %v1245 = vunpack.c.l.b16 %v1235
        %v1246 = vunpack.c.l.b16 %v1236
        %v1247 = vpack.c.b16 %v1244, %v1243
        %v1248 = vpack.c.b16 %v1246, %v1245
        %v1251 = vunpack.c.l.b16 %v1237
        %v1252 = vunpack.c.l.b16 %v1238
        %v1253 = vpack.c.b16 %v1252, %v1251
        %v1256 = vsel %vm535, %v1247, 0
        %v1259 = vsel %vm535, %v1248, 0
        %1261 = vmatprep.subr.bf16.mxu0 0
        %1262 = vmatpush1.bf16.msra.mxu0 %v1253
        %1263 = vmatprep.subr.bf16.mxu0 0
        %1264 = vmatpush1.bf16.msra.mxu0 0
        %1265 = vmatprep.subr.bf16.mxu0 0
        %1266 = vmatpush1.bf16.msra.mxu0 0
        %1267 = vmatprep.subr.bf16.mxu0 0
        %1268 = vmatpush1.bf16.msra.mxu0 0
        %1269 = vmatprep.subr.bf16.mxu0 0
        %1270 = vmatpush1.bf16.msra.mxu0 0
        %1271 = vmatprep.subr.bf16.mxu0 0
        %1272 = vmatpush1.bf16.msra.mxu0 0
        %1273 = vmatprep.subr.bf16.mxu0 0
        %1274 = vmatpush1.bf16.msra.mxu0 0
        %1275 = vmatprep.subr.bf16.mxu0 0
        %1276 = vmatpush1.bf16.msra.mxu0 0
        %1277 = vmatprep.subr.bf16.mxu0 0
        %1278 = vmatpush1.bf16.msra.mxu0 0
        %1279 = vmatprep.subr.bf16.mxu0 0
        %1280 = vmatpush1.bf16.msra.mxu0 0
        %1281 = vmatprep.subr.bf16.mxu0 0
        %1282 = vmatpush1.bf16.msra.mxu0 0
        %1283 = vmatprep.subr.bf16.mxu0 0
        %1284 = vmatpush1.bf16.msra.mxu0 0
        %1285 = vmatprep.subr.bf16.mxu0 0
        %1286 = vmatpush1.bf16.msra.mxu0 0
        %1287 = vmatprep.subr.bf16.mxu0 0
        %1288 = vmatpush1.bf16.msra.mxu0 0
        %1289 = vmatprep.subr.bf16.mxu0 0
        %1290 = vmatpush1.bf16.msra.mxu0 0
        %1291 = vmatprep.subr.bf16.mxu0 0
        %1292 = vmatpush1.bf16.msra.mxu0 0
        %1293 = vmatprep.mubr.bf16.mxu0 0
        %1294 = vmatmul.mubr.bf16.gmra.mrb[0].mxu0 %v1256
        %v1295 = vpop.f32.mrb[0].mxu0
        %v1296 = vadd.f32 0.0, %v1295
        %v1297 = vpop.f32.mrb[0].mxu0
        %v1298 = vpop.f32.mrb[0].mxu0
        %v1299 = vadd.f32 0.0, %v1298
        %v1300 = vpop.f32.mrb[0].mxu0
        %1301 = vmatprep.mubr.bf16.mxu0 0
        %1302 = vmatmul.mubr.bf16.gmra.mrb[0].mxu0 %v1259
        %v1303 = vpop.f32.mrb[0].mxu0
        %v1304 = vadd.f32 0.0, %v1303
        %v1305 = vpop.f32.mrb[0].mxu0
        %v1306 = vpop.f32.mrb[0].mxu0
        %v1307 = vadd.f32 0.0, %v1306
        %v1308 = vpop.f32.mrb[0].mxu0
        %1309 = vdwg.mxu0
        %v1310 = vadd.f32 %v1229, %v1296
        %v1311 = vadd.f32 %v1230, %v1299
        %v1312 = vadd.f32 %v1231, %v1304
        %v1313 = vadd.f32 %v1232, %v1307
        %v1314 = vld [vmem:[%s450] sm:$0xf]
        %v1315 = vld [vmem:[%s450 + $0x4] sm:$0xf]
        %v1316 = vld [vmem:[%s450 + $0x8] sm:$0xf]
        %v1317 = vld [vmem:[%s450 + $0xc] sm:$0xf]
        %v1318 = vld [vmem:[%s450 + $0x10] sm:$0x1]
        %v1319 = vld [vmem:[%s477 + $0x50] sm:$0xf]
        %v1320 = vld [vmem:[%s477 + $0x54] sm:$0xf]
        %v1326 = vunpack.c.l.b16 %v1314
        %v1327 = vunpack.c.l.b16 %v1315
        %v1328 = vunpack.c.l.b16 %v1316
        %v1329 = vunpack.c.l.b16 %v1317
        %v1330 = vunpack.c.l.b16 %v1318
        %v1331 = vpack.c.b16 %v1327, %v1326
        %v1332 = vpack.c.b16 %v1329, %v1328
        %v1333 = vpack.c.b16 %v1330, %v1330
        %v1335 = vshrl.u32 %v1331, 16
        %v1337 = vshll.u32 %v1331, 16
        %v1339 = vrot.slane %v1337, 1
        %v1340 = vor.u32 %v1335, %v1339
        %v1342 = vshll.u32 %v1332, 16
        %v1344 = vrot.slane %v1342, 1
        %v1345 = vsel %vm508, %v1340, %v1344
        %v1346 = vshrl.u32 %v1332, 16
        %v1348 = vor.u32 %v1346, %v1344
        %v1350 = vshll.u32 %v1333, 16
        %v1352 = vrot.slane %v1350, 1
        %v1353 = vsel %vm508, %v1348, %v1352
        %v1356 = vunpack.c.l.b16 %v1319
        %v1357 = vunpack.c.l.b16 %v1320
        %v1358 = vpack.c.b16 %v1357, %v1356
        %v1361 = vsel %vm535, %v1345, 0
        %v1364 = vsel %vm535, %v1353, 0
        %1366 = vmatprep.subr.bf16.mxu0 0
        %1367 = vmatpush1.bf16.msra.mxu0 %v1358
        %1368 = vmatprep.subr.bf16.mxu0 0
        %1369 = vmatpush1.bf16.msra.mxu0 0
        %1370 = vmatprep.subr.bf16.mxu0 0
        %1371 = vmatpush1.bf16.msra.mxu0 0
        %1372 = vmatprep.subr.bf16.mxu0 0
        %1373 = vmatpush1.bf16.msra.mxu0 0
        %1374 = vmatprep.subr.bf16.mxu0 0
        %1375 = vmatpush1.bf16.msra.mxu0 0
        %1376 = vmatprep.subr.bf16.mxu0 0
        %1377 = vmatpush1.bf16.msra.mxu0 0
        %1378 = vmatprep.subr.bf16.mxu0 0
        %1379 = vmatpush1.bf16.msra.mxu0 0
        %1380 = vmatprep.subr.bf16.mxu0 0
        %1381 = vmatpush1.bf16.msra.mxu0 0
        %1382 = vmatprep.subr.bf16.mxu0 0
        %1383 = vmatpush1.bf16.msra.mxu0 0
        %1384 = vmatprep.subr.bf16.mxu0 0
        %1385 = vmatpush1.bf16.msra.mxu0 0
        %1386 = vmatprep.subr.bf16.mxu0 0
        %1387 = vmatpush1.bf16.msra.mxu0 0
        %1388 = vmatprep.subr.bf16.mxu0 0
        %1389 = vmatpush1.bf16.msra.mxu0 0
        %1390 = vmatprep.subr.bf16.mxu0 0
        %1391 = vmatpush1.bf16.msra.mxu0 0
        %1392 = vmatprep.subr.bf16.mxu0 0
        %1393 = vmatpush1.bf16.msra.mxu0 0
        %1394 = vmatprep.subr.bf16.mxu0 0
        %1395 = vmatpush1.bf16.msra.mxu0 0
        %1396 = vmatprep.subr.bf16.mxu0 0
        %1397 = vmatpush1.bf16.msra.mxu0 0
        %1398 = vmatprep.mubr.bf16.mxu0 0
        %1399 = vmatmul.mubr.bf16.gmra.mrb[0].mxu0 %v1361
        %v1400 = vpop.f32.mrb[0].mxu0
        %v1401 = vadd.f32 0.0, %v1400
        %v1402 = vpop.f32.mrb[0].mxu0
        %v1403 = vpop.f32.mrb[0].mxu0
        %v1404 = vadd.f32 0.0, %v1403
        %v1405 = vpop.f32.mrb[0].mxu0
        %1406 = vmatprep.mubr.bf16.mxu0 0
        %1407 = vmatmul.mubr.bf16.gmra.mrb[0].mxu0 %v1364
        %v1408 = vpop.f32.mrb[0].mxu0
        %v1409 = vadd.f32 0.0, %v1408
        %v1410 = vpop.f32.mrb[0].mxu0
        %v1411 = vpop.f32.mrb[0].mxu0
        %v1412 = vadd.f32 0.0, %v1411
        %v1413 = vpop.f32.mrb[0].mxu0
        %1414 = vdwg.mxu0
        %v1415 = vadd.f32 %v1310, %v1401
        %v1416 = vadd.f32 %v1311, %v1404
        %v1417 = vadd.f32 %v1312, %v1409
        %v1418 = vadd.f32 %v1313, %v1412
        %v1419 = vld [vmem:[%s450] sm:$0xe]
        %v1420 = vld [vmem:[%s477 + $0x58] sm:$0xf]
        %v1421 = vld [vmem:[%s477 + $0x5c] sm:$0xf]
        %v1423 = vunpack.c.l.b16 %v1419
        %v1424 = vpack.c.b16 %v1327, %v1423
        %v1425 = vrot.slane %v1424, 1
        %v1426 = vrot.slane %v1332, 1
        %v1427 = vsel %vm656, %v1425, %v1426
        %v1428 = vrot.slane %v1333, 1
        %v1429 = vsel %vm656, %v1426, %v1428
        %v1432 = vunpack.c.l.b16 %v1420
        %v1433 = vunpack.c.l.b16 %v1421
        %v1434 = vpack.c.b16 %v1433, %v1432
        %v1437 = vsel %vm535, %v1427, 0
        %v1440 = vsel %vm535, %v1429, 0
        %1442 = vmatprep.subr.bf16.mxu0 0
        %1443 = vmatpush1.bf16.msra.mxu0 %v1434
        %1444 = vmatprep.subr.bf16.mxu0 0
        %1445 = vmatpush1.bf16.msra.mxu0 0
        %1446 = vmatprep.subr.bf16.mxu0 0
        %1447 = vmatpush1.bf16.msra.mxu0 0
        %1448 = vmatprep.subr.bf16.mxu0 0
        %1449 = vmatpush1.bf16.msra.mxu0 0
        %1450 = vmatprep.subr.bf16.mxu0 0
        %1451 = vmatpush1.bf16.msra.mxu0 0
        %1452 = vmatprep.subr.bf16.mxu0 0
        %1453 = vmatpush1.bf16.msra.mxu0 0
        %1454 = vmatprep.subr.bf16.mxu0 0
        %1455 = vmatpush1.bf16.msra.mxu0 0
        %1456 = vmatprep.subr.bf16.mxu0 0
        %1457 = vmatpush1.bf16.msra.mxu0 0
        %1458 = vmatprep.subr.bf16.mxu0 0
        %1459 = vmatpush1.bf16.msra.mxu0 0
        %1460 = vmatprep.subr.bf16.mxu0 0
        %1461 = vmatpush1.bf16.msra.mxu0 0
        %1462 = vmatprep.subr.bf16.mxu0 0
        %1463 = vmatpush1.bf16.msra.mxu0 0
        %1464 = vmatprep.subr.bf16.mxu0 0
        %1465 = vmatpush1.bf16.msra.mxu0 0
        %1466 = vmatprep.subr.bf16.mxu0 0
        %1467 = vmatpush1.bf16.msra.mxu0 0
        %1468 = vmatprep.subr.bf16.mxu0 0
        %1469 = vmatpush1.bf16.msra.mxu0 0
        %1470 = vmatprep.subr.bf16.mxu0 0
        %1471 = vmatpush1.bf16.msra.mxu0 0
        %1472 = vmatprep.subr.bf16.mxu0 0
        %1473 = vmatpush1.bf16.msra.mxu0 0
        %1474 = vmatprep.mubr.bf16.mxu0 0
        %1475 = vmatmul.mubr.bf16.gmra.mrb[0].mxu0 %v1437
        %v1476 = vpop.f32.mrb[0].mxu0
        %v1477 = vadd.f32 0.0, %v1476
        %v1478 = vpop.f32.mrb[0].mxu0
        %v1479 = vpop.f32.mrb[0].mxu0
        %v1480 = vadd.f32 0.0, %v1479
        %v1481 = vpop.f32.mrb[0].mxu0
        %1482 = vmatprep.mubr.bf16.mxu0 0
        %1483 = vmatmul.mubr.bf16.gmra.mrb[0].mxu0 %v1440
        %v1484 = vpop.f32.mrb[0].mxu0
        %v1485 = vadd.f32 0.0, %v1484
        %v1486 = vpop.f32.mrb[0].mxu0
        %v1487 = vpop.f32.mrb[0].mxu0
        %v1488 = vadd.f32 0.0, %v1487
        %v1489 = vpop.f32.mrb[0].mxu0
        %1490 = vdwg.mxu0
        %v1491 = vadd.f32 %v1415, %v1477
        %v1492 = vadd.f32 %v1416, %v1480
        %v1493 = vadd.f32 %v1417, %v1485
        %v1494 = vadd.f32 %v1418, %v1488
        %v1495 = vld [vmem:[%s450 + $0x10] sm:$0xf]
        %v1496 = vld [vmem:[%s477 + $0x60] sm:$0xf]
        %v1497 = vld [vmem:[%s477 + $0x64] sm:$0xf]
        %v1499 = vunpack.c.l.b16 %v1495
        %v1500 = vpack.c.b16 %v1328, %v1327
        %v1501 = vpack.c.b16 %v1499, %v1329
        %v1504 = vunpack.c.l.b16 %v1496
        %v1505 = vunpack.c.l.b16 %v1497
        %v1506 = vpack.c.b16 %v1505, %v1504
        %v1509 = vsel %vm535, %v1500, 0
        %v1512 = vsel %vm535, %v1501, 0
        %1514 = vmatprep.subr.bf16.mxu0 0
        %1515 = vmatpush1.bf16.msra.mxu0 %v1506
        %1516 = vmatprep.subr.bf16.mxu0 0
        %1517 = vmatpush1.bf16.msra.mxu0 0
        %1518 = vmatprep.subr.bf16.mxu0 0
        %1519 = vmatpush1.bf16.msra.mxu0 0
        %1520 = vmatprep.subr.bf16.mxu0 0
        %1521 = vmatpush1.bf16.msra.mxu0 0
        %1522 = vmatprep.subr.bf16.mxu0 0
        %1523 = vmatpush1.bf16.msra.mxu0 0
        %1524 = vmatprep.subr.bf16.mxu0 0
        %1525 = vmatpush1.bf16.msra.mxu0 0
        %1526 = vmatprep.subr.bf16.mxu0 0
        %1527 = vmatpush1.bf16.msra.mxu0 0
        %1528 = vmatprep.subr.bf16.mxu0 0
        %1529 = vmatpush1.bf16.msra.mxu0 0
        %1530 = vmatprep.subr.bf16.mxu0 0
        %1531 = vmatpush1.bf16.msra.mxu0 0
        %1532 = vmatprep.subr.bf16.mxu0 0
        %1533 = vmatpush1.bf16.msra.mxu0 0
        %1534 = vmatprep.subr.bf16.mxu0 0
        %1535 = vmatpush1.bf16.msra.mxu0 0
        %1536 = vmatprep.subr.bf16.mxu0 0
        %1537 = vmatpush1.bf16.msra.mxu0 0
        %1538 = vmatprep.subr.bf16.mxu0 0
        %1539 = vmatpush1.bf16.msra.mxu0 0
        %1540 = vmatprep.subr.bf16.mxu0 0
        %1541 = vmatpush1.bf16.msra.mxu0 0
        %1542 = vmatprep.subr.bf16.mxu0 0
        %1543 = vmatpush1.bf16.msra.mxu0 0
        %1544 = vmatprep.subr.bf16.mxu0 0
        %1545 = vmatpush1.bf16.msra.mxu0 0
        %1546 = vmatprep.mubr.bf16.mxu0 0
        %1547 = vmatmul.mubr.bf16.gmra.mrb[0].mxu0 %v1509
        %v1548 = vpop.f32.mrb[0].mxu0
        %v1549 = vadd.f32 0.0, %v1548
        %v1550 = vpop.f32.mrb[0].mxu0
        %v1551 = vpop.f32.mrb[0].mxu0
        %v1552 = vadd.f32 0.0, %v1551
        %v1553 = vpop.f32.mrb[0].mxu0
        %1554 = vmatprep.mubr.bf16.mxu0 0
        %1555 = vmatmul.mubr.bf16.gmra.mrb[0].mxu0 %v1512
        %v1556 = vpop.f32.mrb[0].mxu0
        %v1557 = vadd.f32 0.0, %v1556
        %v1558 = vpop.f32.mrb[0].mxu0
        %v1559 = vpop.f32.mrb[0].mxu0
        %v1560 = vadd.f32 0.0, %v1559
        %v1561 = vpop.f32.mrb[0].mxu0
        %1562 = vdwg.mxu0
        %v1563 = vadd.f32 %v1491, %v1549
        %v1564 = vadd.f32 %v1492, %v1552
        %v1565 = vadd.f32 %v1493, %v1557
        %v1566 = vadd.f32 %v1494, %v1560
        %v1567 = vld [vmem:[%s450 + $0x4] sm:$0xf]
        %v1568 = vld [vmem:[%s450 + $0x8] sm:$0xf]
        %v1569 = vld [vmem:[%s450 + $0xc] sm:$0xf]
        %v1570 = vld [vmem:[%s450 + $0x10] sm:$0xf]
        %v1571 = vld [vmem:[%s450 + $0x14] sm:$0x1]
        %v1572 = vld [vmem:[%s477 + $0x68] sm:$0xf]
        %v1573 = vld [vmem:[%s477 + $0x6c] sm:$0xf]
        %v1579 = vunpack.c.l.b16 %v1567
        %v1580 = vunpack.c.l.b16 %v1568
        %v1581 = vunpack.c.l.b16 %v1569
        %v1582 = vunpack.c.l.b16 %v1570
        %v1583 = vunpack.c.l.b16 %v1571
        %v1584 = vpack.c.b16 %v1580, %v1579
        %v1585 = vpack.c.b16 %v1582, %v1581
        %v1586 = vpack.c.b16 %v1583, %v1583
        %v1588 = vshrl.u32 %v1584, 16
        %v1590 = vshll.u32 %v1584, 16
        %v1592 = vrot.slane %v1590, 1
        %v1593 = vor.u32 %v1588, %v1592
        %v1595 = vshll.u32 %v1585, 16
        %v1597 = vrot.slane %v1595, 1
        %v1598 = vsel %vm508, %v1593, %v1597
        %v1599 = vshrl.u32 %v1585, 16
        %v1601 = vor.u32 %v1599, %v1597
        %v1603 = vshll.u32 %v1586, 16
        %v1605 = vrot.slane %v1603, 1
        %v1606 = vsel %vm508, %v1601, %v1605
        %v1609 = vunpack.c.l.b16 %v1572
        %v1610 = vunpack.c.l.b16 %v1573
        %v1611 = vpack.c.b16 %v1610, %v1609
        %v1614 = vsel %vm535, %v1598, 0
        %v1617 = vsel %vm535, %v1606, 0
        %1619 = vmatprep.subr.bf16.mxu0 0
        %1620 = vmatpush1.bf16.msra.mxu0 %v1611
        %1621 = vmatprep.subr.bf16.mxu0 0
        %1622 = vmatpush1.bf16.msra.mxu0 0
        %1623 = vmatprep.subr.bf16.mxu0 0
        %1624 = vmatpush1.bf16.msra.mxu0 0
        %1625 = vmatprep.subr.bf16.mxu0 0
        %1626 = vmatpush1.bf16.msra.mxu0 0
        %1627 = vmatprep.subr.bf16.mxu0 0
        %1628 = vmatpush1.bf16.msra.mxu0 0
        %1629 = vmatprep.subr.bf16.mxu0 0
        %1630 = vmatpush1.bf16.msra.mxu0 0
        %1631 = vmatprep.subr.bf16.mxu0 0
        %1632 = vmatpush1.bf16.msra.mxu0 0
        %1633 = vmatprep.subr.bf16.mxu0 0
        %1634 = vmatpush1.bf16.msra.mxu0 0
        %1635 = vmatprep.subr.bf16.mxu0 0
        %1636 = vmatpush1.bf16.msra.mxu0 0
        %1637 = vmatprep.subr.bf16.mxu0 0
        %1638 = vmatpush1.bf16.msra.mxu0 0
        %1639 = vmatprep.subr.bf16.mxu0 0
        %1640 = vmatpush1.bf16.msra.mxu0 0
        %1641 = vmatprep.subr.bf16.mxu0 0
        %1642 = vmatpush1.bf16.msra.mxu0 0
        %1643 = vmatprep.subr.bf16.mxu0 0
        %1644 = vmatpush1.bf16.msra.mxu0 0
        %1645 = vmatprep.subr.bf16.mxu0 0
        %1646 = vmatpush1.bf16.msra.mxu0 0
        %1647 = vmatprep.subr.bf16.mxu0 0
        %1648 = vmatpush1.bf16.msra.mxu0 0
        %1649 = vmatprep.subr.bf16.mxu0 0
        %1650 = vmatpush1.bf16.msra.mxu0 0
        %1651 = vmatprep.mubr.bf16.mxu0 0
        %1652 = vmatmul.mubr.bf16.gmra.mrb[0].mxu0 %v1614
        %v1653 = vpop.f32.mrb[0].mxu0
        %v1654 = vadd.f32 0.0, %v1653
        %v1655 = vpop.f32.mrb[0].mxu0
        %v1656 = vpop.f32.mrb[0].mxu0
        %v1657 = vadd.f32 0.0, %v1656
        %v1658 = vpop.f32.mrb[0].mxu0
        %1659 = vmatprep.mubr.bf16.mxu0 0
        %1660 = vmatmul.mubr.bf16.gmra.mrb[0].mxu0 %v1617
        %v1661 = vpop.f32.mrb[0].mxu0
        %v1662 = vadd.f32 0.0, %v1661
        %v1663 = vpop.f32.mrb[0].mxu0
        %v1664 = vpop.f32.mrb[0].mxu0
        %v1665 = vadd.f32 0.0, %v1664
        %v1666 = vpop.f32.mrb[0].mxu0
        %1667 = vdwg.mxu0
        %v1668 = vadd.f32 %v1563, %v1654
        %v1669 = vadd.f32 %v1564, %v1657
        %v1670 = vadd.f32 %v1565, %v1662
        %v1671 = vadd.f32 %v1566, %v1665
        %v1672 = vld [vmem:[%s450 + $0x4] sm:$0xe]
        %v1673 = vld [vmem:[%s477 + $0x70] sm:$0xf]
        %v1674 = vld [vmem:[%s477 + $0x74] sm:$0xf]
        %v1676 = vunpack.c.l.b16 %v1672
        %v1677 = vpack.c.b16 %v1580, %v1676
        %v1678 = vrot.slane %v1677, 1
        %v1679 = vrot.slane %v1585, 1
        %v1680 = vsel %vm656, %v1678, %v1679
        %v1681 = vrot.slane %v1586, 1
        %v1682 = vsel %vm656, %v1679, %v1681
        %v1685 = vunpack.c.l.b16 %v1673
        %v1686 = vunpack.c.l.b16 %v1674
        %v1687 = vpack.c.b16 %v1686, %v1685
        %v1690 = vsel %vm535, %v1680, 0
        %v1693 = vsel %vm535, %v1682, 0
        %1695 = vmatprep.subr.bf16.mxu0 0
        %1696 = vmatpush1.bf16.msra.mxu0 %v1687
        %1697 = vmatprep.subr.bf16.mxu0 0
        %1698 = vmatpush1.bf16.msra.mxu0 0
        %1699 = vmatprep.subr.bf16.mxu0 0
        %1700 = vmatpush1.bf16.msra.mxu0 0
        %1701 = vmatprep.subr.bf16.mxu0 0
        %1702 = vmatpush1.bf16.msra.mxu0 0
        %1703 = vmatprep.subr.bf16.mxu0 0
        %1704 = vmatpush1.bf16.msra.mxu0 0
        %1705 = vmatprep.subr.bf16.mxu0 0
        %1706 = vmatpush1.bf16.msra.mxu0 0
        %1707 = vmatprep.subr.bf16.mxu0 0
        %1708 = vmatpush1.bf16.msra.mxu0 0
        %1709 = vmatprep.subr.bf16.mxu0 0
        %1710 = vmatpush1.bf16.msra.mxu0 0
        %1711 = vmatprep.subr.bf16.mxu0 0
        %1712 = vmatpush1.bf16.msra.mxu0 0
        %1713 = vmatprep.subr.bf16.mxu0 0
        %1714 = vmatpush1.bf16.msra.mxu0 0
        %1715 = vmatprep.subr.bf16.mxu0 0
        %1716 = vmatpush1.bf16.msra.mxu0 0
        %1717 = vmatprep.subr.bf16.mxu0 0
        %1718 = vmatpush1.bf16.msra.mxu0 0
        %1719 = vmatprep.subr.bf16.mxu0 0
        %1720 = vmatpush1.bf16.msra.mxu0 0
        %1721 = vmatprep.subr.bf16.mxu0 0
        %1722 = vmatpush1.bf16.msra.mxu0 0
        %1723 = vmatprep.subr.bf16.mxu0 0
        %1724 = vmatpush1.bf16.msra.mxu0 0
        %1725 = vmatprep.subr.bf16.mxu0 0
        %1726 = vmatpush1.bf16.msra.mxu0 0
        %1727 = vmatprep.mubr.bf16.mxu0 0
        %1728 = vmatmul.mubr.bf16.gmra.mrb[0].mxu0 %v1690
        %v1729 = vpop.f32.mrb[0].mxu0
        %v1730 = vadd.f32 0.0, %v1729
        %v1731 = vpop.f32.mrb[0].mxu0
        %v1732 = vpop.f32.mrb[0].mxu0
        %v1733 = vadd.f32 0.0, %v1732
        %v1734 = vpop.f32.mrb[0].mxu0
        %1735 = vmatprep.mubr.bf16.mxu0 0
        %1736 = vmatmul.mubr.bf16.gmra.mrb[0].mxu0 %v1693
        %v1737 = vpop.f32.mrb[0].mxu0
        %v1738 = vadd.f32 0.0, %v1737
        %v1739 = vpop.f32.mrb[0].mxu0
        %v1740 = vpop.f32.mrb[0].mxu0
        %v1741 = vadd.f32 0.0, %v1740
        %v1742 = vpop.f32.mrb[0].mxu0
        %1743 = vdwg.mxu0
        %v1744 = vadd.f32 %v1668, %v1730
        %v1745 = vadd.f32 %v1669, %v1733
        %v1746 = vadd.f32 %v1670, %v1738
        %v1747 = vadd.f32 %v1671, %v1741
        %v1748 = vld [vmem:[%s450 + $0x14] sm:$0xf]
        %v1749 = vld [vmem:[%s477 + $0x78] sm:$0xf]
        %v1750 = vld [vmem:[%s477 + $0x7c] sm:$0xf]
        %v1752 = vunpack.c.l.b16 %v1748
        %v1753 = vpack.c.b16 %v1581, %v1580
        %v1754 = vpack.c.b16 %v1752, %v1582
        %v1757 = vunpack.c.l.b16 %v1749
        %v1758 = vunpack.c.l.b16 %v1750
        %v1759 = vpack.c.b16 %v1758, %v1757
        %v1762 = vsel %vm535, %v1753, 0
        %v1765 = vsel %vm535, %v1754, 0
        %1767 = vmatprep.subr.bf16.mxu0 0
        %1768 = vmatpush1.bf16.msra.mxu0 %v1759
        %1769 = vmatprep.subr.bf16.mxu0 0
        %1770 = vmatpush1.bf16.msra.mxu0 0
        %1771 = vmatprep.subr.bf16.mxu0 0
        %1772 = vmatpush1.bf16.msra.mxu0 0
        %1773 = vmatprep.subr.bf16.mxu0 0
        %1774 = vmatpush1.bf16.msra.mxu0 0
        %1775 = vmatprep.subr.bf16.mxu0 0
        %1776 = vmatpush1.bf16.msra.mxu0 0
        %1777 = vmatprep.subr.bf16.mxu0 0
        %1778 = vmatpush1.bf16.msra.mxu0 0
        %1779 = vmatprep.subr.bf16.mxu0 0
        %1780 = vmatpush1.bf16.msra.mxu0 0
        %1781 = vmatprep.subr.bf16.mxu0 0
        %1782 = vmatpush1.bf16.msra.mxu0 0
        %1783 = vmatprep.subr.bf16.mxu0 0
        %1784 = vmatpush1.bf16.msra.mxu0 0
        %1785 = vmatprep.subr.bf16.mxu0 0
        %1786 = vmatpush1.bf16.msra.mxu0 0
        %1787 = vmatprep.subr.bf16.mxu0 0
        %1788 = vmatpush1.bf16.msra.mxu0 0
        %1789 = vmatprep.subr.bf16.mxu0 0
        %1790 = vmatpush1.bf16.msra.mxu0 0
        %1791 = vmatprep.subr.bf16.mxu0 0
        %1792 = vmatpush1.bf16.msra.mxu0 0
        %1793 = vmatprep.subr.bf16.mxu0 0
        %1794 = vmatpush1.bf16.msra.mxu0 0
        %1795 = vmatprep.subr.bf16.mxu0 0
        %1796 = vmatpush1.bf16.msra.mxu0 0
        %1797 = vmatprep.subr.bf16.mxu0 0
        %1798 = vmatpush1.bf16.msra.mxu0 0
        %1799 = vmatprep.mubr.bf16.mxu0 0
        %1800 = vmatmul.mubr.bf16.gmra.mrb[0].mxu0 %v1762
        %v1801 = vpop.f32.mrb[0].mxu0
        %v1802 = vadd.f32 0.0, %v1801
        %v1803 = vpop.f32.mrb[0].mxu0
        %v1804 = vpop.f32.mrb[0].mxu0
        %v1805 = vadd.f32 0.0, %v1804
        %v1806 = vpop.f32.mrb[0].mxu0
        %1807 = vmatprep.mubr.bf16.mxu0 0
        %1808 = vmatmul.mubr.bf16.gmra.mrb[0].mxu0 %v1765
        %v1809 = vpop.f32.mrb[0].mxu0
        %v1810 = vadd.f32 0.0, %v1809
        %v1811 = vpop.f32.mrb[0].mxu0
        %v1812 = vpop.f32.mrb[0].mxu0
        %v1813 = vadd.f32 0.0, %v1812
        %v1814 = vpop.f32.mrb[0].mxu0
        %1815 = vdwg.mxu0
        %v1816 = vadd.f32 %v1744, %v1802
        %v1817 = vadd.f32 %v1745, %v1805
        %v1818 = vadd.f32 %v1746, %v1810
        %v1819 = vadd.f32 %v1747, %v1813
        %v1820 = vld [vmem:[%s450 + $0x8] sm:$0xf]
        %v1821 = vld [vmem:[%s450 + $0xc] sm:$0xf]
        %v1822 = vld [vmem:[%s450 + $0x10] sm:$0xf]
        %v1823 = vld [vmem:[%s450 + $0x14] sm:$0xf]
        %v1824 = vld [vmem:[%s450 + $0x18] sm:$0x1]
        %v1825 = vld [vmem:[%s477 + $0x80] sm:$0xf]
        %v1826 = vld [vmem:[%s477 + $0x84] sm:$0xf]
        %v1832 = vunpack.c.l.b16 %v1820
        %v1833 = vunpack.c.l.b16 %v1821
        %v1834 = vunpack.c.l.b16 %v1822
        %v1835 = vunpack.c.l.b16 %v1823
        %v1836 = vunpack.c.l.b16 %v1824
        %v1837 = vpack.c.b16 %v1833, %v1832
        %v1838 = vpack.c.b16 %v1835, %v1834
        %v1839 = vpack.c.b16 %v1836, %v1836
        %v1841 = vshrl.u32 %v1837, 16
        %v1843 = vshll.u32 %v1837, 16
        %v1845 = vrot.slane %v1843, 1
        %v1846 = vor.u32 %v1841, %v1845
        %v1848 = vshll.u32 %v1838, 16
        %v1850 = vrot.slane %v1848, 1
        %v1851 = vsel %vm508, %v1846, %v1850
        %v1852 = vshrl.u32 %v1838, 16
        %v1854 = vor.u32 %v1852, %v1850
        %v1856 = vshll.u32 %v1839, 16
        %v1858 = vrot.slane %v1856, 1
        %v1859 = vsel %vm508, %v1854, %v1858
        %v1862 = vunpack.c.l.b16 %v1825
        %v1863 = vunpack.c.l.b16 %v1826
        %v1864 = vpack.c.b16 %v1863, %v1862
        %v1867 = vsel %vm535, %v1851, 0
        %v1870 = vsel %vm535, %v1859, 0
        %1872 = vmatprep.subr.bf16.mxu0 0
        %1873 = vmatpush1.bf16.msra.mxu0 %v1864
        %1874 = vmatprep.subr.bf16.mxu0 0
        %1875 = vmatpush1.bf16.msra.mxu0 0
        %1876 = vmatprep.subr.bf16.mxu0 0
        %1877 = vmatpush1.bf16.msra.mxu0 0
        %1878 = vmatprep.subr.bf16.mxu0 0
        %1879 = vmatpush1.bf16.msra.mxu0 0
        %1880 = vmatprep.subr.bf16.mxu0 0
        %1881 = vmatpush1.bf16.msra.mxu0 0
        %1882 = vmatprep.subr.bf16.mxu0 0
        %1883 = vmatpush1.bf16.msra.mxu0 0
        %1884 = vmatprep.subr.bf16.mxu0 0
        %1885 = vmatpush1.bf16.msra.mxu0 0
        %1886 = vmatprep.subr.bf16.mxu0 0
        %1887 = vmatpush1.bf16.msra.mxu0 0
        %1888 = vmatprep.subr.bf16.mxu0 0
        %1889 = vmatpush1.bf16.msra.mxu0 0
        %1890 = vmatprep.subr.bf16.mxu0 0
        %1891 = vmatpush1.bf16.msra.mxu0 0
        %1892 = vmatprep.subr.bf16.mxu0 0
        %1893 = vmatpush1.bf16.msra.mxu0 0
        %1894 = vmatprep.subr.bf16.mxu0 0
        %1895 = vmatpush1.bf16.msra.mxu0 0
        %1896 = vmatprep.subr.bf16.mxu0 0
        %1897 = vmatpush1.bf16.msra.mxu0 0
        %1898 = vmatprep.subr.bf16.mxu0 0
        %1899 = vmatpush1.bf16.msra.mxu0 0
        %1900 = vmatprep.subr.bf16.mxu0 0
        %1901 = vmatpush1.bf16.msra.mxu0 0
        %1902 = vmatprep.subr.bf16.mxu0 0
        %1903 = vmatpush1.bf16.msra.mxu0 0
        %1904 = vmatprep.mubr.bf16.mxu0 0
        %1905 = vmatmul.mubr.bf16.gmra.mrb[0].mxu0 %v1867
        %v1906 = vpop.f32.mrb[0].mxu0
        %v1907 = vadd.f32 0.0, %v1906
        %v1908 = vpop.f32.mrb[0].mxu0
        %v1909 = vpop.f32.mrb[0].mxu0
        %v1910 = vadd.f32 0.0, %v1909
        %v1911 = vpop.f32.mrb[0].mxu0
        %1912 = vmatprep.mubr.bf16.mxu0 0
        %1913 = vmatmul.mubr.bf16.gmra.mrb[0].mxu0 %v1870
        %v1914 = vpop.f32.mrb[0].mxu0
        %v1915 = vadd.f32 0.0, %v1914
        %v1916 = vpop.f32.mrb[0].mxu0
        %v1917 = vpop.f32.mrb[0].mxu0
        %v1918 = vadd.f32 0.0, %v1917
        %v1919 = vpop.f32.mrb[0].mxu0
        %1920 = vdwg.mxu0
        %v1921 = vadd.f32 %v1816, %v1907
        %v1922 = vadd.f32 %v1817, %v1910
        %v1923 = vadd.f32 %v1818, %v1915
        %v1924 = vadd.f32 %v1819, %v1918
        %v1925 = vld [vmem:[%s450 + $0x8] sm:$0xe]
        %v1926 = vld [vmem:[%s477 + $0x88] sm:$0xf]
        %v1927 = vld [vmem:[%s477 + $0x8c] sm:$0xf]
        %v1929 = vunpack.c.l.b16 %v1925
        %v1930 = vpack.c.b16 %v1833, %v1929
        %v1931 = vrot.slane %v1930, 1
        %v1932 = vrot.slane %v1838, 1
        %v1933 = vsel %vm656, %v1931, %v1932
        %v1934 = vrot.slane %v1839, 1
        %v1935 = vsel %vm656, %v1932, %v1934
        %v1938 = vunpack.c.l.b16 %v1926
        %v1939 = vunpack.c.l.b16 %v1927
        %v1940 = vpack.c.b16 %v1939, %v1938
        %v1943 = vsel %vm535, %v1933, 0
        %v1946 = vsel %vm535, %v1935, 0
        %1948 = vmatprep.subr.bf16.mxu0 0
        %1949 = vmatpush1.bf16.msra.mxu0 %v1940
        %1950 = vmatprep.subr.bf16.mxu0 0
        %1951 = vmatpush1.bf16.msra.mxu0 0
        %1952 = vmatprep.subr.bf16.mxu0 0
        %1953 = vmatpush1.bf16.msra.mxu0 0
        %1954 = vmatprep.subr.bf16.mxu0 0
        %1955 = vmatpush1.bf16.msra.mxu0 0
        %1956 = vmatprep.subr.bf16.mxu0 0
        %1957 = vmatpush1.bf16.msra.mxu0 0
        %1958 = vmatprep.subr.bf16.mxu0 0
        %1959 = vmatpush1.bf16.msra.mxu0 0
        %1960 = vmatprep.subr.bf16.mxu0 0
        %1961 = vmatpush1.bf16.msra.mxu0 0
        %1962 = vmatprep.subr.bf16.mxu0 0
        %1963 = vmatpush1.bf16.msra.mxu0 0
        %1964 = vmatprep.subr.bf16.mxu0 0
        %1965 = vmatpush1.bf16.msra.mxu0 0
        %1966 = vmatprep.subr.bf16.mxu0 0
        %1967 = vmatpush1.bf16.msra.mxu0 0
        %1968 = vmatprep.subr.bf16.mxu0 0
        %1969 = vmatpush1.bf16.msra.mxu0 0
        %1970 = vmatprep.subr.bf16.mxu0 0
        %1971 = vmatpush1.bf16.msra.mxu0 0
        %1972 = vmatprep.subr.bf16.mxu0 0
        %1973 = vmatpush1.bf16.msra.mxu0 0
        %1974 = vmatprep.subr.bf16.mxu0 0
        %1975 = vmatpush1.bf16.msra.mxu0 0
        %1976 = vmatprep.subr.bf16.mxu0 0
        %1977 = vmatpush1.bf16.msra.mxu0 0
        %1978 = vmatprep.subr.bf16.mxu0 0
        %1979 = vmatpush1.bf16.msra.mxu0 0
        %1980 = vmatprep.mubr.bf16.mxu0 0
        %1981 = vmatmul.mubr.bf16.gmra.mrb[0].mxu0 %v1943
        %v1982 = vpop.f32.mrb[0].mxu0
        %v1983 = vadd.f32 0.0, %v1982
        %v1984 = vpop.f32.mrb[0].mxu0
        %v1985 = vpop.f32.mrb[0].mxu0
        %v1986 = vadd.f32 0.0, %v1985
        %v1987 = vpop.f32.mrb[0].mxu0
        %1988 = vmatprep.mubr.bf16.mxu0 0
        %1989 = vmatmul.mubr.bf16.gmra.mrb[0].mxu0 %v1946
        %v1990 = vpop.f32.mrb[0].mxu0
        %v1991 = vadd.f32 0.0, %v1990
        %v1992 = vpop.f32.mrb[0].mxu0
        %v1993 = vpop.f32.mrb[0].mxu0
        %v1994 = vadd.f32 0.0, %v1993
        %v1995 = vpop.f32.mrb[0].mxu0
        %1996 = vdwg.mxu0
        %v1997 = vadd.f32 %v1921, %v1983
        %v1998 = vadd.f32 %v1922, %v1986
        %v1999 = vadd.f32 %v1923, %v1991
        %v2000 = vadd.f32 %v1924, %v1994
        %v2001 = vld [vmem:[%s461] sm:$0xf]
        %v2002 = vld [vmem:[%s461 + $0x4] sm:$0xf]
        %v2003 = vld [vmem:[%s461 + $0x8] sm:$0xf]
        %v2004 = vld [vmem:[%s461 + $0xc] sm:$0xf]
        %v2005 = vld [vmem:[%s477 + $0x90] sm:$0xf]
        %v2006 = vld [vmem:[%s477 + $0x94] sm:$0xf]
        %v2011 = vunpack.c.l.b16 %v2001
        %v2012 = vunpack.c.l.b16 %v2002
        %v2013 = vunpack.c.l.b16 %v2003
        %v2014 = vunpack.c.l.b16 %v2004
        %v2015 = vpack.c.b16 %v2012, %v2011
        %v2016 = vpack.c.b16 %v2014, %v2013
        %v2019 = vunpack.c.l.b16 %v2005
        %v2020 = vunpack.c.l.b16 %v2006
        %v2021 = vpack.c.b16 %v2020, %v2019
        %v2024 = vsel %vm535, %v2015, 0
        %v2027 = vsel %vm535, %v2016, 0
        %2029 = vmatprep.subr.bf16.mxu0 0
        %2030 = vmatpush1.bf16.msra.mxu0 %v2021
        %2031 = vmatprep.subr.bf16.mxu0 0
        %2032 = vmatpush1.bf16.msra.mxu0 0
        %2033 = vmatprep.subr.bf16.mxu0 0
        %2034 = vmatpush1.bf16.msra.mxu0 0
        %2035 = vmatprep.subr.bf16.mxu0 0
        %2036 = vmatpush1.bf16.msra.mxu0 0
        %2037 = vmatprep.subr.bf16.mxu0 0
        %2038 = vmatpush1.bf16.msra.mxu0 0
        %2039 = vmatprep.subr.bf16.mxu0 0
        %2040 = vmatpush1.bf16.msra.mxu0 0
        %2041 = vmatprep.subr.bf16.mxu0 0
        %2042 = vmatpush1.bf16.msra.mxu0 0
        %2043 = vmatprep.subr.bf16.mxu0 0
        %2044 = vmatpush1.bf16.msra.mxu0 0
        %2045 = vmatprep.subr.bf16.mxu0 0
        %2046 = vmatpush1.bf16.msra.mxu0 0
        %2047 = vmatprep.subr.bf16.mxu0 0
        %2048 = vmatpush1.bf16.msra.mxu0 0
        %2049 = vmatprep.subr.bf16.mxu0 0
        %2050 = vmatpush1.bf16.msra.mxu0 0
        %2051 = vmatprep.subr.bf16.mxu0 0
        %2052 = vmatpush1.bf16.msra.mxu0 0
        %2053 = vmatprep.subr.bf16.mxu0 0
        %2054 = vmatpush1.bf16.msra.mxu0 0
        %2055 = vmatprep.subr.bf16.mxu0 0
        %2056 = vmatpush1.bf16.msra.mxu0 0
        %2057 = vmatprep.subr.bf16.mxu0 0
        %2058 = vmatpush1.bf16.msra.mxu0 0
        %2059 = vmatprep.subr.bf16.mxu0 0
        %2060 = vmatpush1.bf16.msra.mxu0 0
        %2061 = vmatprep.mubr.bf16.mxu0 0
        %2062 = vmatmul.mubr.bf16.gmra.mrb[0].mxu0 %v2024
        %v2063 = vpop.f32.mrb[0].mxu0
        %v2064 = vadd.f32 0.0, %v2063
        %v2065 = vpop.f32.mrb[0].mxu0
        %v2066 = vpop.f32.mrb[0].mxu0
        %v2067 = vadd.f32 0.0, %v2066
        %v2068 = vpop.f32.mrb[0].mxu0
        %2069 = vmatprep.mubr.bf16.mxu0 0
        %2070 = vmatmul.mubr.bf16.gmra.mrb[0].mxu0 %v2027
        %v2071 = vpop.f32.mrb[0].mxu0
        %v2072 = vadd.f32 0.0, %v2071
        %v2073 = vpop.f32.mrb[0].mxu0
        %v2074 = vpop.f32.mrb[0].mxu0
        %v2075 = vadd.f32 0.0, %v2074
        %v2076 = vpop.f32.mrb[0].mxu0
        %2077 = vdwg.mxu0
        %v2078 = vadd.f32 %v1997, %v2064
        %v2079 = vadd.f32 %v1998, %v2067
        %v2080 = vadd.f32 %v1999, %v2072
        %v2081 = vadd.f32 %v2000, %v2075
        %v2082 = vld [vmem:[%s461] sm:$0xf]
        %v2083 = vld [vmem:[%s461 + $0x4] sm:$0xf]
        %v2084 = vld [vmem:[%s461 + $0x8] sm:$0xf]
        %v2085 = vld [vmem:[%s461 + $0xc] sm:$0xf]
        %v2086 = vld [vmem:[%s461 + $0x10] sm:$0x1]
        %v2087 = vld [vmem:[%s477 + $0x98] sm:$0xf]
        %v2088 = vld [vmem:[%s477 + $0x9c] sm:$0xf]
        %v2094 = vunpack.c.l.b16 %v2082
        %v2095 = vunpack.c.l.b16 %v2083
        %v2096 = vunpack.c.l.b16 %v2084
        %v2097 = vunpack.c.l.b16 %v2085
        %v2098 = vunpack.c.l.b16 %v2086
        %v2099 = vpack.c.b16 %v2095, %v2094
        %v2100 = vpack.c.b16 %v2097, %v2096
        %v2101 = vpack.c.b16 %v2098, %v2098
        %v2103 = vshrl.u32 %v2099, 16
        %v2105 = vshll.u32 %v2099, 16
        %v2107 = vrot.slane %v2105, 1
        %v2108 = vor.u32 %v2103, %v2107
        %v2110 = vshll.u32 %v2100, 16
        %v2112 = vrot.slane %v2110, 1
        %v2113 = vsel %vm508, %v2108, %v2112
        %v2114 = vshrl.u32 %v2100, 16
        %v2116 = vor.u32 %v2114, %v2112
        %v2118 = vshll.u32 %v2101, 16
        %v2120 = vrot.slane %v2118, 1
        %v2121 = vsel %vm508, %v2116, %v2120
        %v2124 = vunpack.c.l.b16 %v2087
        %v2125 = vunpack.c.l.b16 %v2088
        %v2126 = vpack.c.b16 %v2125, %v2124
        %v2129 = vsel %vm535, %v2113, 0
        %v2132 = vsel %vm535, %v2121, 0
        %2134 = vmatprep.subr.bf16.mxu0 0
        %2135 = vmatpush1.bf16.msra.mxu0 %v2126
        %2136 = vmatprep.subr.bf16.mxu0 0
        %2137 = vmatpush1.bf16.msra.mxu0 0
        %2138 = vmatprep.subr.bf16.mxu0 0
        %2139 = vmatpush1.bf16.msra.mxu0 0
        %2140 = vmatprep.subr.bf16.mxu0 0
        %2141 = vmatpush1.bf16.msra.mxu0 0
        %2142 = vmatprep.subr.bf16.mxu0 0
        %2143 = vmatpush1.bf16.msra.mxu0 0
        %2144 = vmatprep.subr.bf16.mxu0 0
        %2145 = vmatpush1.bf16.msra.mxu0 0
        %2146 = vmatprep.subr.bf16.mxu0 0
        %2147 = vmatpush1.bf16.msra.mxu0 0
        %2148 = vmatprep.subr.bf16.mxu0 0
        %2149 = vmatpush1.bf16.msra.mxu0 0
        %2150 = vmatprep.subr.bf16.mxu0 0
        %2151 = vmatpush1.bf16.msra.mxu0 0
        %2152 = vmatprep.subr.bf16.mxu0 0
        %2153 = vmatpush1.bf16.msra.mxu0 0
        %2154 = vmatprep.subr.bf16.mxu0 0
        %2155 = vmatpush1.bf16.msra.mxu0 0
        %2156 = vmatprep.subr.bf16.mxu0 0
        %2157 = vmatpush1.bf16.msra.mxu0 0
        %2158 = vmatprep.subr.bf16.mxu0 0
        %2159 = vmatpush1.bf16.msra.mxu0 0
        %2160 = vmatprep.subr.bf16.mxu0 0
        %2161 = vmatpush1.bf16.msra.mxu0 0
        %2162 = vmatprep.subr.bf16.mxu0 0
        %2163 = vmatpush1.bf16.msra.mxu0 0
        %2164 = vmatprep.subr.bf16.mxu0 0
        %2165 = vmatpush1.bf16.msra.mxu0 0
        %2166 = vmatprep.mubr.bf16.mxu0 0
        %2167 = vmatmul.mubr.bf16.gmra.mrb[0].mxu0 %v2129
        %v2168 = vpop.f32.mrb[0].mxu0
        %v2169 = vadd.f32 0.0, %v2168
        %v2170 = vpop.f32.mrb[0].mxu0
        %v2171 = vpop.f32.mrb[0].mxu0
        %v2172 = vadd.f32 0.0, %v2171
        %v2173 = vpop.f32.mrb[0].mxu0
        %2174 = vmatprep.mubr.bf16.mxu0 0
        %2175 = vmatmul.mubr.bf16.gmra.mrb[0].mxu0 %v2132
        %v2176 = vpop.f32.mrb[0].mxu0
        %v2177 = vadd.f32 0.0, %v2176
        %v2178 = vpop.f32.mrb[0].mxu0
        %v2179 = vpop.f32.mrb[0].mxu0
        %v2180 = vadd.f32 0.0, %v2179
        %v2181 = vpop.f32.mrb[0].mxu0
        %2182 = vdwg.mxu0
        %v2183 = vadd.f32 %v2078, %v2169
        %v2184 = vadd.f32 %v2079, %v2172
        %v2185 = vadd.f32 %v2080, %v2177
        %v2186 = vadd.f32 %v2081, %v2180
        %v2187 = vld [vmem:[%s461] sm:$0xe]
        %v2188 = vld [vmem:[%s477 + $0xa0] sm:$0xf]
        %v2189 = vld [vmem:[%s477 + $0xa4] sm:$0xf]
        %v2191 = vunpack.c.l.b16 %v2187
        %v2192 = vpack.c.b16 %v2095, %v2191
        %v2193 = vrot.slane %v2192, 1
        %v2194 = vrot.slane %v2100, 1
        %v2195 = vsel %vm656, %v2193, %v2194
        %v2196 = vrot.slane %v2101, 1
        %v2197 = vsel %vm656, %v2194, %v2196
        %v2200 = vunpack.c.l.b16 %v2188
        %v2201 = vunpack.c.l.b16 %v2189
        %v2202 = vpack.c.b16 %v2201, %v2200
        %v2205 = vsel %vm535, %v2195, 0
        %v2208 = vsel %vm535, %v2197, 0
        %2210 = vmatprep.subr.bf16.mxu0 0
        %2211 = vmatpush1.bf16.msra.mxu0 %v2202
        %2212 = vmatprep.subr.bf16.mxu0 0
        %2213 = vmatpush1.bf16.msra.mxu0 0
        %2214 = vmatprep.subr.bf16.mxu0 0
        %2215 = vmatpush1.bf16.msra.mxu0 0
        %2216 = vmatprep.subr.bf16.mxu0 0
        %2217 = vmatpush1.bf16.msra.mxu0 0
        %2218 = vmatprep.subr.bf16.mxu0 0
        %2219 = vmatpush1.bf16.msra.mxu0 0
        %2220 = vmatprep.subr.bf16.mxu0 0
        %2221 = vmatpush1.bf16.msra.mxu0 0
        %2222 = vmatprep.subr.bf16.mxu0 0
        %2223 = vmatpush1.bf16.msra.mxu0 0
        %2224 = vmatprep.subr.bf16.mxu0 0
        %2225 = vmatpush1.bf16.msra.mxu0 0
        %2226 = vmatprep.subr.bf16.mxu0 0
        %2227 = vmatpush1.bf16.msra.mxu0 0
        %2228 = vmatprep.subr.bf16.mxu0 0
        %2229 = vmatpush1.bf16.msra.mxu0 0
        %2230 = vmatprep.subr.bf16.mxu0 0
        %2231 = vmatpush1.bf16.msra.mxu0 0
        %2232 = vmatprep.subr.bf16.mxu0 0
        %2233 = vmatpush1.bf16.msra.mxu0 0
        %2234 = vmatprep.subr.bf16.mxu0 0
        %2235 = vmatpush1.bf16.msra.mxu0 0
        %2236 = vmatprep.subr.bf16.mxu0 0
        %2237 = vmatpush1.bf16.msra.mxu0 0
        %2238 = vmatprep.subr.bf16.mxu0 0
        %2239 = vmatpush1.bf16.msra.mxu0 0
        %2240 = vmatprep.subr.bf16.mxu0 0
        %2241 = vmatpush1.bf16.msra.mxu0 0
        %2242 = vmatprep.mubr.bf16.mxu0 0
        %2243 = vmatmul.mubr.bf16.gmra.mrb[0].mxu0 %v2205
        %v2244 = vpop.f32.mrb[0].mxu0
        %v2245 = vadd.f32 0.0, %v2244
        %v2246 = vpop.f32.mrb[0].mxu0
        %v2247 = vpop.f32.mrb[0].mxu0
        %v2248 = vadd.f32 0.0, %v2247
        %v2249 = vpop.f32.mrb[0].mxu0
        %2250 = vmatprep.mubr.bf16.mxu0 0
        %2251 = vmatmul.mubr.bf16.gmra.mrb[0].mxu0 %v2208
        %v2252 = vpop.f32.mrb[0].mxu0
        %v2253 = vadd.f32 0.0, %v2252
        %v2254 = vpop.f32.mrb[0].mxu0
        %v2255 = vpop.f32.mrb[0].mxu0
        %v2256 = vadd.f32 0.0, %v2255
        %v2257 = vpop.f32.mrb[0].mxu0
        %2258 = vdwg.mxu0
        %v2259 = vadd.f32 %v2183, %v2245
        %v2260 = vadd.f32 %v2184, %v2248
        %v2261 = vadd.f32 %v2185, %v2253
        %v2262 = vadd.f32 %v2186, %v2256
        %v2263 = vld [vmem:[%s461 + $0x10] sm:$0xf]
        %v2264 = vld [vmem:[%s477 + $0xa8] sm:$0xf]
        %v2265 = vld [vmem:[%s477 + $0xac] sm:$0xf]
        %v2267 = vunpack.c.l.b16 %v2263
        %v2268 = vpack.c.b16 %v2096, %v2095
        %v2269 = vpack.c.b16 %v2267, %v2097
        %v2272 = vunpack.c.l.b16 %v2264
        %v2273 = vunpack.c.l.b16 %v2265
        %v2274 = vpack.c.b16 %v2273, %v2272
        %v2277 = vsel %vm535, %v2268, 0
        %v2280 = vsel %vm535, %v2269, 0
        %2282 = vmatprep.subr.bf16.mxu0 0
        %2283 = vmatpush1.bf16.msra.mxu0 %v2274
        %2284 = vmatprep.subr.bf16.mxu0 0
        %2285 = vmatpush1.bf16.msra.mxu0 0
        %2286 = vmatprep.subr.bf16.mxu0 0
        %2287 = vmatpush1.bf16.msra.mxu0 0
        %2288 = vmatprep.subr.bf16.mxu0 0
        %2289 = vmatpush1.bf16.msra.mxu0 0
        %2290 = vmatprep.subr.bf16.mxu0 0
        %2291 = vmatpush1.bf16.msra.mxu0 0
        %2292 = vmatprep.subr.bf16.mxu0 0
        %2293 = vmatpush1.bf16.msra.mxu0 0
        %2294 = vmatprep.subr.bf16.mxu0 0
        %2295 = vmatpush1.bf16.msra.mxu0 0
        %2296 = vmatprep.subr.bf16.mxu0 0
        %2297 = vmatpush1.bf16.msra.mxu0 0
        %2298 = vmatprep.subr.bf16.mxu0 0
        %2299 = vmatpush1.bf16.msra.mxu0 0
        %2300 = vmatprep.subr.bf16.mxu0 0
        %2301 = vmatpush1.bf16.msra.mxu0 0
        %2302 = vmatprep.subr.bf16.mxu0 0
        %2303 = vmatpush1.bf16.msra.mxu0 0
        %2304 = vmatprep.subr.bf16.mxu0 0
        %2305 = vmatpush1.bf16.msra.mxu0 0
        %2306 = vmatprep.subr.bf16.mxu0 0
        %2307 = vmatpush1.bf16.msra.mxu0 0
        %2308 = vmatprep.subr.bf16.mxu0 0
        %2309 = vmatpush1.bf16.msra.mxu0 0
        %2310 = vmatprep.subr.bf16.mxu0 0
        %2311 = vmatpush1.bf16.msra.mxu0 0
        %2312 = vmatprep.subr.bf16.mxu0 0
        %2313 = vmatpush1.bf16.msra.mxu0 0
        %2314 = vmatprep.mubr.bf16.mxu0 0
        %2315 = vmatmul.mubr.bf16.gmra.mrb[0].mxu0 %v2277
        %v2316 = vpop.f32.mrb[0].mxu0
        %v2317 = vadd.f32 0.0, %v2316
        %v2318 = vpop.f32.mrb[0].mxu0
        %v2319 = vpop.f32.mrb[0].mxu0
        %v2320 = vadd.f32 0.0, %v2319
        %v2321 = vpop.f32.mrb[0].mxu0
        %2322 = vmatprep.mubr.bf16.mxu0 0
        %2323 = vmatmul.mubr.bf16.gmra.mrb[0].mxu0 %v2280
        %v2324 = vpop.f32.mrb[0].mxu0
        %v2325 = vadd.f32 0.0, %v2324
        %v2326 = vpop.f32.mrb[0].mxu0
        %v2327 = vpop.f32.mrb[0].mxu0
        %v2328 = vadd.f32 0.0, %v2327
        %v2329 = vpop.f32.mrb[0].mxu0
        %2330 = vdwg.mxu0
        %v2331 = vadd.f32 %v2259, %v2317
        %v2332 = vadd.f32 %v2260, %v2320
        %v2333 = vadd.f32 %v2261, %v2325
        %v2334 = vadd.f32 %v2262, %v2328
        %v2335 = vld [vmem:[%s461 + $0x4] sm:$0xf]
        %v2336 = vld [vmem:[%s461 + $0x8] sm:$0xf]
        %v2337 = vld [vmem:[%s461 + $0xc] sm:$0xf]
        %v2338 = vld [vmem:[%s461 + $0x10] sm:$0xf]
        %v2339 = vld [vmem:[%s461 + $0x14] sm:$0x1]
        %v2340 = vld [vmem:[%s477 + $0xb0] sm:$0xf]
        %v2341 = vld [vmem:[%s477 + $0xb4] sm:$0xf]
        %v2347 = vunpack.c.l.b16 %v2335
        %v2348 = vunpack.c.l.b16 %v2336
        %v2349 = vunpack.c.l.b16 %v2337
        %v2350 = vunpack.c.l.b16 %v2338
        %v2351 = vunpack.c.l.b16 %v2339
        %v2352 = vpack.c.b16 %v2348, %v2347
        %v2353 = vpack.c.b16 %v2350, %v2349
        %v2354 = vpack.c.b16 %v2351, %v2351
        %v2356 = vshrl.u32 %v2352, 16
        %v2358 = vshll.u32 %v2352, 16
        %v2360 = vrot.slane %v2358, 1
        %v2361 = vor.u32 %v2356, %v2360
        %v2363 = vshll.u32 %v2353, 16
        %v2365 = vrot.slane %v2363, 1
        %v2366 = vsel %vm508, %v2361, %v2365
        %v2367 = vshrl.u32 %v2353, 16
        %v2369 = vor.u32 %v2367, %v2365
        %v2371 = vshll.u32 %v2354, 16
        %v2373 = vrot.slane %v2371, 1
        %v2374 = vsel %vm508, %v2369, %v2373
        %v2377 = vunpack.c.l.b16 %v2340
        %v2378 = vunpack.c.l.b16 %v2341
        %v2379 = vpack.c.b16 %v2378, %v2377
        %v2382 = vsel %vm535, %v2366, 0
        %v2385 = vsel %vm535, %v2374, 0
        %2387 = vmatprep.subr.bf16.mxu0 0
        %2388 = vmatpush1.bf16.msra.mxu0 %v2379
        %2389 = vmatprep.subr.bf16.mxu0 0
        %2390 = vmatpush1.bf16.msra.mxu0 0
        %2391 = vmatprep.subr.bf16.mxu0 0
        %2392 = vmatpush1.bf16.msra.mxu0 0
        %2393 = vmatprep.subr.bf16.mxu0 0
        %2394 = vmatpush1.bf16.msra.mxu0 0
        %2395 = vmatprep.subr.bf16.mxu0 0
        %2396 = vmatpush1.bf16.msra.mxu0 0
        %2397 = vmatprep.subr.bf16.mxu0 0
        %2398 = vmatpush1.bf16.msra.mxu0 0
        %2399 = vmatprep.subr.bf16.mxu0 0
        %2400 = vmatpush1.bf16.msra.mxu0 0
        %2401 = vmatprep.subr.bf16.mxu0 0
        %2402 = vmatpush1.bf16.msra.mxu0 0
        %2403 = vmatprep.subr.bf16.mxu0 0
        %2404 = vmatpush1.bf16.msra.mxu0 0
        %2405 = vmatprep.subr.bf16.mxu0 0
        %2406 = vmatpush1.bf16.msra.mxu0 0
        %2407 = vmatprep.subr.bf16.mxu0 0
        %2408 = vmatpush1.bf16.msra.mxu0 0
        %2409 = vmatprep.subr.bf16.mxu0 0
        %2410 = vmatpush1.bf16.msra.mxu0 0
        %2411 = vmatprep.subr.bf16.mxu0 0
        %2412 = vmatpush1.bf16.msra.mxu0 0
        %2413 = vmatprep.subr.bf16.mxu0 0
        %2414 = vmatpush1.bf16.msra.mxu0 0
        %2415 = vmatprep.subr.bf16.mxu0 0
        %2416 = vmatpush1.bf16.msra.mxu0 0
        %2417 = vmatprep.subr.bf16.mxu0 0
        %2418 = vmatpush1.bf16.msra.mxu0 0
        %2419 = vmatprep.mubr.bf16.mxu0 0
        %2420 = vmatmul.mubr.bf16.gmra.mrb[0].mxu0 %v2382
        %v2421 = vpop.f32.mrb[0].mxu0
        %v2422 = vadd.f32 0.0, %v2421
        %v2423 = vpop.f32.mrb[0].mxu0
        %v2424 = vpop.f32.mrb[0].mxu0
        %v2425 = vadd.f32 0.0, %v2424
        %v2426 = vpop.f32.mrb[0].mxu0
        %2427 = vmatprep.mubr.bf16.mxu0 0
        %2428 = vmatmul.mubr.bf16.gmra.mrb[0].mxu0 %v2385
        %v2429 = vpop.f32.mrb[0].mxu0
        %v2430 = vadd.f32 0.0, %v2429
        %v2431 = vpop.f32.mrb[0].mxu0
        %v2432 = vpop.f32.mrb[0].mxu0
        %v2433 = vadd.f32 0.0, %v2432
        %v2434 = vpop.f32.mrb[0].mxu0
        %2435 = vdwg.mxu0
        %v2436 = vadd.f32 %v2331, %v2422
        %v2437 = vadd.f32 %v2332, %v2425
        %v2438 = vadd.f32 %v2333, %v2430
        %v2439 = vadd.f32 %v2334, %v2433
        %v2440 = vld [vmem:[%s461 + $0x4] sm:$0xe]
        %v2441 = vld [vmem:[%s477 + $0xb8] sm:$0xf]
        %v2442 = vld [vmem:[%s477 + $0xbc] sm:$0xf]
        %v2444 = vunpack.c.l.b16 %v2440
        %v2445 = vpack.c.b16 %v2348, %v2444
        %v2446 = vrot.slane %v2445, 1
        %v2447 = vrot.slane %v2353, 1
        %v2448 = vsel %vm656, %v2446, %v2447
        %v2449 = vrot.slane %v2354, 1
        %v2450 = vsel %vm656, %v2447, %v2449
        %v2453 = vunpack.c.l.b16 %v2441
        %v2454 = vunpack.c.l.b16 %v2442
        %v2455 = vpack.c.b16 %v2454, %v2453
        %v2458 = vsel %vm535, %v2448, 0
        %v2461 = vsel %vm535, %v2450, 0
        %2463 = vmatprep.subr.bf16.mxu0 0
        %2464 = vmatpush1.bf16.msra.mxu0 %v2455
        %2465 = vmatprep.subr.bf16.mxu0 0
        %2466 = vmatpush1.bf16.msra.mxu0 0
        %2467 = vmatprep.subr.bf16.mxu0 0
        %2468 = vmatpush1.bf16.msra.mxu0 0
        %2469 = vmatprep.subr.bf16.mxu0 0
        %2470 = vmatpush1.bf16.msra.mxu0 0
        %2471 = vmatprep.subr.bf16.mxu0 0
        %2472 = vmatpush1.bf16.msra.mxu0 0
        %2473 = vmatprep.subr.bf16.mxu0 0
        %2474 = vmatpush1.bf16.msra.mxu0 0
        %2475 = vmatprep.subr.bf16.mxu0 0
        %2476 = vmatpush1.bf16.msra.mxu0 0
        %2477 = vmatprep.subr.bf16.mxu0 0
        %2478 = vmatpush1.bf16.msra.mxu0 0
        %2479 = vmatprep.subr.bf16.mxu0 0
        %2480 = vmatpush1.bf16.msra.mxu0 0
        %2481 = vmatprep.subr.bf16.mxu0 0
        %2482 = vmatpush1.bf16.msra.mxu0 0
        %2483 = vmatprep.subr.bf16.mxu0 0
        %2484 = vmatpush1.bf16.msra.mxu0 0
        %2485 = vmatprep.subr.bf16.mxu0 0
        %2486 = vmatpush1.bf16.msra.mxu0 0
        %2487 = vmatprep.subr.bf16.mxu0 0
        %2488 = vmatpush1.bf16.msra.mxu0 0
        %2489 = vmatprep.subr.bf16.mxu0 0
        %2490 = vmatpush1.bf16.msra.mxu0 0
        %2491 = vmatprep.subr.bf16.mxu0 0
        %2492 = vmatpush1.bf16.msra.mxu0 0
        %2493 = vmatprep.subr.bf16.mxu0 0
        %2494 = vmatpush1.bf16.msra.mxu0 0
        %2495 = vmatprep.mubr.bf16.mxu0 0
        %2496 = vmatmul.mubr.bf16.gmra.mrb[0].mxu0 %v2458
        %v2497 = vpop.f32.mrb[0].mxu0
        %v2498 = vadd.f32 0.0, %v2497
        %v2499 = vpop.f32.mrb[0].mxu0
        %v2500 = vpop.f32.mrb[0].mxu0
        %v2501 = vadd.f32 0.0, %v2500
        %v2502 = vpop.f32.mrb[0].mxu0
        %2503 = vmatprep.mubr.bf16.mxu0 0
        %2504 = vmatmul.mubr.bf16.gmra.mrb[0].mxu0 %v2461
        %v2505 = vpop.f32.mrb[0].mxu0
        %v2506 = vadd.f32 0.0, %v2505
        %v2507 = vpop.f32.mrb[0].mxu0
        %v2508 = vpop.f32.mrb[0].mxu0
        %v2509 = vadd.f32 0.0, %v2508
        %v2510 = vpop.f32.mrb[0].mxu0
        %2511 = vdwg.mxu0
        %v2512 = vadd.f32 %v2436, %v2498
        %v2513 = vadd.f32 %v2437, %v2501
        %v2514 = vadd.f32 %v2438, %v2506
        %v2515 = vadd.f32 %v2439, %v2509
        %v2516 = vld [vmem:[%s461 + $0x14] sm:$0xf]
        %v2517 = vld [vmem:[%s477 + $0xc0] sm:$0xf]
        %v2518 = vld [vmem:[%s477 + $0xc4] sm:$0xf]
        %v2520 = vunpack.c.l.b16 %v2516
        %v2521 = vpack.c.b16 %v2349, %v2348
        %v2522 = vpack.c.b16 %v2520, %v2350
        %v2525 = vunpack.c.l.b16 %v2517
        %v2526 = vunpack.c.l.b16 %v2518
        %v2527 = vpack.c.b16 %v2526, %v2525
        %v2530 = vsel %vm535, %v2521, 0
        %v2533 = vsel %vm535, %v2522, 0
        %2535 = vmatprep.subr.bf16.mxu0 0
        %2536 = vmatpush1.bf16.msra.mxu0 %v2527
        %2537 = vmatprep.subr.bf16.mxu0 0
        %2538 = vmatpush1.bf16.msra.mxu0 0
        %2539 = vmatprep.subr.bf16.mxu0 0
        %2540 = vmatpush1.bf16.msra.mxu0 0
        %2541 = vmatprep.subr.bf16.mxu0 0
        %2542 = vmatpush1.bf16.msra.mxu0 0
        %2543 = vmatprep.subr.bf16.mxu0 0
        %2544 = vmatpush1.bf16.msra.mxu0 0
        %2545 = vmatprep.subr.bf16.mxu0 0
        %2546 = vmatpush1.bf16.msra.mxu0 0
        %2547 = vmatprep.subr.bf16.mxu0 0
        %2548 = vmatpush1.bf16.msra.mxu0 0
        %2549 = vmatprep.subr.bf16.mxu0 0
        %2550 = vmatpush1.bf16.msra.mxu0 0
        %2551 = vmatprep.subr.bf16.mxu0 0
        %2552 = vmatpush1.bf16.msra.mxu0 0
        %2553 = vmatprep.subr.bf16.mxu0 0
        %2554 = vmatpush1.bf16.msra.mxu0 0
        %2555 = vmatprep.subr.bf16.mxu0 0
        %2556 = vmatpush1.bf16.msra.mxu0 0
        %2557 = vmatprep.subr.bf16.mxu0 0
        %2558 = vmatpush1.bf16.msra.mxu0 0
        %2559 = vmatprep.subr.bf16.mxu0 0
        %2560 = vmatpush1.bf16.msra.mxu0 0
        %2561 = vmatprep.subr.bf16.mxu0 0
        %2562 = vmatpush1.bf16.msra.mxu0 0
        %2563 = vmatprep.subr.bf16.mxu0 0
        %2564 = vmatpush1.bf16.msra.mxu0 0
        %2565 = vmatprep.subr.bf16.mxu0 0
        %2566 = vmatpush1.bf16.msra.mxu0 0
        %2567 = vmatprep.mubr.bf16.mxu0 0
        %2568 = vmatmul.mubr.bf16.gmra.mrb[0].mxu0 %v2530
        %v2569 = vpop.f32.mrb[0].mxu0
        %v2570 = vadd.f32 0.0, %v2569
        %v2571 = vpop.f32.mrb[0].mxu0
        %v2572 = vpop.f32.mrb[0].mxu0
        %v2573 = vadd.f32 0.0, %v2572
        %v2574 = vpop.f32.mrb[0].mxu0
        %2575 = vmatprep.mubr.bf16.mxu0 0
        %2576 = vmatmul.mubr.bf16.gmra.mrb[0].mxu0 %v2533
        %v2577 = vpop.f32.mrb[0].mxu0
        %v2578 = vadd.f32 0.0, %v2577
        %v2579 = vpop.f32.mrb[0].mxu0
        %v2580 = vpop.f32.mrb[0].mxu0
        %v2581 = vadd.f32 0.0, %v2580
        %v2582 = vpop.f32.mrb[0].mxu0
        %2583 = vdwg.mxu0
        %v2584 = vadd.f32 %v2512, %v2570
        %v2585 = vadd.f32 %v2513, %v2573
        %v2586 = vadd.f32 %v2514, %v2578
        %v2587 = vadd.f32 %v2515, %v2581
        %v2588 = vld [vmem:[%s461 + $0x8] sm:$0xf]
        %v2589 = vld [vmem:[%s461 + $0xc] sm:$0xf]
        %v2590 = vld [vmem:[%s461 + $0x10] sm:$0xf]
        %v2591 = vld [vmem:[%s461 + $0x14] sm:$0xf]
        %v2592 = vld [vmem:[%s461 + $0x18] sm:$0x1]
        %v2593 = vld [vmem:[%s477 + $0xc8] sm:$0xf]
        %v2594 = vld [vmem:[%s477 + $0xcc] sm:$0xf]
        %v2600 = vunpack.c.l.b16 %v2588
        %v2601 = vunpack.c.l.b16 %v2589
        %v2602 = vunpack.c.l.b16 %v2590
        %v2603 = vunpack.c.l.b16 %v2591
        %v2604 = vunpack.c.l.b16 %v2592
        %v2605 = vpack.c.b16 %v2601, %v2600
        %v2606 = vpack.c.b16 %v2603, %v2602
        %v2607 = vpack.c.b16 %v2604, %v2604
        %v2609 = vshrl.u32 %v2605, 16
        %v2611 = vshll.u32 %v2605, 16
        %v2613 = vrot.slane %v2611, 1
        %v2614 = vor.u32 %v2609, %v2613
        %v2616 = vshll.u32 %v2606, 16
        %v2618 = vrot.slane %v2616, 1
        %v2619 = vsel %vm508, %v2614, %v2618
        %v2620 = vshrl.u32 %v2606, 16
        %v2622 = vor.u32 %v2620, %v2618
        %v2624 = vshll.u32 %v2607, 16
        %v2626 = vrot.slane %v2624, 1
        %v2627 = vsel %vm508, %v2622, %v2626
        %v2630 = vunpack.c.l.b16 %v2593
        %v2631 = vunpack.c.l.b16 %v2594
        %v2632 = vpack.c.b16 %v2631, %v2630
        %v2635 = vsel %vm535, %v2619, 0
        %v2638 = vsel %vm535, %v2627, 0
        %2640 = vmatprep.subr.bf16.mxu0 0
        %2641 = vmatpush1.bf16.msra.mxu0 %v2632
        %2642 = vmatprep.subr.bf16.mxu0 0
        %2643 = vmatpush1.bf16.msra.mxu0 0
        %2644 = vmatprep.subr.bf16.mxu0 0
        %2645 = vmatpush1.bf16.msra.mxu0 0
        %2646 = vmatprep.subr.bf16.mxu0 0
        %2647 = vmatpush1.bf16.msra.mxu0 0
        %2648 = vmatprep.subr.bf16.mxu0 0
        %2649 = vmatpush1.bf16.msra.mxu0 0
        %2650 = vmatprep.subr.bf16.mxu0 0
        %2651 = vmatpush1.bf16.msra.mxu0 0
        %2652 = vmatprep.subr.bf16.mxu0 0
        %2653 = vmatpush1.bf16.msra.mxu0 0
        %2654 = vmatprep.subr.bf16.mxu0 0
        %2655 = vmatpush1.bf16.msra.mxu0 0
        %2656 = vmatprep.subr.bf16.mxu0 0
        %2657 = vmatpush1.bf16.msra.mxu0 0
        %2658 = vmatprep.subr.bf16.mxu0 0
        %2659 = vmatpush1.bf16.msra.mxu0 0
        %2660 = vmatprep.subr.bf16.mxu0 0
        %2661 = vmatpush1.bf16.msra.mxu0 0
        %2662 = vmatprep.subr.bf16.mxu0 0
        %2663 = vmatpush1.bf16.msra.mxu0 0
        %2664 = vmatprep.subr.bf16.mxu0 0
        %2665 = vmatpush1.bf16.msra.mxu0 0
        %2666 = vmatprep.subr.bf16.mxu0 0
        %2667 = vmatpush1.bf16.msra.mxu0 0
        %2668 = vmatprep.subr.bf16.mxu0 0
        %2669 = vmatpush1.bf16.msra.mxu0 0
        %2670 = vmatprep.subr.bf16.mxu0 0
        %2671 = vmatpush1.bf16.msra.mxu0 0
        %2672 = vmatprep.mubr.bf16.mxu0 0
        %2673 = vmatmul.mubr.bf16.gmra.mrb[0].mxu0 %v2635
        %v2674 = vpop.f32.mrb[0].mxu0
        %v2675 = vadd.f32 0.0, %v2674
        %v2676 = vpop.f32.mrb[0].mxu0
        %v2677 = vpop.f32.mrb[0].mxu0
        %v2678 = vadd.f32 0.0, %v2677
        %v2679 = vpop.f32.mrb[0].mxu0
        %2680 = vmatprep.mubr.bf16.mxu0 0
        %2681 = vmatmul.mubr.bf16.gmra.mrb[0].mxu0 %v2638
        %v2682 = vpop.f32.mrb[0].mxu0
        %v2683 = vadd.f32 0.0, %v2682
        %v2684 = vpop.f32.mrb[0].mxu0
        %v2685 = vpop.f32.mrb[0].mxu0
        %v2686 = vadd.f32 0.0, %v2685
        %v2687 = vpop.f32.mrb[0].mxu0
        %2688 = vdwg.mxu0
        %v2689 = vadd.f32 %v2584, %v2675
        %v2690 = vadd.f32 %v2585, %v2678
        %v2691 = vadd.f32 %v2586, %v2683
        %v2692 = vadd.f32 %v2587, %v2686
        %v2693 = vld [vmem:[%s461 + $0x8] sm:$0xe]
        %v2694 = vld [vmem:[%s477 + $0xd0] sm:$0xf]
        %v2695 = vld [vmem:[%s477 + $0xd4] sm:$0xf]
        %v2697 = vunpack.c.l.b16 %v2693
        %v2698 = vpack.c.b16 %v2601, %v2697
        %v2699 = vrot.slane %v2698, 1
        %v2700 = vrot.slane %v2606, 1
        %v2701 = vsel %vm656, %v2699, %v2700
        %v2702 = vrot.slane %v2607, 1
        %v2703 = vsel %vm656, %v2700, %v2702
        %v2706 = vunpack.c.l.b16 %v2694
        %v2707 = vunpack.c.l.b16 %v2695
        %v2708 = vpack.c.b16 %v2707, %v2706
        %v2711 = vsel %vm535, %v2701, 0
        %v2714 = vsel %vm535, %v2703, 0
        %2716 = vmatprep.subr.bf16.mxu0 0
        %2717 = vmatpush1.bf16.msra.mxu0 %v2708
        %2718 = vmatprep.subr.bf16.mxu0 0
        %2719 = vmatpush1.bf16.msra.mxu0 0
        %2720 = vmatprep.subr.bf16.mxu0 0
        %2721 = vmatpush1.bf16.msra.mxu0 0
        %2722 = vmatprep.subr.bf16.mxu0 0
        %2723 = vmatpush1.bf16.msra.mxu0 0
        %2724 = vmatprep.subr.bf16.mxu0 0
        %2725 = vmatpush1.bf16.msra.mxu0 0
        %2726 = vmatprep.subr.bf16.mxu0 0
        %2727 = vmatpush1.bf16.msra.mxu0 0
        %2728 = vmatprep.subr.bf16.mxu0 0
        %2729 = vmatpush1.bf16.msra.mxu0 0
        %2730 = vmatprep.subr.bf16.mxu0 0
        %2731 = vmatpush1.bf16.msra.mxu0 0
        %2732 = vmatprep.subr.bf16.mxu0 0
        %2733 = vmatpush1.bf16.msra.mxu0 0
        %2734 = vmatprep.subr.bf16.mxu0 0
        %2735 = vmatpush1.bf16.msra.mxu0 0
        %2736 = vmatprep.subr.bf16.mxu0 0
        %2737 = vmatpush1.bf16.msra.mxu0 0
        %2738 = vmatprep.subr.bf16.mxu0 0
        %2739 = vmatpush1.bf16.msra.mxu0 0
        %2740 = vmatprep.subr.bf16.mxu0 0
        %2741 = vmatpush1.bf16.msra.mxu0 0
        %2742 = vmatprep.subr.bf16.mxu0 0
        %2743 = vmatpush1.bf16.msra.mxu0 0
        %2744 = vmatprep.subr.bf16.mxu0 0
        %2745 = vmatpush1.bf16.msra.mxu0 0
        %2746 = vmatprep.subr.bf16.mxu0 0
        %2747 = vmatpush1.bf16.msra.mxu0 0
        %2748 = vmatprep.mubr.bf16.mxu0 0
        %2749 = vmatmul.mubr.bf16.gmra.mrb[0].mxu0 %v2711
        %v2750 = vpop.f32.mrb[0].mxu0
        %v2751 = vadd.f32 0.0, %v2750
        %v2752 = vpop.f32.mrb[0].mxu0
        %v2753 = vpop.f32.mrb[0].mxu0
        %v2754 = vadd.f32 0.0, %v2753
        %v2755 = vpop.f32.mrb[0].mxu0
        %2756 = vmatprep.mubr.bf16.mxu0 0
        %2757 = vmatmul.mubr.bf16.gmra.mrb[0].mxu0 %v2714
        %v2758 = vpop.f32.mrb[0].mxu0
        %v2759 = vadd.f32 0.0, %v2758
        %v2760 = vpop.f32.mrb[0].mxu0
        %v2761 = vpop.f32.mrb[0].mxu0
        %v2762 = vadd.f32 0.0, %v2761
        %v2763 = vpop.f32.mrb[0].mxu0
        %2764 = vdwg.mxu0
        %v2765 = vadd.f32 %v2689, %v2751
        %v2766 = vadd.f32 %v2690, %v2754
        %v2767 = vadd.f32 %v2691, %v2759
        %v2768 = vadd.f32 %v2692, %v2762
        %v2769 = vld [vmem:[%s472 + $0x4] sm:$0xf]
        %v2770 = vld [vmem:[%s472 + $0x8] sm:$0xf]
        %v2771 = vld [vmem:[%s472 + $0xc] sm:$0xf]
        %v2772 = vld [vmem:[%s472 + $0x10] sm:$0xf]
        %v2773 = vld [vmem:[%s472 + $0x14] sm:$0x1]
        %v2774 = vld [vmem:[%s484] sm:$0xf]
        %v2775 = vld [vmem:[%s484 + $0x4] sm:$0xf]
        %v2781 = vunpack.c.l.b16 %v2769
        %v2782 = vunpack.c.l.b16 %v2770
        %v2783 = vunpack.c.l.b16 %v2771
        %v2784 = vunpack.c.l.b16 %v2772
        %v2785 = vunpack.c.l.b16 %v2773
        %v2786 = vpack.c.b16 %v2782, %v2781
        %v2787 = vpack.c.b16 %v2784, %v2783
        %v2788 = vpack.c.b16 %v2785, %v2785
        %v2790 = vshrl.u32 %v2786, 16
        %v2792 = vshll.u32 %v2786, 16
        %v2794 = vrot.slane %v2792, 1
        %v2795 = vor.u32 %v2790, %v2794
        %v2797 = vshll.u32 %v2787, 16
        %v2799 = vrot.slane %v2797, 1
        %v2800 = vsel %vm508, %v2795, %v2799
        %v2801 = vshrl.u32 %v2787, 16
        %v2803 = vor.u32 %v2801, %v2799
        %v2805 = vshll.u32 %v2788, 16
        %v2807 = vrot.slane %v2805, 1
        %v2808 = vsel %vm508, %v2803, %v2807
        %v2811 = vunpack.c.l.b16 %v2774
        %v2812 = vunpack.c.l.b16 %v2775
        %v2813 = vpack.c.b16 %v2812, %v2811
        %v2816 = vsel %vm535, %v2800, 0
        %v2819 = vsel %vm535, %v2808, 0
        %2821 = vmatprep.subr.bf16.mxu0 0
        %2822 = vmatpush1.bf16.msra.mxu0 %v2813
        %2823 = vmatprep.subr.bf16.mxu0 0
        %2824 = vmatpush1.bf16.msra.mxu0 0
        %2825 = vmatprep.subr.bf16.mxu0 0
        %2826 = vmatpush1.bf16.msra.mxu0 0
        %2827 = vmatprep.subr.bf16.mxu0 0
        %2828 = vmatpush1.bf16.msra.mxu0 0
        %2829 = vmatprep.subr.bf16.mxu0 0
        %2830 = vmatpush1.bf16.msra.mxu0 0
        %2831 = vmatprep.subr.bf16.mxu0 0
        %2832 = vmatpush1.bf16.msra.mxu0 0
        %2833 = vmatprep.subr.bf16.mxu0 0
        %2834 = vmatpush1.bf16.msra.mxu0 0
        %2835 = vmatprep.subr.bf16.mxu0 0
        %2836 = vmatpush1.bf16.msra.mxu0 0
        %2837 = vmatprep.subr.bf16.mxu0 0
        %2838 = vmatpush1.bf16.msra.mxu0 0
        %2839 = vmatprep.subr.bf16.mxu0 0
        %2840 = vmatpush1.bf16.msra.mxu0 0
        %2841 = vmatprep.subr.bf16.mxu0 0
        %2842 = vmatpush1.bf16.msra.mxu0 0
        %2843 = vmatprep.subr.bf16.mxu0 0
        %2844 = vmatpush1.bf16.msra.mxu0 0
        %2845 = vmatprep.subr.bf16.mxu0 0
        %2846 = vmatpush1.bf16.msra.mxu0 0
        %2847 = vmatprep.subr.bf16.mxu0 0
        %2848 = vmatpush1.bf16.msra.mxu0 0
        %2849 = vmatprep.subr.bf16.mxu0 0
        %2850 = vmatpush1.bf16.msra.mxu0 0
        %2851 = vmatprep.subr.bf16.mxu0 0
        %2852 = vmatpush1.bf16.msra.mxu0 0
        %2853 = vmatprep.mubr.bf16.mxu0 0
        %2854 = vmatmul.mubr.bf16.gmra.mrb[0].mxu0 %v2816
        %v2855 = vpop.f32.mrb[0].mxu0
        %v2856 = vadd.f32 0.0, %v2855
        %v2857 = vpop.f32.mrb[0].mxu0
        %v2858 = vpop.f32.mrb[0].mxu0
        %v2859 = vadd.f32 0.0, %v2858
        %v2860 = vpop.f32.mrb[0].mxu0
        %2861 = vmatprep.mubr.bf16.mxu0 0
        %2862 = vmatmul.mubr.bf16.gmra.mrb[0].mxu0 %v2819
        %v2863 = vpop.f32.mrb[0].mxu0
        %v2864 = vadd.f32 0.0, %v2863
        %v2865 = vpop.f32.mrb[0].mxu0
        %v2866 = vpop.f32.mrb[0].mxu0
        %v2867 = vadd.f32 0.0, %v2866
        %v2868 = vpop.f32.mrb[0].mxu0
        %2869 = vdwg.mxu0
        %v2870 = vadd.f32 %v2765, %v2856
        %v2871 = vadd.f32 %v2766, %v2859
        %v2872 = vadd.f32 %v2767, %v2864
        %v2873 = vadd.f32 %v2768, %v2867
        %v2874 = vld [vmem:[%s480] sm:$0x1]
        %v2876 = vlaneseq
        %v2877 = vshrl.u32 %v2876, 7
        %v2878 = vsub.s32 0, %v2877
        %v2879 = vrot.slane %v2874, %v2878
        %v2881 = vadd.f32 %v2870, %v2879
        %v2882 = vadd.f32 %v2871, %v2879
        %v2883 = vadd.f32 %v2872, %v2879
        %v2884 = vadd.f32 %v2873, %v2879
        %v2885 = vpack.c.bf16 %v2882, %v2881
        %v2886 = vpack.c.bf16 %v2884, %v2883
        %v2889 = vunpack.c.l.b16 %v2885
        %v2890 = vunpack.c.h.b16 %v2885
        %v2891 = vunpack.c.l.b16 %v2886
        %v2892 = vunpack.c.h.b16 %v2886
        %v2893 = vpack.c.b16 %v2889, %v2889
        %v2894 = vpack.c.b16 %v2890, %v2890
        %v2895 = vpack.c.b16 %v2891, %v2891
        %v2896 = vpack.c.b16 %v2892, %v2892
        %vm2901 = vcmask 257024
        %2902 = vst.msk [vmem:[%s431] sm:$0xf] %vm2901, %v2893
        %2903 = vst.msk [vmem:[%s431 + $0x4] sm:$0xf] %vm2901, %v2894
        %2904 = vst.msk [vmem:[%s431 + $0x8] sm:$0xf] %vm2901, %v2895
        %2905 = vst.msk [vmem:[%s431 + $0xc] sm:$0xf] %vm2901, %v2896
        %s2906 = sand.u32 %s248, 1
        %s2907 = scalar_lea.sflag [#allocation3], %s2906
        %s2908 = sand.u32 %s248, 1
        %s2909 = smul.addr %s2908, 16
        %s2910 = scalar_lea.vmem [#allocation2], %s2909
        // Predicated region
        $region49: #{tpu_custom_call.1} parent=47 // pred_check
          %p2911 = pneg %p258
        $region50: #{tpu_custom_call.1} parent=47 // pred_check_branch
          %2913 = sbr.rel (%p2911) target = $region52
        $region51: #{tpu_custom_call.1} parent=47 // pred_region
          %s2915 = ssub.s32 256, 256
          %2916 = vsyncadd %s2907, %s2915
          %s2917 = smul.addr %s27, 4
          %s2918 = sadd.s32 %s28, %s2917
          %s2919 = smul.addr %s26, 16
          %s2920 = sadd.s32 %s2918, %s2919
          %s2921 = smul.addr %s2920, 64
          %s2922 = scalar_lea.hbm %s7, %s2921
          %s2923 = sshll.u32 %s2910, 4
          %s2924 = int_to_ptr.vmem [resolvable:$true] %s2923
          %2929 = dma.vmem_to_hbm [thread:$0]  %s2924, 256, %s2922, %s2907, 64, 64, 4
        $region52: #{tpu_custom_call.1} parent=47 // pred_fallthru
          _
      $region48: #{tpu_custom_call.1} parent=5 // pred_fallthru
        _
      %p2930 = scmp.le.s32.totalorder 2, %s16
      // Predicated region
      $region53: #{tpu_custom_call.1} parent=5 // pred_check
        %p2931 = pneg %p2930
      $region54: #{tpu_custom_call.1} parent=5 // pred_check_branch
        %2933 = sbr.rel (%p2931) target = $region56
      $region55: #{tpu_custom_call.1} parent=5 // pred_region
        %s2934 = ssub.s32 %s16, 2
        // Predicated region
        $region57: #{tpu_custom_call.1} parent=55 // pred_check
          %p2935 = pneg %p264
        $region58: #{tpu_custom_call.1} parent=55 // pred_check_branch
          %2937 = sbr.rel (%p2935) target = $region60
        $region59: #{tpu_custom_call.1} parent=55 // pred_region
          %s2938 = sand.u32 %s249, 1
          %s2939 = scalar_lea.sflag [#allocation3], %s2938
          %s2940 = sand.u32 %s249, 1
          %s2941 = smul.addr %s2940, 16
          %s2942 = scalar_lea.vmem [#allocation2], %s2941
          %2943 = dma.done %s2939, 256
        $region60: #{tpu_custom_call.1} parent=55 // pred_fallthru
          _
      $region56: #{tpu_custom_call.1} parent=5 // pred_fallthru
        _
    $region6: #{tpu_custom_call.1} parent=1 // loop_footer
      %s20 = sadd.s32 1, %s16
    $region7: #{tpu_custom_call.1} parent=1 // loop_footer_branch
      %15 = sbr.rel target = $region3
    $region8: #{tpu_custom_call.1} parent=1 // loop_exit
      _
    %2944 = vsyncpa [#allocation3], 1
    %s2945 = scalar_lea.sflag [#allocation3], 1
    %2946 = vsyncpa %s2945, 1

</llo_original>
